<compile_context>
chip_gen: v5e
topology: v5e:2x2
jax: 0.10.0
libtpu: 0.0.40
codegen_flags: <defaults>
</compile_context>

<pallas_src>
import functools
import numpy as np
import jax
import jax.numpy as jnp
from jax.experimental import pallas as pl
from jax.experimental.pallas import tpu as pltpu


# ---------------------------------------------------------------------------
# Kernel: one grid step = (batch b, query tile qt); heads fused inside.
# ---------------------------------------------------------------------------
def _attention_kernel(x_ref, wq_ref, wkv_ref, wo_ref, bo_ref, o_ref, kv_ref,
                      *, heads, dim_head, tq, n, compute_dtype):
    """
    x_ref   : (1, C, N)           full sequence for batch b, channels on sublanes
    wq_ref  : (hidden, C)         fused per-head Q weights (scale pre-folded)
    wkv_ref : (2*hidden, C)       fused per-head K and V weights, stacked [K ; V]
    wo_ref  : (Co, hidden)        output 1x1-conv weight
    bo_ref  : (Co, 1)             output 1x1-conv bias
    o_ref   : (1, Co, tq)         lane-dense output tile
    kv_ref  : (2, heads, Dh, N)   VMEM scratch: K/V cache for the current batch element
    """
    qt = pl.program_id(1)
    cd = compute_dtype
    dh = dim_head

    x_full = x_ref[0]                                                  # (C, N)

    # --- K/V for the full sequence, computed once per batch element and cached. ---
    @pl.when(qt == 0)
    def _():
        kv = jnp.dot(wkv_ref[...].astype(cd), x_full.astype(cd),
                     preferred_element_type=jnp.float32)               # (2*hidden, N)
        kv_ref[...] = kv.astype(cd).reshape(2, heads, dh, n)

    # --- Q for this query tile only (scale already folded into wq). ---
    start = pl.multiple_of(qt * tq, tq)
    xq = x_ref[0, :, pl.ds(start, tq)]                                 # (C, tq)
    q_all = jnp.dot(wq_ref[...].astype(cd), xq.astype(cd),
                    preferred_element_type=jnp.float32)                # (hidden, tq)
    q_all = q_all.astype(cd)

    # --- Per-head exact softmax attention; accumulate (hidden, tq) for one out-proj. ---
    outs = []
    for h in range(heads):                                             # static, heads is small
        q_h = q_all[h * dh:(h + 1) * dh, :]                            # (Dh, tq)  sublane slice
        k_h = kv_ref[0, h]                                             # (Dh, N)
        v_h = kv_ref[1, h]                                             # (Dh, N)

        # sim[i, j] = sum_d q_h[d, i] * k_h[d, j]   -> lane-dense (tq, N)
        sim = jax.lax.dot_general(q_h, k_h, (((0,), (0,)), ((), ())),
                                  preferred_element_type=jnp.float32)

        # numerically stable softmax over keys, in f32
        m = jnp.max(sim, axis=-1, keepdims=True)
        p = jnp.exp(sim - m)
        l = jnp.sum(p, axis=-1, keepdims=True)
        # TODO(synk): approx=True routes to the EUP slot (free) on v6e/v7x production.
        attn = p * pl.reciprocal(l)

        # oh[d, i] = sum_j v_h[d, j] * attn[i, j]   -> (Dh, tq)
        oh = jax.lax.dot_general(v_h, attn.astype(cd), (((1,), (1,)), ((), ())),
                                 preferred_element_type=jnp.float32)
        outs.append(oh)

    acc = jnp.concatenate(outs, axis=0)                                # (hidden, tq)

    # --- Single output 1x1 projection + bias, written once per tile (lane-dense). ---
    o_ref[0] = (jnp.dot(wo_ref[...].astype(cd), acc.astype(cd),
                        preferred_element_type=jnp.float32)
                + bo_ref[...])                                         # (Co, tq)


# ---------------------------------------------------------------------------
# Wrapper (NCHW in / NCHW out, like the PyTorch module)
# ---------------------------------------------------------------------------
def attention_forward(x_nchw, kparams, *, heads, dim_head, q_tile=256,
                      compute_dtype=jnp.float32):
    B, C, H, W = x_nchw.shape
    N = H * W
    hidden = heads * dim_head
    Co = kparams["w_out"].shape[0]

    assert kparams["w_q"].shape == (hidden, C)
    assert kparams["w_kv"].shape == (2 * hidden, C)

    # Query tiling: multiple lane-aligned tiles when possible, else one full tile.
    if N % q_tile == 0 and q_tile % 128 == 0:
        tq = q_tile
    else:
        tq = N
    num_q = N // tq

    # NCHW -> (B, C, N): channels on sublanes, spatial (row-major) on lanes. No transpose.
    x = x_nchw.reshape(B, C, N).astype(jnp.float32)

    out = pl.pallas_call(
        functools.partial(_attention_kernel, heads=heads, dim_head=dim_head,
                          tq=tq, n=N, compute_dtype=compute_dtype),
        out_shape=jax.ShapeDtypeStruct((B, Co, N), jnp.float32),
        grid=(B, num_q),
        in_specs=[
            pl.BlockSpec((1, C, N), lambda b, qt: (b, 0, 0)),        # x (resident per batch)
            pl.BlockSpec((hidden, C), lambda b, qt: (0, 0)),         # w_q  (scale folded)
            pl.BlockSpec((2 * hidden, C), lambda b, qt: (0, 0)),     # w_kv (K and V stacked)
            pl.BlockSpec((Co, hidden), lambda b, qt: (0, 0)),        # w_out
            pl.BlockSpec((Co, 1), lambda b, qt: (0, 0)),             # b_out
        ],
        out_specs=pl.BlockSpec((1, Co, tq), lambda b, qt: (b, 0, qt)),
        scratch_shapes=[pltpu.VMEM((2, heads, dim_head, N), compute_dtype)],  # K/V cache
        compiler_params=pltpu.CompilerParams(
            # batch is parallel (v7x megacore); query-tile axis carries the K/V cache,
            # so it must stay sequential ("arbitrary").
            dimension_semantics=("parallel", "arbitrary"),
            vmem_limit_bytes=32 * 1024 * 1024),
    )(x, kparams["w_q"], kparams["w_kv"], kparams["w_out"], kparams["b_out"])

    # (B, Co, N) -> NCHW: pure reshape, no transpose.
    return out.reshape(B, Co, H, W)


# ---------------------------------------------------------------------------
# Deterministic parameter init (PyTorch layout) + kernel-layout views
# ---------------------------------------------------------------------------
def init_torch_params(key, dim, heads, dim_head):
    hidden = heads * dim_head
    k1, k2, k3 = jax.random.split(key, 3)
    return {
        "w_qkv": 0.2 * jax.random.normal(k1, (hidden * 3, dim, 1, 1), jnp.float32),
        "w_out": 0.2 * jax.random.normal(k2, (dim, hidden, 1, 1), jnp.float32),
        "b_out": 0.1 * jax.random.normal(k3, (dim,), jnp.float32),
    }


def to_kernel_params(tp, heads, dim_head):
    hidden = heads * dim_head
    scale = float(dim_head) ** -0.5
    wqkv = tp["w_qkv"][:, :, 0, 0]          # (3*hidden, C), rows = [Q | K | V], head-major
    return {
        "w_q": wqkv[:hidden] * scale,       # fold softmax scale into the Q projection
        "w_kv": wqkv[hidden:],              # (2*hidden, C) = [K ; V]
        "w_out": tp["w_out"][:, :, 0, 0],   # (Co, hidden)
        "b_out": tp["b_out"][:, None],      # (Co, 1)
    }


# ---------------------------------------------------------------------------
# Pure-JAX reference mirroring the PyTorch module exactly
# ---------------------------------------------------------------------------
def attention_ref(x_nchw, tp, heads, dim_head):
    b, c, h, w = x_nchw.shape
    n = h * w
    hidden = heads * dim_head
    scale = dim_head ** -0.5

    wqkv = tp["w_qkv"][:, :, 0, 0]                           # (3*hidden, c)
    qkv = jnp.einsum("bchw,oc->bohw", x_nchw, wqkv)
    q, k, v = jnp.split(qkv, 3, axis=1)                      # chunk(3, dim=1)
    rs = lambda t: t.reshape(b, heads, dim_head, n)          # 'b (h c) x y -> b h c (x y)'
    q, k, v = rs(q) * scale, rs(k), rs(v)

    sim = jnp.einsum("bhdi,bhdj->bhij", q, k)
    attn = jax.nn.softmax(sim, axis=-1)
    out = jnp.einsum("bhij,bhdj->bhid", attn, v)
    out = jnp.transpose(out, (0, 1, 3, 2)).reshape(b, hidden, h, w)   # 'b h (x y) d -> b (h d) x y'

    wout = tp["w_out"][:, :, 0, 0]
    return (jnp.einsum("bchw,oc->bohw", out, wout)
            + tp["b_out"][None, :, None, None])


if __name__ == "__main__":
    B, dim, H, W = 2, 8, 16, 16
    heads, dim_head = 4, 32          # hidden_dim = 128

    key = jax.random.PRNGKey(0)
    kx, kp = jax.random.split(key)
    x = jax.random.normal(kx, (B, dim, H, W), jnp.float32)   # NCHW like PyTorch

    tparams = init_torch_params(kp, dim, heads, dim_head)
    kparams = to_kernel_params(tparams, heads, dim_head)

    out = jax.block_until_ready(
        attention_forward(x, kparams, heads=heads, dim_head=dim_head, q_tile=256))
    ref = jax.block_until_ready(attention_ref(x, tparams, heads, dim_head))

    np.testing.assert_allclose(np.asarray(out), np.asarray(ref), atol=1e-3, rtol=1e-3)
    assert out.shape == (B, dim, H, W)
    print("KERNEL_OK")
</pallas_src>

<mosaic_0001>
module attributes {stable_mosaic.version = 11 : i64} {
  func.func @_attention_kernel(%arg0: i32, %arg1: i32, %arg2: memref<1x8x256xf32, #tpu.memory_space<vmem>>, %arg3: memref<128x8xf32, #tpu.memory_space<vmem>>, %arg4: memref<256x8xf32, #tpu.memory_space<vmem>>, %arg5: memref<8x128xf32, #tpu.memory_space<vmem>>, %arg6: memref<8x1xf32, #tpu.memory_space<vmem>>, %arg7: memref<1x8x256xf32, #tpu.memory_space<vmem>>, %arg8: memref<2x4x32x256xf32, #tpu.memory_space<vmem>>) attributes {dimension_semantics = [#tpu.dimension_semantics<parallel>, #tpu.dimension_semantics<arbitrary>], iteration_bounds = array<i64: 2, 1>, scalar_prefetch = 0 : i64, scratch_operands = 1 : i64, tpu.core_type = #tpu.core_type<tc>, window_params = [{transform_indices = @transform_0, window_bounds = array<i64: 1, 8, 256>}, {pipeline_mode = #tpu.pipeline_mode<synchronous>, transform_indices = @transform_1, window_bounds = array<i64: 128, 8>}, {pipeline_mode = #tpu.pipeline_mode<synchronous>, transform_indices = @transform_2, window_bounds = array<i64: 256, 8>}, {pipeline_mode = #tpu.pipeline_mode<synchronous>, transform_indices = @transform_3, window_bounds = array<i64: 8, 128>}, {pipeline_mode = #tpu.pipeline_mode<synchronous>, transform_indices = @transform_4, window_bounds = array<i64: 8, 1>}, {transform_indices = @transform_5, window_bounds = array<i64: 1, 8, 256>}]} {
    %c0 = arith.constant 0 : index
    %c0_0 = arith.constant 0 : index
    %c0_1 = arith.constant 0 : index
    %0 = vector.load %arg2[%c0, %c0_0, %c0_1] : memref<1x8x256xf32, #tpu.memory_space<vmem>>, vector<1x8x256xf32>
    %1 = vector.shape_cast %0 : vector<1x8x256xf32> to vector<8x256xf32>
    %c0_i32 = arith.constant 0 : i32
    %2 = arith.cmpi eq, %arg1, %c0_i32 : i32
    %3 = arith.extui %2 : i1 to i32
    %c0_i32_2 = arith.constant 0 : i32
    %4 = arith.cmpi ne, %3, %c0_i32_2 : i32
    scf.if %4 {
      %c0_60 = arith.constant 0 : index
      %c0_61 = arith.constant 0 : index
      %89 = vector.load %arg4[%c0_60, %c0_61] : memref<256x8xf32, #tpu.memory_space<vmem>>, vector<256x8xf32>
      %cst_62 = arith.constant dense<0.000000e+00> : vector<256x256xf32>
      %90 = tpu.matmul %89, %1, %cst_62 {dimension_numbers = #tpu.dot_dimension_numbers<[1], [0], [0], [1], [0, 0, 1, 1], [], []>} : vector<256x8xf32>, vector<8x256xf32>, vector<256x256xf32> -> vector<256x256xf32>
      %91 = vector.shape_cast %90 : vector<256x256xf32> to vector<2x4x32x256xf32>
      %c0_63 = arith.constant 0 : index
      %c0_64 = arith.constant 0 : index
      %c0_65 = arith.constant 0 : index
      %c0_66 = arith.constant 0 : index
      %92 = vector.load %arg8[%c0_63, %c0_64, %c0_65, %c0_66] : memref<2x4x32x256xf32, #tpu.memory_space<vmem>>, vector<2x4x32x256xf32>
      tpu.vector_store %arg8[%c0_63, %c0_64, %c0_65, %c0_66], %91 {strides = array<i32>} : memref<2x4x32x256xf32, #tpu.memory_space<vmem>>, vector<2x4x32x256xf32>,
    } else {
    }
    %c256_i32 = arith.constant 256 : i32
    %5 = arith.muli %arg1, %c256_i32 : i32
    %6 = tpu.assume_multiple %5, 256 : i32
    %c0_3 = arith.constant 0 : index
    %c0_4 = arith.constant 0 : index
    %7 = arith.index_cast %6 : i32 to index
    %8 = vector.load %arg2[%c0_3, %c0_4, %7] : memref<1x8x256xf32, #tpu.memory_space<vmem>>, vector<1x8x256xf32>
    %9 = vector.shape_cast %8 : vector<1x8x256xf32> to vector<8x256xf32>
    %c0_5 = arith.constant 0 : index
    %c0_6 = arith.constant 0 : index
    %10 = vector.load %arg3[%c0_5, %c0_6] : memref<128x8xf32, #tpu.memory_space<vmem>>, vector<128x8xf32>
    %cst = arith.constant dense<0.000000e+00> : vector<128x256xf32>
    %11 = tpu.matmul %10, %9, %cst {dimension_numbers = #tpu.dot_dimension_numbers<[1], [0], [0], [1], [0, 0, 1, 1], [], []>} : vector<128x8xf32>, vector<8x256xf32>, vector<128x256xf32> -> vector<128x256xf32>
    %12 = vector.extract_strided_slice %11 {offsets = [0, 0], sizes = [32, 256], strides = [1, 1]} : vector<128x256xf32> to vector<32x256xf32>
    %c0_7 = arith.constant 0 : index
    %c0_8 = arith.constant 0 : index
    %c0_9 = arith.constant 0 : index
    %c0_10 = arith.constant 0 : index
    %13 = vector.load %arg8[%c0_7, %c0_8, %c0_9, %c0_10] : memref<2x4x32x256xf32, #tpu.memory_space<vmem>>, vector<1x1x32x256xf32>
    %14 = vector.shape_cast %13 : vector<1x1x32x256xf32> to vector<32x256xf32>
    %c1 = arith.constant 1 : index
    %c0_11 = arith.constant 0 : index
    %c0_12 = arith.constant 0 : index
    %c0_13 = arith.constant 0 : index
    %15 = vector.load %arg8[%c1, %c0_11, %c0_12, %c0_13] : memref<2x4x32x256xf32, #tpu.memory_space<vmem>>, vector<1x1x32x256xf32>
    %16 = vector.shape_cast %15 : vector<1x1x32x256xf32> to vector<32x256xf32>
    %cst_14 = arith.constant dense<0.000000e+00> : vector<256x256xf32>
    %17 = tpu.matmul %12, %14, %cst_14 {dimension_numbers = #tpu.dot_dimension_numbers<[0], [0], [1], [1], [0, 1, 1, 1], [], []>} : vector<32x256xf32>, vector<32x256xf32>, vector<256x256xf32> -> vector<256x256xf32>
    %cst_15 = arith.constant dense<0xFF800000> : vector<256xf32>
    %18 = vector.multi_reduction <maximumf>, %17, %cst_15 [1] : vector<256x256xf32> to vector<256xf32>
    %19 = vector.shape_cast %18 : vector<256xf32> to vector<256x1xf32>
    %20 = vector.broadcast %19 : vector<256x1xf32> to vector<256x256xf32>
    %21 = arith.subf %17, %20 : vector<256x256xf32>
    %22 = math.exp %21 : vector<256x256xf32>
    %cst_16 = arith.constant dense<0.000000e+00> : vector<256xf32>
    %23 = vector.multi_reduction <add>, %22, %cst_16 [1] : vector<256x256xf32> to vector<256xf32>
    %24 = vector.shape_cast %23 : vector<256xf32> to vector<256x1xf32>
    %25 = tpu.reciprocal %24 : vector<256x1xf32> -> vector<256x1xf32>
    %26 = vector.broadcast %25 : vector<256x1xf32> to vector<256x256xf32>
    %27 = arith.mulf %22, %26 : vector<256x256xf32>
    %cst_17 = arith.constant dense<0.000000e+00> : vector<32x256xf32>
    %28 = tpu.matmul %16, %27, %cst_17 {dimension_numbers = #tpu.dot_dimension_numbers<[1], [1], [0], [0], [0, 0, 1, 0], [], []>} : vector<32x256xf32>, vector<256x256xf32>, vector<32x256xf32> -> vector<32x256xf32>
    %29 = vector.extract_strided_slice %11 {offsets = [32, 0], sizes = [32, 256], strides = [1, 1]} : vector<128x256xf32> to vector<32x256xf32>
    %c0_18 = arith.constant 0 : index
    %c1_19 = arith.constant 1 : index
    %c0_20 = arith.constant 0 : index
    %c0_21 = arith.constant 0 : index
    %30 = vector.load %arg8[%c0_18, %c1_19, %c0_20, %c0_21] : memref<2x4x32x256xf32, #tpu.memory_space<vmem>>, vector<1x1x32x256xf32>
    %31 = vector.shape_cast %30 : vector<1x1x32x256xf32> to vector<32x256xf32>
    %c1_22 = arith.constant 1 : index
    %c1_23 = arith.constant 1 : index
    %c0_24 = arith.constant 0 : index
    %c0_25 = arith.constant 0 : index
    %32 = vector.load %arg8[%c1_22, %c1_23, %c0_24, %c0_25] : memref<2x4x32x256xf32, #tpu.memory_space<vmem>>, vector<1x1x32x256xf32>
    %33 = vector.shape_cast %32 : vector<1x1x32x256xf32> to vector<32x256xf32>
    %cst_26 = arith.constant dense<0.000000e+00> : vector<256x256xf32>
    %34 = tpu.matmul %29, %31, %cst_26 {dimension_numbers = #tpu.dot_dimension_numbers<[0], [0], [1], [1], [0, 1, 1, 1], [], []>} : vector<32x256xf32>, vector<32x256xf32>, vector<256x256xf32> -> vector<256x256xf32>
    %cst_27 = arith.constant dense<0xFF800000> : vector<256xf32>
    %35 = vector.multi_reduction <maximumf>, %34, %cst_27 [1] : vector<256x256xf32> to vector<256xf32>
    %36 = vector.shape_cast %35 : vector<256xf32> to vector<256x1xf32>
    %37 = vector.broadcast %36 : vector<256x1xf32> to vector<256x256xf32>
    %38 = arith.subf %34, %37 : vector<256x256xf32>
    %39 = math.exp %38 : vector<256x256xf32>
    %cst_28 = arith.constant dense<0.000000e+00> : vector<256xf32>
    %40 = vector.multi_reduction <add>, %39, %cst_28 [1] : vector<256x256xf32> to vector<256xf32>
    %41 = vector.shape_cast %40 : vector<256xf32> to vector<256x1xf32>
    %42 = tpu.reciprocal %41 : vector<256x1xf32> -> vector<256x1xf32>
    %43 = vector.broadcast %42 : vector<256x1xf32> to vector<256x256xf32>
    %44 = arith.mulf %39, %43 : vector<256x256xf32>
    %cst_29 = arith.constant dense<0.000000e+00> : vector<32x256xf32>
    %45 = tpu.matmul %33, %44, %cst_29 {dimension_numbers = #tpu.dot_dimension_numbers<[1], [1], [0], [0], [0, 0, 1, 0], [], []>} : vector<32x256xf32>, vector<256x256xf32>, vector<32x256xf32> -> vector<32x256xf32>
    %46 = vector.extract_strided_slice %11 {offsets = [64, 0], sizes = [32, 256], strides = [1, 1]} : vector<128x256xf32> to vector<32x256xf32>
    %c0_30 = arith.constant 0 : index
    %c2 = arith.constant 2 : index
    %c0_31 = arith.constant 0 : index
    %c0_32 = arith.constant 0 : index
    %47 = vector.load %arg8[%c0_30, %c2, %c0_31, %c0_32] : memref<2x4x32x256xf32, #tpu.memory_space<vmem>>, vector<1x1x32x256xf32>
    %48 = vector.shape_cast %47 : vector<1x1x32x256xf32> to vector<32x256xf32>
    %c1_33 = arith.constant 1 : index
    %c2_34 = arith.constant 2 : index
    %c0_35 = arith.constant 0 : index
    %c0_36 = arith.constant 0 : index
    %49 = vector.load %arg8[%c1_33, %c2_34, %c0_35, %c0_36] : memref<2x4x32x256xf32, #tpu.memory_space<vmem>>, vector<1x1x32x256xf32>
    %50 = vector.shape_cast %49 : vector<1x1x32x256xf32> to vector<32x256xf32>
    %cst_37 = arith.constant dense<0.000000e+00> : vector<256x256xf32>
    %51 = tpu.matmul %46, %48, %cst_37 {dimension_numbers = #tpu.dot_dimension_numbers<[0], [0], [1], [1], [0, 1, 1, 1], [], []>} : vector<32x256xf32>, vector<32x256xf32>, vector<256x256xf32> -> vector<256x256xf32>
    %cst_38 = arith.constant dense<0xFF800000> : vector<256xf32>
    %52 = vector.multi_reduction <maximumf>, %51, %cst_38 [1] : vector<256x256xf32> to vector<256xf32>
    %53 = vector.shape_cast %52 : vector<256xf32> to vector<256x1xf32>
    %54 = vector.broadcast %53 : vector<256x1xf32> to vector<256x256xf32>
    %55 = arith.subf %51, %54 : vector<256x256xf32>
    %56 = math.exp %55 : vector<256x256xf32>
    %cst_39 = arith.constant dense<0.000000e+00> : vector<256xf32>
    %57 = vector.multi_reduction <add>, %56, %cst_39 [1] : vector<256x256xf32> to vector<256xf32>
    %58 = vector.shape_cast %57 : vector<256xf32> to vector<256x1xf32>
    %59 = tpu.reciprocal %58 : vector<256x1xf32> -> vector<256x1xf32>
    %60 = vector.broadcast %59 : vector<256x1xf32> to vector<256x256xf32>
    %61 = arith.mulf %56, %60 : vector<256x256xf32>
    %cst_40 = arith.constant dense<0.000000e+00> : vector<32x256xf32>
    %62 = tpu.matmul %50, %61, %cst_40 {dimension_numbers = #tpu.dot_dimension_numbers<[1], [1], [0], [0], [0, 0, 1, 0], [], []>} : vector<32x256xf32>, vector<256x256xf32>, vector<32x256xf32> -> vector<32x256xf32>
    %63 = vector.extract_strided_slice %11 {offsets = [96, 0], sizes = [32, 256], strides = [1, 1]} : vector<128x256xf32> to vector<32x256xf32>
    %c0_41 = arith.constant 0 : index
    %c3 = arith.constant 3 : index
    %c0_42 = arith.constant 0 : index
    %c0_43 = arith.constant 0 : index
    %64 = vector.load %arg8[%c0_41, %c3, %c0_42, %c0_43] : memref<2x4x32x256xf32, #tpu.memory_space<vmem>>, vector<1x1x32x256xf32>
    %65 = vector.shape_cast %64 : vector<1x1x32x256xf32> to vector<32x256xf32>
    %c1_44 = arith.constant 1 : index
    %c3_45 = arith.constant 3 : index
    %c0_46 = arith.constant 0 : index
    %c0_47 = arith.constant 0 : index
    %66 = vector.load %arg8[%c1_44, %c3_45, %c0_46, %c0_47] : memref<2x4x32x256xf32, #tpu.memory_space<vmem>>, vector<1x1x32x256xf32>
    %67 = vector.shape_cast %66 : vector<1x1x32x256xf32> to vector<32x256xf32>
    %cst_48 = arith.constant dense<0.000000e+00> : vector<256x256xf32>
    %68 = tpu.matmul %63, %65, %cst_48 {dimension_numbers = #tpu.dot_dimension_numbers<[0], [0], [1], [1], [0, 1, 1, 1], [], []>} : vector<32x256xf32>, vector<32x256xf32>, vector<256x256xf32> -> vector<256x256xf32>
    %cst_49 = arith.constant dense<0xFF800000> : vector<256xf32>
    %69 = vector.multi_reduction <maximumf>, %68, %cst_49 [1] : vector<256x256xf32> to vector<256xf32>
    %70 = vector.shape_cast %69 : vector<256xf32> to vector<256x1xf32>
    %71 = vector.broadcast %70 : vector<256x1xf32> to vector<256x256xf32>
    %72 = arith.subf %68, %71 : vector<256x256xf32>
    %73 = math.exp %72 : vector<256x256xf32>
    %cst_50 = arith.constant dense<0.000000e+00> : vector<256xf32>
    %74 = vector.multi_reduction <add>, %73, %cst_50 [1] : vector<256x256xf32> to vector<256xf32>
    %75 = vector.shape_cast %74 : vector<256xf32> to vector<256x1xf32>
    %76 = tpu.reciprocal %75 : vector<256x1xf32> -> vector<256x1xf32>
    %77 = vector.broadcast %76 : vector<256x1xf32> to vector<256x256xf32>
    %78 = arith.mulf %73, %77 : vector<256x256xf32>
    %cst_51 = arith.constant dense<0.000000e+00> : vector<32x256xf32>
    %79 = tpu.matmul %67, %78, %cst_51 {dimension_numbers = #tpu.dot_dimension_numbers<[1], [1], [0], [0], [0, 0, 1, 0], [], []>} : vector<32x256xf32>, vector<256x256xf32>, vector<32x256xf32> -> vector<32x256xf32>
    %80 = tpu.concatenate %28, %45, %62, %79 in 0 : vector<32x256xf32>, vector<32x256xf32>, vector<32x256xf32>, vector<32x256xf32> -> vector<128x256xf32>
    %c0_52 = arith.constant 0 : index
    %c0_53 = arith.constant 0 : index
    %81 = vector.load %arg5[%c0_52, %c0_53] : memref<8x128xf32, #tpu.memory_space<vmem>>, vector<8x128xf32>
    %cst_54 = arith.constant dense<0.000000e+00> : vector<8x256xf32>
    %82 = tpu.matmul %81, %80, %cst_54 {dimension_numbers = #tpu.dot_dimension_numbers<[1], [0], [0], [1], [0, 0, 1, 1], [], []>} : vector<8x128xf32>, vector<128x256xf32>, vector<8x256xf32> -> vector<8x256xf32>
    %c0_55 = arith.constant 0 : index
    %c0_56 = arith.constant 0 : index
    %83 = vector.load %arg6[%c0_55, %c0_56] : memref<8x1xf32, #tpu.memory_space<vmem>>, vector<8x1xf32>
    %84 = vector.broadcast %83 : vector<8x1xf32> to vector<8x256xf32>
    %85 = arith.addf %82, %84 : vector<8x256xf32>
    %c0_57 = arith.constant 0 : index
    %c0_58 = arith.constant 0 : index
    %c0_59 = arith.constant 0 : index
    %86 = vector.load %arg7[%c0_57, %c0_58, %c0_59] : memref<1x8x256xf32, #tpu.memory_space<vmem>>, vector<1x8x256xf32>
    %87 = vector.shape_cast %86 : vector<1x8x256xf32> to vector<8x256xf32>
    %88 = vector.shape_cast %85 : vector<8x256xf32> to vector<1x8x256xf32>
    tpu.vector_store %arg7[%c0_57, %c0_58, %c0_59], %88 {strides = array<i32>} : memref<1x8x256xf32, #tpu.memory_space<vmem>>, vector<1x8x256xf32>,
    return
  }
  func.func @transform_0(%arg0: i32, %arg1: i32) -> (i32, i32, i32) {
    %c0_i32 = arith.constant 0 : i32
    %c0_i32_0 = arith.constant 0 : i32
    %c0_i32_1 = arith.constant 0 : i32
    return %arg0, %c0_i32, %c0_i32_0 : i32, i32, i32
  }
  func.func @transform_1(%arg0: i32, %arg1: i32) -> (i32, i32) {
    %c0_i32 = arith.constant 0 : i32
    %c0_i32_0 = arith.constant 0 : i32
    %c0_i32_1 = arith.constant 0 : i32
    return %c0_i32, %c0_i32_0 : i32, i32
  }
  func.func @transform_2(%arg0: i32, %arg1: i32) -> (i32, i32) {
    %c0_i32 = arith.constant 0 : i32
    %c0_i32_0 = arith.constant 0 : i32
    %c0_i32_1 = arith.constant 0 : i32
    return %c0_i32, %c0_i32_0 : i32, i32
  }
  func.func @transform_3(%arg0: i32, %arg1: i32) -> (i32, i32) {
    %c0_i32 = arith.constant 0 : i32
    %c0_i32_0 = arith.constant 0 : i32
    %c0_i32_1 = arith.constant 0 : i32
    return %c0_i32, %c0_i32_0 : i32, i32
  }
  func.func @transform_4(%arg0: i32, %arg1: i32) -> (i32, i32) {
    %c0_i32 = arith.constant 0 : i32
    %c0_i32_0 = arith.constant 0 : i32
    %c0_i32_1 = arith.constant 0 : i32
    return %c0_i32, %c0_i32_0 : i32, i32
  }
  func.func @transform_5(%arg0: i32, %arg1: i32) -> (i32, i32, i32) {
    %c0_i32 = arith.constant 0 : i32
    %c0_i32_0 = arith.constant 0 : i32
    return %arg0, %c0_i32, %arg1 : i32, i32, i32
  }
}

</mosaic_0001>

<llo_original>
// kernel: tpu_custom_call.1
$region0: #{tpu_custom_call.1}
  #allocation0 [shape = 'u32[]', space=smem, size = 0x4, offset = 0x4, fixed_abs, tag = 'smem constant byte address 0x4 - core index']
  #allocation1 [shape = 'u32[72,128]{1,0:T(1,128)}', space=vmem, size = 0x9000, scoped, tag = 'internal scratch']
  #allocation2 [shape = 'f32[2,4,32,256]{3,2,1,0:T(8,128)}', space=vmem, size = 0x40000, scoped, tag = 'scratch operand']
  %s0 = inlined_call_operand.vmem [shape: f32[2,8,256], index: 0, kind: input, shape index: {}]
  %s1 = inlined_call_operand.vmem [shape: f32[128,8], index: 1, kind: input, shape index: {}]
  %s2 = inlined_call_operand.vmem [shape: f32[256,8], index: 2, kind: input, shape index: {}]
  %s3 = inlined_call_operand.vmem [shape: f32[8,128], index: 3, kind: input, shape index: {}]
  %s4 = inlined_call_operand.vmem [shape: f32[8,1], index: 4, kind: input, shape index: {}]
  %s5 = inlined_call_operand.hbm [shape: f32[2,8,256], index: 5, kind: output, shape index: {}]
  %s6 = sld [smem:[#allocation0]]
  $region57: #{tpu_custom_call.1} parent=0
    _
  %s8 = ssub.s32 1, %s6
  %s9 = scalar_select 0, %s8, %s6
  $region1: #{tpu_custom_call.1} parent=0
    #allocation3 [shape = 'u8[16384]{0}', space=vmem, size = 0x4000, scoped, tag = 'output window, operand 0']
    #allocation4 [shape = 's32[2]{0}', space=sflag, size = 0x8, scoped, tag = 'scoped memory for tpu_custom_call.1']
    %10 = vsyncpa [#allocation4], 0
    %s11 = scalar_lea.sflag [#allocation4], 1
    %12 = vsyncpa %s11, 0
    loop: start=0, step=1, limit=4
    $region2: #{tpu_custom_call.1} parent=1 // loop_pre_header
      _
    $region3: #{tpu_custom_call.1} parent=1 // loop_header
      %s14 = sphi 0, %s18
      %p15 = scmp.ge.s32.totalorder %s14, 4
      %s21 = sphi 0, %s33
      %s22 = sphi 0, %s29
      %s23 = sphi 0, %s21
      %s24 = sphi 0, %s22
      %s25 = sphi 0, %s23
      %s26 = sphi 0, %s24
      %s36 = sphi 0, %s38
      %s39 = sphi 0, %s36
      %s40 = sphi 0, %s39
      %s56 = sphi 0, %s40
      %s60 = sphi 0, %s60
      %s62 = sphi 0, %s60
      %s63 = sphi 0, %s62
      %s77 = sphi 0, %s63
      %s81 = sphi 0, %s81
      %s83 = sphi 0, %s81
      %s84 = sphi 0, %s83
      %s98 = sphi 0, %s84
      %s102 = sphi 0, %s102
      %s104 = sphi 0, %s102
      %s105 = sphi 0, %s104
      %s119 = sphi 0, %s105
      %s123 = sphi 0, %s123
      %s125 = sphi 0, %s123
      %s126 = sphi 0, %s125
      %s140 = sphi 0, %s126
      %s148 = sphi 0, %s150
      %s151 = sphi 0, %s148
      %s152 = sphi 0, %s151
      %s168 = sphi 0, %s152
    $region4: #{tpu_custom_call.1} parent=1 // loop_header_branch
      %17 = sbr.rel (%p15) target = $region8
    $region5: #{tpu_custom_call.1} parent=1 // loop_body
      %s19 = ssub.s32 %s14, 1
      %s20 = ssub.s32 %s14, 2
      %s27 = sadd.s32 1, %s22
      %p28 = scmp.ge.s32.totalorder %s27, 1
      %s29 = scalar_select %p28, 0, %s27
      %s30 = sadd.s32 1, %s21
      %s31 = scalar_select %p28, %s30, %s21
      %p32 = scmp.ge.s32.totalorder %s31, 2
      %s33 = scalar_select %p32, 0, %s31
      %s34 = ssub.s32 %s21, %s33
      %p35 = scmp.eq.s32.totalorder %s34, 0
      %s37 = sadd.s32 %s36, 1
      %s38 = scalar_select %p35, %s36, %s37
      %p41 = pneg %p35
      %p42 = scmp.eq.s32.totalorder %s14, 1
      %p43 = por %p41, %p42
      %p44 = scmp.ne.s32.totalorder %s36, %s39
      %p45 = scmp.eq.s32.totalorder %s14, 0
      %p46 = por %p44, %p45
      %p47 = scmp.ne.s32.totalorder %s36, %s39
      %p48 = scmp.eq.s32.totalorder %s19, 1
      %p49 = por %p47, %p48
      %p50 = scmp.ne.s32.totalorder %s39, %s40
      %p51 = scmp.eq.s32.totalorder %s19, 0
      %p52 = por %p50, %p51
      %p53 = scmp.ne.s32.totalorder %s39, %s40
      %p54 = scmp.eq.s32.totalorder %s20, 1
      %p55 = por %p53, %p54
      %p57 = scmp.ne.s32.totalorder %s40, %s56
      %p58 = scmp.eq.s32.totalorder %s20, 0
      %p59 = por %p57, %p58
      %s61 = sadd.s32 %s60, 1
      %p64 = scmp.eq.s32.totalorder %s14, 1
      %p65 = scmp.ne.s32.totalorder %s60, %s62
      %p66 = scmp.eq.s32.totalorder %s14, 0
      %p67 = por %p65, %p66
      %p68 = scmp.ne.s32.totalorder %s60, %s62
      %p69 = scmp.eq.s32.totalorder %s19, 1
      %p70 = por %p68, %p69
      %p71 = scmp.ne.s32.totalorder %s62, %s63
      %p72 = scmp.eq.s32.totalorder %s19, 0
      %p73 = por %p71, %p72
      %p74 = scmp.ne.s32.totalorder %s62, %s63
      %p75 = scmp.eq.s32.totalorder %s20, 1
      %p76 = por %p74, %p75
      %p78 = scmp.ne.s32.totalorder %s63, %s77
      %p79 = scmp.eq.s32.totalorder %s20, 0
      %p80 = por %p78, %p79
      %s82 = sadd.s32 %s81, 1
      %p85 = scmp.eq.s32.totalorder %s14, 1
      %p86 = scmp.ne.s32.totalorder %s81, %s83
      %p87 = scmp.eq.s32.totalorder %s14, 0
      %p88 = por %p86, %p87
      %p89 = scmp.ne.s32.totalorder %s81, %s83
      %p90 = scmp.eq.s32.totalorder %s19, 1
      %p91 = por %p89, %p90
      %p92 = scmp.ne.s32.totalorder %s83, %s84
      %p93 = scmp.eq.s32.totalorder %s19, 0
      %p94 = por %p92, %p93
      %p95 = scmp.ne.s32.totalorder %s83, %s84
      %p96 = scmp.eq.s32.totalorder %s20, 1
      %p97 = por %p95, %p96
      %p99 = scmp.ne.s32.totalorder %s84, %s98
      %p100 = scmp.eq.s32.totalorder %s20, 0
      %p101 = por %p99, %p100
      %s103 = sadd.s32 %s102, 1
      %p106 = scmp.eq.s32.totalorder %s14, 1
      %p107 = scmp.ne.s32.totalorder %s102, %s104
      %p108 = scmp.eq.s32.totalorder %s14, 0
      %p109 = por %p107, %p108
      %p110 = scmp.ne.s32.totalorder %s102, %s104
      %p111 = scmp.eq.s32.totalorder %s19, 1
      %p112 = por %p110, %p111
      %p113 = scmp.ne.s32.totalorder %s104, %s105
      %p114 = scmp.eq.s32.totalorder %s19, 0
      %p115 = por %p113, %p114
      %p116 = scmp.ne.s32.totalorder %s104, %s105
      %p117 = scmp.eq.s32.totalorder %s20, 1
      %p118 = por %p116, %p117
      %p120 = scmp.ne.s32.totalorder %s105, %s119
      %p121 = scmp.eq.s32.totalorder %s20, 0
      %p122 = por %p120, %p121
      %s124 = sadd.s32 %s123, 1
      %p127 = scmp.eq.s32.totalorder %s14, 1
      %p128 = scmp.ne.s32.totalorder %s123, %s125
      %p129 = scmp.eq.s32.totalorder %s14, 0
      %p130 = por %p128, %p129
      %p131 = scmp.ne.s32.totalorder %s123, %s125
      %p132 = scmp.eq.s32.totalorder %s19, 1
      %p133 = por %p131, %p132
      %p134 = scmp.ne.s32.totalorder %s125, %s126
      %p135 = scmp.eq.s32.totalorder %s19, 0
      %p136 = por %p134, %p135
      %p137 = scmp.ne.s32.totalorder %s125, %s126
      %p138 = scmp.eq.s32.totalorder %s20, 1
      %p139 = por %p137, %p138
      %p141 = scmp.ne.s32.totalorder %s126, %s140
      %p142 = scmp.eq.s32.totalorder %s20, 0
      %p143 = por %p141, %p142
      %s144 = ssub.s32 %s21, %s33
      %s145 = ssub.s32 %s22, %s29
      %s146 = sor.u32 %s144, %s145
      %p147 = scmp.eq.s32.totalorder %s146, 0
      %s149 = sadd.s32 %s148, 1
      %s150 = scalar_select %p147, %s148, %s149
      %p153 = pneg %p147
      %p154 = scmp.eq.s32.totalorder %s14, 1
      %p155 = por %p153, %p154
      %p156 = scmp.ne.s32.totalorder %s148, %s151
      %p157 = scmp.eq.s32.totalorder %s14, 0
      %p158 = por %p156, %p157
      %p159 = scmp.ne.s32.totalorder %s148, %s151
      %p160 = scmp.eq.s32.totalorder %s19, 1
      %p161 = por %p159, %p160
      %p162 = scmp.ne.s32.totalorder %s151, %s152
      %p163 = scmp.eq.s32.totalorder %s19, 0
      %p164 = por %p162, %p163
      %p165 = scmp.ne.s32.totalorder %s151, %s152
      %p166 = scmp.eq.s32.totalorder %s20, 1
      %p167 = por %p165, %p166
      %p169 = scmp.ne.s32.totalorder %s152, %s168
      %p170 = scmp.eq.s32.totalorder %s20, 0
      %p171 = por %p169, %p170
      %p172 = scmp.le.s32.totalorder 1, %s14
      %p173 = scmp.lt.s32.totalorder %s14, 3
      %p174 = pnand %p172, %p173
      %p175 = pneg %p174
      // Predicated region
      $region9: #{tpu_custom_call.1} parent=5 // pred_check
        _
      $region10: #{tpu_custom_call.1} parent=5 // pred_check_branch
        %177 = sbr.rel (%p174) target = $region12
      $region11: #{tpu_custom_call.1} parent=5 // pred_region
        %s178 = ssub.s32 %s14, 1
        // Predicated region
        $region13: #{tpu_custom_call.1} parent=11 // pred_check
          %p179 = pneg %p73
        $region14: #{tpu_custom_call.1} parent=11 // pred_check_branch
          %181 = sbr.rel (%p179) target = $region16
        $region15: #{tpu_custom_call.1} parent=11 // pred_region
          _
        $region16: #{tpu_custom_call.1} parent=11 // pred_fallthru
          _
        // Predicated region
        $region17: #{tpu_custom_call.1} parent=11 // pred_check
          %p182 = pneg %p94
        $region18: #{tpu_custom_call.1} parent=11 // pred_check_branch
          %184 = sbr.rel (%p182) target = $region20
        $region19: #{tpu_custom_call.1} parent=11 // pred_region
          _
        $region20: #{tpu_custom_call.1} parent=11 // pred_fallthru
          _
        // Predicated region
        $region21: #{tpu_custom_call.1} parent=11 // pred_check
          %p185 = pneg %p115
        $region22: #{tpu_custom_call.1} parent=11 // pred_check_branch
          %187 = sbr.rel (%p185) target = $region24
        $region23: #{tpu_custom_call.1} parent=11 // pred_region
          _
        $region24: #{tpu_custom_call.1} parent=11 // pred_fallthru
          _
        // Predicated region
        $region25: #{tpu_custom_call.1} parent=11 // pred_check
          %p188 = pneg %p136
        $region26: #{tpu_custom_call.1} parent=11 // pred_check_branch
          %190 = sbr.rel (%p188) target = $region28
        $region27: #{tpu_custom_call.1} parent=11 // pred_region
          _
        $region28: #{tpu_custom_call.1} parent=11 // pred_fallthru
          _
      $region12: #{tpu_custom_call.1} parent=5 // pred_fallthru
        _
      %p191 = scmp.lt.s32.totalorder %s14, 2
      // Predicated region
      $region29: #{tpu_custom_call.1} parent=5 // pred_check
        %p192 = pneg %p191
      $region30: #{tpu_custom_call.1} parent=5 // pred_check_branch
        %194 = sbr.rel (%p192) target = $region32
      $region31: #{tpu_custom_call.1} parent=5 // pred_region
        // Predicated region
        $region33: #{tpu_custom_call.1} parent=31 // pred_check
          %p195 = pneg %p46
        $region34: #{tpu_custom_call.1} parent=31 // pred_check_branch
          %197 = sbr.rel (%p195) target = $region36
        $region35: #{tpu_custom_call.1} parent=31 // pred_region
          %p198 = scmp.lt.s32.totalorder %s21, 1
          %s199 = scalar_select %p198, %s21, 1
          %s200 = smul.addr %s199, 2
          %s201 = smul.addr %s200, 8
          %s202 = scalar_lea.vmem %s0, %s201
        $region36: #{tpu_custom_call.1} parent=31 // pred_fallthru
          _
      $region32: #{tpu_custom_call.1} parent=5 // pred_fallthru
        _
      %p203 = scmp.le.s32.totalorder 1, %s14
      %p204 = scmp.lt.s32.totalorder %s14, 3
      %p205 = pnand %p203, %p204
      %p206 = pneg %p205
      // Predicated region
      $region37: #{tpu_custom_call.1} parent=5 // pred_check
        _
      $region38: #{tpu_custom_call.1} parent=5 // pred_check_branch
        %208 = sbr.rel (%p205) target = $region40
      $region39: #{tpu_custom_call.1} parent=5 // pred_region
        %s209 = ssub.s32 %s14, 1
        %p210 = scmp.lt.s32.totalorder %s23, 1
        %s211 = scalar_select %p210, %s23, 1
        %s212 = smul.addr %s211, 2
        %s213 = smul.addr %s212, 8
        %s214 = scalar_lea.vmem %s0, %s213
        %p215 = pneg %p52
        %p216 = pneg %p49
        %p217 = pneg %p73
        %p218 = pneg %p70
        %p219 = pneg %p94
        %p220 = pneg %p91
        %p221 = pneg %p115
        %p222 = pneg %p112
        %p223 = pneg %p136
        %p224 = pneg %p133
        %p225 = pneg %p164
        %p226 = pneg %p161
        %s227 = sand.u32 %s151, 1
        %s228 = scalar_lea.sflag [#allocation4], %s227
        %s229 = sand.u32 %s151, 1
        %s230 = smul.addr %s229, 16
        %s231 = scalar_lea.vmem [#allocation3], %s230
        %p232 = scmp.lt.s32.totalorder %s23, 1
        %s233 = scalar_select %p232, %s23, 1
        %s234 = smul.addr %s233, 2
        %s235 = smul.addr %s234, 8
        %s236 = scalar_lea.vmem %s0, %s235
        %s237 = smul.u32 2, %s24
        %v238 = vld [vmem:[%s236] sm:$0xff]
        %v239 = vld [vmem:[%s236 + $0x8] sm:$0xff]
        %p240 = scmp.eq.s32.totalorder %s24, 0
        // Predicated region
        $region41: #{tpu_custom_call.1} parent=39 // pred_check
          %p241 = pneg %p240
        $region42: #{tpu_custom_call.1} parent=39 // pred_check_branch
          %243 = sbr.rel (%p241) target = $region44
        $region43: #{tpu_custom_call.1} parent=39 // pred_region
          %v244 = vld [vmem:[%s2] sm:$0xff]
          %v245 = vld [vmem:[%s2 + $0x8] sm:$0xff]
          %v246 = vld [vmem:[%s2 + $0x10] sm:$0xff]
          %v247 = vld [vmem:[%s2 + $0x18] sm:$0xff]
          %v248 = vld [vmem:[%s2 + $0x20] sm:$0xff]
          %v249 = vld [vmem:[%s2 + $0x28] sm:$0xff]
          %v250 = vld [vmem:[%s2 + $0x30] sm:$0xff]
          %v251 = vld [vmem:[%s2 + $0x38] sm:$0xff]
          %v252 = vld [vmem:[%s2 + $0x40] sm:$0xff]
          %v253 = vld [vmem:[%s2 + $0x48] sm:$0xff]
          %v254 = vld [vmem:[%s2 + $0x50] sm:$0xff]
          %v255 = vld [vmem:[%s2 + $0x58] sm:$0xff]
          %v256 = vld [vmem:[%s2 + $0x60] sm:$0xff]
          %v257 = vld [vmem:[%s2 + $0x68] sm:$0xff]
          %v258 = vld [vmem:[%s2 + $0x70] sm:$0xff]
          %v259 = vld [vmem:[%s2 + $0x78] sm:$0xff]
          %v260 = vld [vmem:[%s2 + $0x80] sm:$0xff]
          %v261 = vld [vmem:[%s2 + $0x88] sm:$0xff]
          %v262 = vld [vmem:[%s2 + $0x90] sm:$0xff]
          %v263 = vld [vmem:[%s2 + $0x98] sm:$0xff]
          %v264 = vld [vmem:[%s2 + $0xa0] sm:$0xff]
          %v265 = vld [vmem:[%s2 + $0xa8] sm:$0xff]
          %v266 = vld [vmem:[%s2 + $0xb0] sm:$0xff]
          %v267 = vld [vmem:[%s2 + $0xb8] sm:$0xff]
          %v268 = vld [vmem:[%s2 + $0xc0] sm:$0xff]
          %v269 = vld [vmem:[%s2 + $0xc8] sm:$0xff]
          %v270 = vld [vmem:[%s2 + $0xd0] sm:$0xff]
          %v271 = vld [vmem:[%s2 + $0xd8] sm:$0xff]
          %v272 = vld [vmem:[%s2 + $0xe0] sm:$0xff]
          %v273 = vld [vmem:[%s2 + $0xe8] sm:$0xff]
          %v274 = vld [vmem:[%s2 + $0xf0] sm:$0xff]
          %v275 = vld [vmem:[%s2 + $0xf8] sm:$0xff]
          %vm276 = vcmask 64512
          %v278 = vsel %vm276, %v244, 0
          %v281 = vsel %vm276, %v245, 0
          %v284 = vsel %vm276, %v246, 0
          %v287 = vsel %vm276, %v247, 0
          %v290 = vsel %vm276, %v248, 0
          %v293 = vsel %vm276, %v249, 0
          %v296 = vsel %vm276, %v250, 0
          %v299 = vsel %vm276, %v251, 0
          %v302 = vsel %vm276, %v252, 0
          %v305 = vsel %vm276, %v253, 0
          %v308 = vsel %vm276, %v254, 0
          %v311 = vsel %vm276, %v255, 0
          %v314 = vsel %vm276, %v256, 0
          %v317 = vsel %vm276, %v257, 0
          %v320 = vsel %vm276, %v258, 0
          %v323 = vsel %vm276, %v259, 0
          %v326 = vsel %vm276, %v260, 0
          %v329 = vsel %vm276, %v261, 0
          %v332 = vsel %vm276, %v262, 0
          %v335 = vsel %vm276, %v263, 0
          %v338 = vsel %vm276, %v264, 0
          %v341 = vsel %vm276, %v265, 0
          %v344 = vsel %vm276, %v266, 0
          %v347 = vsel %vm276, %v267, 0
          %v350 = vsel %vm276, %v268, 0
          %v353 = vsel %vm276, %v269, 0
          %v356 = vsel %vm276, %v270, 0
          %v359 = vsel %vm276, %v271, 0
          %v362 = vsel %vm276, %v272, 0
          %v365 = vsel %vm276, %v273, 0
          %v368 = vsel %vm276, %v274, 0
          %v371 = vsel %vm276, %v275, 0
          %373 = vmatpush.msra.mxu0 0.0
          %374 = vmatpush.msra.mxu0 0.0
          %375 = vmatpush.msra.mxu0 0.0
          %376 = vmatpush.msra.mxu0 0.0
          %377 = vmatpush.msra.mxu0 0.0
          %378 = vmatpush.msra.mxu0 0.0
          %379 = vmatpush.msra.mxu0 0.0
          %380 = vmatpush.msra.mxu0 0.0
          %381 = vmatpush.msra.mxu0 0.0
          %382 = vmatpush.msra.mxu0 0.0
          %383 = vmatpush.msra.mxu0 0.0
          %384 = vmatpush.msra.mxu0 0.0
          %385 = vmatpush.msra.mxu0 0.0
          %386 = vmatpush.msra.mxu0 0.0
          %387 = vmatpush.msra.mxu0 0.0
          %388 = vmatpush.msra.mxu0 %v238
          %389 = vmatmul.f32.gmra.mxu0 %v278
          %v390 = vpop.f32.mrf.mxu0
          %v391 = vadd.f32 0.0, %v390
          %392 = vmatmul.f32.gmra.mxu0 %v281
          %v393 = vpop.f32.mrf.mxu0
          %v394 = vadd.f32 0.0, %v393
          %395 = vmatmul.f32.gmra.mxu0 %v284
          %v396 = vpop.f32.mrf.mxu0
          %v397 = vadd.f32 0.0, %v396
          %398 = vmatmul.f32.gmra.mxu0 %v287
          %v399 = vpop.f32.mrf.mxu0
          %v400 = vadd.f32 0.0, %v399
          %401 = vmatmul.f32.gmra.mxu0 %v290
          %v402 = vpop.f32.mrf.mxu0
          %v403 = vadd.f32 0.0, %v402
          %404 = vmatmul.f32.gmra.mxu0 %v293
          %v405 = vpop.f32.mrf.mxu0
          %v406 = vadd.f32 0.0, %v405
          %407 = vmatmul.f32.gmra.mxu0 %v296
          %v408 = vpop.f32.mrf.mxu0
          %v409 = vadd.f32 0.0, %v408
          %410 = vmatmul.f32.gmra.mxu0 %v299
          %v411 = vpop.f32.mrf.mxu0
          %v412 = vadd.f32 0.0, %v411
          %413 = vmatmul.f32.gmra.mxu0 %v302
          %v414 = vpop.f32.mrf.mxu0
          %v415 = vadd.f32 0.0, %v414
          %416 = vmatmul.f32.gmra.mxu0 %v305
          %v417 = vpop.f32.mrf.mxu0
          %v418 = vadd.f32 0.0, %v417
          %419 = vmatmul.f32.gmra.mxu0 %v308
          %v420 = vpop.f32.mrf.mxu0
          %v421 = vadd.f32 0.0, %v420
          %422 = vmatmul.f32.gmra.mxu0 %v311
          %v423 = vpop.f32.mrf.mxu0
          %v424 = vadd.f32 0.0, %v423
          %425 = vmatmul.f32.gmra.mxu0 %v314
          %v426 = vpop.f32.mrf.mxu0
          %v427 = vadd.f32 0.0, %v426
          %428 = vmatmul.f32.gmra.mxu0 %v317
          %v429 = vpop.f32.mrf.mxu0
          %v430 = vadd.f32 0.0, %v429
          %431 = vmatmul.f32.gmra.mxu0 %v320
          %v432 = vpop.f32.mrf.mxu0
          %v433 = vadd.f32 0.0, %v432
          %434 = vmatmul.f32.gmra.mxu0 %v323
          %v435 = vpop.f32.mrf.mxu0
          %v436 = vadd.f32 0.0, %v435
          %437 = vmatmul.f32.gmra.mxu0 %v326
          %v438 = vpop.f32.mrf.mxu0
          %v439 = vadd.f32 0.0, %v438
          %440 = vmatmul.f32.gmra.mxu0 %v329
          %v441 = vpop.f32.mrf.mxu0
          %v442 = vadd.f32 0.0, %v441
          %443 = vmatmul.f32.gmra.mxu0 %v332
          %v444 = vpop.f32.mrf.mxu0
          %v445 = vadd.f32 0.0, %v444
          %446 = vmatmul.f32.gmra.mxu0 %v335
          %v447 = vpop.f32.mrf.mxu0
          %v448 = vadd.f32 0.0, %v447
          %449 = vmatmul.f32.gmra.mxu0 %v338
          %v450 = vpop.f32.mrf.mxu0
          %v451 = vadd.f32 0.0, %v450
          %452 = vmatmul.f32.gmra.mxu0 %v341
          %v453 = vpop.f32.mrf.mxu0
          %v454 = vadd.f32 0.0, %v453
          %455 = vmatmul.f32.gmra.mxu0 %v344
          %v456 = vpop.f32.mrf.mxu0
          %v457 = vadd.f32 0.0, %v456
          %458 = vmatmul.f32.gmra.mxu0 %v347
          %v459 = vpop.f32.mrf.mxu0
          %v460 = vadd.f32 0.0, %v459
          %461 = vmatmul.f32.gmra.mxu0 %v350
          %v462 = vpop.f32.mrf.mxu0
          %v463 = vadd.f32 0.0, %v462
          %464 = vmatmul.f32.gmra.mxu0 %v353
          %v465 = vpop.f32.mrf.mxu0
          %v466 = vadd.f32 0.0, %v465
          %467 = vmatmul.f32.gmra.mxu0 %v356
          %v468 = vpop.f32.mrf.mxu0
          %v469 = vadd.f32 0.0, %v468
          %470 = vmatmul.f32.gmra.mxu0 %v359
          %v471 = vpop.f32.mrf.mxu0
          %v472 = vadd.f32 0.0, %v471
          %473 = vmatmul.f32.gmra.mxu0 %v362
          %v474 = vpop.f32.mrf.mxu0
          %v475 = vadd.f32 0.0, %v474
          %476 = vmatmul.f32.gmra.mxu0 %v365
          %v477 = vpop.f32.mrf.mxu0
          %v478 = vadd.f32 0.0, %v477
          %479 = vmatmul.f32.gmra.mxu0 %v368
          %v480 = vpop.f32.mrf.mxu0
          %v481 = vadd.f32 0.0, %v480
          %482 = vmatmul.f32.gmra.mxu0 %v371
          %v483 = vpop.f32.mrf.mxu0
          %v484 = vadd.f32 0.0, %v483
          %485 = vdwg.mxu0
          %486 = vmatpush.msra.mxu0 0.0
          %487 = vmatpush.msra.mxu0 0.0
          %488 = vmatpush.msra.mxu0 0.0
          %489 = vmatpush.msra.mxu0 0.0
          %490 = vmatpush.msra.mxu0 0.0
          %491 = vmatpush.msra.mxu0 0.0
          %492 = vmatpush.msra.mxu0 0.0
          %493 = vmatpush.msra.mxu0 0.0
          %494 = vmatpush.msra.mxu0 0.0
          %495 = vmatpush.msra.mxu0 0.0
          %496 = vmatpush.msra.mxu0 0.0
          %497 = vmatpush.msra.mxu0 0.0
          %498 = vmatpush.msra.mxu0 0.0
          %499 = vmatpush.msra.mxu0 0.0
          %500 = vmatpush.msra.mxu0 0.0
          %501 = vmatpush.msra.mxu0 %v239
          %502 = vmatmul.f32.gmra.mxu0 %v278
          %v503 = vpop.f32.mrf.mxu0
          %v504 = vadd.f32 0.0, %v503
          %505 = vmatmul.f32.gmra.mxu0 %v281
          %v506 = vpop.f32.mrf.mxu0
          %v507 = vadd.f32 0.0, %v506
          %508 = vmatmul.f32.gmra.mxu0 %v284
          %v509 = vpop.f32.mrf.mxu0
          %v510 = vadd.f32 0.0, %v509
          %511 = vmatmul.f32.gmra.mxu0 %v287
          %v512 = vpop.f32.mrf.mxu0
          %v513 = vadd.f32 0.0, %v512
          %514 = vmatmul.f32.gmra.mxu0 %v290
          %v515 = vpop.f32.mrf.mxu0
          %v516 = vadd.f32 0.0, %v515
          %517 = vmatmul.f32.gmra.mxu0 %v293
          %v518 = vpop.f32.mrf.mxu0
          %v519 = vadd.f32 0.0, %v518
          %520 = vmatmul.f32.gmra.mxu0 %v296
          %v521 = vpop.f32.mrf.mxu0
          %v522 = vadd.f32 0.0, %v521
          %523 = vmatmul.f32.gmra.mxu0 %v299
          %v524 = vpop.f32.mrf.mxu0
          %v525 = vadd.f32 0.0, %v524
          %526 = vmatmul.f32.gmra.mxu0 %v302
          %v527 = vpop.f32.mrf.mxu0
          %v528 = vadd.f32 0.0, %v527
          %529 = vmatmul.f32.gmra.mxu0 %v305
          %v530 = vpop.f32.mrf.mxu0
          %v531 = vadd.f32 0.0, %v530
          %532 = vmatmul.f32.gmra.mxu0 %v308
          %v533 = vpop.f32.mrf.mxu0
          %v534 = vadd.f32 0.0, %v533
          %535 = vmatmul.f32.gmra.mxu0 %v311
          %v536 = vpop.f32.mrf.mxu0
          %v537 = vadd.f32 0.0, %v536
          %538 = vmatmul.f32.gmra.mxu0 %v314
          %v539 = vpop.f32.mrf.mxu0
          %v540 = vadd.f32 0.0, %v539
          %541 = vmatmul.f32.gmra.mxu0 %v317
          %v542 = vpop.f32.mrf.mxu0
          %v543 = vadd.f32 0.0, %v542
          %544 = vmatmul.f32.gmra.mxu0 %v320
          %v545 = vpop.f32.mrf.mxu0
          %v546 = vadd.f32 0.0, %v545
          %547 = vmatmul.f32.gmra.mxu0 %v323
          %v548 = vpop.f32.mrf.mxu0
          %v549 = vadd.f32 0.0, %v548
          %550 = vmatmul.f32.gmra.mxu0 %v326
          %v551 = vpop.f32.mrf.mxu0
          %v552 = vadd.f32 0.0, %v551
          %553 = vmatmul.f32.gmra.mxu0 %v329
          %v554 = vpop.f32.mrf.mxu0
          %v555 = vadd.f32 0.0, %v554
          %556 = vmatmul.f32.gmra.mxu0 %v332
          %v557 = vpop.f32.mrf.mxu0
          %v558 = vadd.f32 0.0, %v557
          %559 = vmatmul.f32.gmra.mxu0 %v335
          %v560 = vpop.f32.mrf.mxu0
          %v561 = vadd.f32 0.0, %v560
          %562 = vmatmul.f32.gmra.mxu0 %v338
          %v563 = vpop.f32.mrf.mxu0
          %v564 = vadd.f32 0.0, %v563
          %565 = vmatmul.f32.gmra.mxu0 %v341
          %v566 = vpop.f32.mrf.mxu0
          %v567 = vadd.f32 0.0, %v566
          %568 = vmatmul.f32.gmra.mxu0 %v344
          %v569 = vpop.f32.mrf.mxu0
          %v570 = vadd.f32 0.0, %v569
          %571 = vmatmul.f32.gmra.mxu0 %v347
          %v572 = vpop.f32.mrf.mxu0
          %v573 = vadd.f32 0.0, %v572
          %574 = vmatmul.f32.gmra.mxu0 %v350
          %v575 = vpop.f32.mrf.mxu0
          %v576 = vadd.f32 0.0, %v575
          %577 = vmatmul.f32.gmra.mxu0 %v353
          %v578 = vpop.f32.mrf.mxu0
          %v579 = vadd.f32 0.0, %v578
          %580 = vmatmul.f32.gmra.mxu0 %v356
          %v581 = vpop.f32.mrf.mxu0
          %v582 = vadd.f32 0.0, %v581
          %583 = vmatmul.f32.gmra.mxu0 %v359
          %v584 = vpop.f32.mrf.mxu0
          %v585 = vadd.f32 0.0, %v584
          %586 = vmatmul.f32.gmra.mxu0 %v362
          %v587 = vpop.f32.mrf.mxu0
          %v588 = vadd.f32 0.0, %v587
          %589 = vmatmul.f32.gmra.mxu0 %v365
          %v590 = vpop.f32.mrf.mxu0
          %v591 = vadd.f32 0.0, %v590
          %592 = vmatmul.f32.gmra.mxu0 %v368
          %v593 = vpop.f32.mrf.mxu0
          %v594 = vadd.f32 0.0, %v593
          %595 = vmatmul.f32.gmra.mxu0 %v371
          %v596 = vpop.f32.mrf.mxu0
          %v597 = vadd.f32 0.0, %v596
          %598 = vdwg.mxu0
          %599 = vst [vmem:[#allocation2] sm:$0xff] %v391
          %600 = vst [vmem:[#allocation2 + $0x8] sm:$0xff] %v504
          %601 = vst [vmem:[#allocation2 + $0x10] sm:$0xff] %v394
          %602 = vst [vmem:[#allocation2 + $0x18] sm:$0xff] %v507
          %603 = vst [vmem:[#allocation2 + $0x20] sm:$0xff] %v397
          %604 = vst [vmem:[#allocation2 + $0x28] sm:$0xff] %v510
          %605 = vst [vmem:[#allocation2 + $0x30] sm:$0xff] %v400
          %606 = vst [vmem:[#allocation2 + $0x38] sm:$0xff] %v513
          %607 = vst [vmem:[#allocation2 + $0x40] sm:$0xff] %v403
          %608 = vst [vmem:[#allocation2 + $0x48] sm:$0xff] %v516
          %609 = vst [vmem:[#allocation2 + $0x50] sm:$0xff] %v406
          %610 = vst [vmem:[#allocation2 + $0x58] sm:$0xff] %v519
          %611 = vst [vmem:[#allocation2 + $0x60] sm:$0xff] %v409
          %612 = vst [vmem:[#allocation2 + $0x68] sm:$0xff] %v522
          %613 = vst [vmem:[#allocation2 + $0x70] sm:$0xff] %v412
          %614 = vst [vmem:[#allocation2 + $0x78] sm:$0xff] %v525
          %615 = vst [vmem:[#allocation2 + $0x80] sm:$0xff] %v415
          %616 = vst [vmem:[#allocation2 + $0x88] sm:$0xff] %v528
          %617 = vst [vmem:[#allocation2 + $0x90] sm:$0xff] %v418
          %618 = vst [vmem:[#allocation2 + $0x98] sm:$0xff] %v531
          %619 = vst [vmem:[#allocation2 + $0xa0] sm:$0xff] %v421
          %620 = vst [vmem:[#allocation2 + $0xa8] sm:$0xff] %v534
          %621 = vst [vmem:[#allocation2 + $0xb0] sm:$0xff] %v424
          %622 = vst [vmem:[#allocation2 + $0xb8] sm:$0xff] %v537
          %623 = vst [vmem:[#allocation2 + $0xc0] sm:$0xff] %v427
          %624 = vst [vmem:[#allocation2 + $0xc8] sm:$0xff] %v540
          %625 = vst [vmem:[#allocation2 + $0xd0] sm:$0xff] %v430
          %626 = vst [vmem:[#allocation2 + $0xd8] sm:$0xff] %v543
          %627 = vst [vmem:[#allocation2 + $0xe0] sm:$0xff] %v433
          %628 = vst [vmem:[#allocation2 + $0xe8] sm:$0xff] %v546
          %629 = vst [vmem:[#allocation2 + $0xf0] sm:$0xff] %v436
          %630 = vst [vmem:[#allocation2 + $0xf8] sm:$0xff] %v549
          %631 = vst [vmem:[#allocation2 + $0x100] sm:$0xff] %v439
          %632 = vst [vmem:[#allocation2 + $0x108] sm:$0xff] %v552
          %633 = vst [vmem:[#allocation2 + $0x110] sm:$0xff] %v442
          %634 = vst [vmem:[#allocation2 + $0x118] sm:$0xff] %v555
          %635 = vst [vmem:[#allocation2 + $0x120] sm:$0xff] %v445
          %636 = vst [vmem:[#allocation2 + $0x128] sm:$0xff] %v558
          %637 = vst [vmem:[#allocation2 + $0x130] sm:$0xff] %v448
          %638 = vst [vmem:[#allocation2 + $0x138] sm:$0xff] %v561
          %639 = vst [vmem:[#allocation2 + $0x140] sm:$0xff] %v451
          %640 = vst [vmem:[#allocation2 + $0x148] sm:$0xff] %v564
          %641 = vst [vmem:[#allocation2 + $0x150] sm:$0xff] %v454
          %642 = vst [vmem:[#allocation2 + $0x158] sm:$0xff] %v567
          %643 = vst [vmem:[#allocation2 + $0x160] sm:$0xff] %v457
          %644 = vst [vmem:[#allocation2 + $0x168] sm:$0xff] %v570
          %645 = vst [vmem:[#allocation2 + $0x170] sm:$0xff] %v460
          %646 = vst [vmem:[#allocation2 + $0x178] sm:$0xff] %v573
          %647 = vst [vmem:[#allocation2 + $0x180] sm:$0xff] %v463
          %648 = vst [vmem:[#allocation2 + $0x188] sm:$0xff] %v576
          %649 = vst [vmem:[#allocation2 + $0x190] sm:$0xff] %v466
          %650 = vst [vmem:[#allocation2 + $0x198] sm:$0xff] %v579
          %651 = vst [vmem:[#allocation2 + $0x1a0] sm:$0xff] %v469
          %652 = vst [vmem:[#allocation2 + $0x1a8] sm:$0xff] %v582
          %653 = vst [vmem:[#allocation2 + $0x1b0] sm:$0xff] %v472
          %654 = vst [vmem:[#allocation2 + $0x1b8] sm:$0xff] %v585
          %655 = vst [vmem:[#allocation2 + $0x1c0] sm:$0xff] %v475
          %656 = vst [vmem:[#allocation2 + $0x1c8] sm:$0xff] %v588
          %657 = vst [vmem:[#allocation2 + $0x1d0] sm:$0xff] %v478
          %658 = vst [vmem:[#allocation2 + $0x1d8] sm:$0xff] %v591
          %659 = vst [vmem:[#allocation2 + $0x1e0] sm:$0xff] %v481
          %660 = vst [vmem:[#allocation2 + $0x1e8] sm:$0xff] %v594
          %661 = vst [vmem:[#allocation2 + $0x1f0] sm:$0xff] %v484
          %662 = vst [vmem:[#allocation2 + $0x1f8] sm:$0xff] %v597
        $region44: #{tpu_custom_call.1} parent=39 // pred_fallthru
          _
        %s663 = smul.u32 %s24, 256
        %s664 = sshra.s32 %s663, 7
        %s665 = sand.u32 %s663, 127
        %s666 = smul.addr %s664, 8
        %s667 = scalar_lea.vmem %s236, %s666
        %v668 = vld [vmem:[%s667] sm:$0xff]
        %v669 = vld [vmem:[%s667 + $0x8] sm:$0xff]
        %v670 = vld [vmem:[%s1] sm:$0xff]
        %v671 = vld [vmem:[%s1 + $0x8] sm:$0xff]
        %v672 = vld [vmem:[%s1 + $0x10] sm:$0xff]
        %v673 = vld [vmem:[%s1 + $0x18] sm:$0xff]
        %v674 = vld [vmem:[%s1 + $0x20] sm:$0xff]
        %v675 = vld [vmem:[%s1 + $0x28] sm:$0xff]
        %v676 = vld [vmem:[%s1 + $0x30] sm:$0xff]
        %v677 = vld [vmem:[%s1 + $0x38] sm:$0xff]
        %v678 = vld [vmem:[%s1 + $0x40] sm:$0xff]
        %v679 = vld [vmem:[%s1 + $0x48] sm:$0xff]
        %v680 = vld [vmem:[%s1 + $0x50] sm:$0xff]
        %v681 = vld [vmem:[%s1 + $0x58] sm:$0xff]
        %v682 = vld [vmem:[%s1 + $0x60] sm:$0xff]
        %v683 = vld [vmem:[%s1 + $0x68] sm:$0xff]
        %v684 = vld [vmem:[%s1 + $0x70] sm:$0xff]
        %v685 = vld [vmem:[%s1 + $0x78] sm:$0xff]
        %vm686 = vcmask 64512
        %v688 = vsel %vm686, %v670, 0
        %v691 = vsel %vm686, %v671, 0
        %v694 = vsel %vm686, %v672, 0
        %v697 = vsel %vm686, %v673, 0
        %v700 = vsel %vm686, %v674, 0
        %v703 = vsel %vm686, %v675, 0
        %v706 = vsel %vm686, %v676, 0
        %v709 = vsel %vm686, %v677, 0
        %v712 = vsel %vm686, %v678, 0
        %v715 = vsel %vm686, %v679, 0
        %v718 = vsel %vm686, %v680, 0
        %v721 = vsel %vm686, %v681, 0
        %v724 = vsel %vm686, %v682, 0
        %v727 = vsel %vm686, %v683, 0
        %v730 = vsel %vm686, %v684, 0
        %v733 = vsel %vm686, %v685, 0
        %735 = vmatpush.msra.mxu0 0.0
        %736 = vmatpush.msra.mxu0 0.0
        %737 = vmatpush.msra.mxu0 0.0
        %738 = vmatpush.msra.mxu0 0.0
        %739 = vmatpush.msra.mxu0 0.0
        %740 = vmatpush.msra.mxu0 0.0
        %741 = vmatpush.msra.mxu0 0.0
        %742 = vmatpush.msra.mxu0 0.0
        %743 = vmatpush.msra.mxu0 0.0
        %744 = vmatpush.msra.mxu0 0.0
        %745 = vmatpush.msra.mxu0 0.0
        %746 = vmatpush.msra.mxu0 0.0
        %747 = vmatpush.msra.mxu0 0.0
        %748 = vmatpush.msra.mxu0 0.0
        %749 = vmatpush.msra.mxu0 0.0
        %750 = vmatpush.msra.mxu0 %v668
        %751 = vmatmul.f32.gmra.mxu0 %v688
        %v752 = vpop.f32.mrf.mxu0
        %v753 = vadd.f32 0.0, %v752
        %754 = vmatmul.f32.gmra.mxu0 %v691
        %v755 = vpop.f32.mrf.mxu0
        %v756 = vadd.f32 0.0, %v755
        %757 = vmatmul.f32.gmra.mxu0 %v694
        %v758 = vpop.f32.mrf.mxu0
        %v759 = vadd.f32 0.0, %v758
        %760 = vmatmul.f32.gmra.mxu0 %v697
        %v761 = vpop.f32.mrf.mxu0
        %v762 = vadd.f32 0.0, %v761
        %763 = vmatmul.f32.gmra.mxu0 %v700
        %v764 = vpop.f32.mrf.mxu0
        %v765 = vadd.f32 0.0, %v764
        %766 = vmatmul.f32.gmra.mxu0 %v703
        %v767 = vpop.f32.mrf.mxu0
        %v768 = vadd.f32 0.0, %v767
        %769 = vmatmul.f32.gmra.mxu0 %v706
        %v770 = vpop.f32.mrf.mxu0
        %v771 = vadd.f32 0.0, %v770
        %772 = vmatmul.f32.gmra.mxu0 %v709
        %v773 = vpop.f32.mrf.mxu0
        %v774 = vadd.f32 0.0, %v773
        %775 = vmatmul.f32.gmra.mxu0 %v712
        %v776 = vpop.f32.mrf.mxu0
        %v777 = vadd.f32 0.0, %v776
        %778 = vmatmul.f32.gmra.mxu0 %v715
        %v779 = vpop.f32.mrf.mxu0
        %v780 = vadd.f32 0.0, %v779
        %781 = vmatmul.f32.gmra.mxu0 %v718
        %v782 = vpop.f32.mrf.mxu0
        %v783 = vadd.f32 0.0, %v782
        %784 = vmatmul.f32.gmra.mxu0 %v721
        %v785 = vpop.f32.mrf.mxu0
        %v786 = vadd.f32 0.0, %v785
        %787 = vmatmul.f32.gmra.mxu0 %v724
        %v788 = vpop.f32.mrf.mxu0
        %v789 = vadd.f32 0.0, %v788
        %790 = vmatmul.f32.gmra.mxu0 %v727
        %v791 = vpop.f32.mrf.mxu0
        %v792 = vadd.f32 0.0, %v791
        %793 = vmatmul.f32.gmra.mxu0 %v730
        %v794 = vpop.f32.mrf.mxu0
        %v795 = vadd.f32 0.0, %v794
        %796 = vmatmul.f32.gmra.mxu0 %v733
        %v797 = vpop.f32.mrf.mxu0
        %v798 = vadd.f32 0.0, %v797
        %799 = vdwg.mxu0
        %800 = vmatpush.msra.mxu0 0.0
        %801 = vmatpush.msra.mxu0 0.0
        %802 = vmatpush.msra.mxu0 0.0
        %803 = vmatpush.msra.mxu0 0.0
        %804 = vmatpush.msra.mxu0 0.0
        %805 = vmatpush.msra.mxu0 0.0
        %806 = vmatpush.msra.mxu0 0.0
        %807 = vmatpush.msra.mxu0 0.0
        %808 = vmatpush.msra.mxu0 0.0
        %809 = vmatpush.msra.mxu0 0.0
        %810 = vmatpush.msra.mxu0 0.0
        %811 = vmatpush.msra.mxu0 0.0
        %812 = vmatpush.msra.mxu0 0.0
        %813 = vmatpush.msra.mxu0 0.0
        %814 = vmatpush.msra.mxu0 0.0
        %815 = vmatpush.msra.mxu0 %v669
        %816 = vmatmul.f32.gmra.mxu0 %v688
        %v817 = vpop.f32.mrf.mxu0
        %v818 = vadd.f32 0.0, %v817
        %819 = vmatmul.f32.gmra.mxu0 %v691
        %v820 = vpop.f32.mrf.mxu0
        %v821 = vadd.f32 0.0, %v820
        %822 = vmatmul.f32.gmra.mxu0 %v694
        %v823 = vpop.f32.mrf.mxu0
        %v824 = vadd.f32 0.0, %v823
        %825 = vmatmul.f32.gmra.mxu0 %v697
        %v826 = vpop.f32.mrf.mxu0
        %v827 = vadd.f32 0.0, %v826
        %828 = vmatmul.f32.gmra.mxu0 %v700
        %v829 = vpop.f32.mrf.mxu0
        %v830 = vadd.f32 0.0, %v829
        %831 = vmatmul.f32.gmra.mxu0 %v703
        %v832 = vpop.f32.mrf.mxu0
        %v833 = vadd.f32 0.0, %v832
        %834 = vmatmul.f32.gmra.mxu0 %v706
        %v835 = vpop.f32.mrf.mxu0
        %v836 = vadd.f32 0.0, %v835
        %837 = vmatmul.f32.gmra.mxu0 %v709
        %v838 = vpop.f32.mrf.mxu0
        %v839 = vadd.f32 0.0, %v838
        %840 = vmatmul.f32.gmra.mxu0 %v712
        %v841 = vpop.f32.mrf.mxu0
        %v842 = vadd.f32 0.0, %v841
        %843 = vmatmul.f32.gmra.mxu0 %v715
        %v844 = vpop.f32.mrf.mxu0
        %v845 = vadd.f32 0.0, %v844
        %846 = vmatmul.f32.gmra.mxu0 %v718
        %v847 = vpop.f32.mrf.mxu0
        %v848 = vadd.f32 0.0, %v847
        %849 = vmatmul.f32.gmra.mxu0 %v721
        %v850 = vpop.f32.mrf.mxu0
        %v851 = vadd.f32 0.0, %v850
        %852 = vmatmul.f32.gmra.mxu0 %v724
        %v853 = vpop.f32.mrf.mxu0
        %v854 = vadd.f32 0.0, %v853
        %855 = vmatmul.f32.gmra.mxu0 %v727
        %v856 = vpop.f32.mrf.mxu0
        %v857 = vadd.f32 0.0, %v856
        %858 = vmatmul.f32.gmra.mxu0 %v730
        %v859 = vpop.f32.mrf.mxu0
        %v860 = vadd.f32 0.0, %v859
        %861 = vmatmul.f32.gmra.mxu0 %v733
        %v862 = vpop.f32.mrf.mxu0
        %v863 = vadd.f32 0.0, %v862
        %864 = vdwg.mxu0
        %v865 = vld [vmem:[#allocation2] sm:$0xff]
        %v866 = vld [vmem:[#allocation2 + $0x8] sm:$0xff]
        %v867 = vld [vmem:[#allocation2 + $0x10] sm:$0xff]
        %v868 = vld [vmem:[#allocation2 + $0x18] sm:$0xff]
        %v869 = vld [vmem:[#allocation2 + $0x20] sm:$0xff]
        %v870 = vld [vmem:[#allocation2 + $0x28] sm:$0xff]
        %v871 = vld [vmem:[#allocation2 + $0x30] sm:$0xff]
        %v872 = vld [vmem:[#allocation2 + $0x38] sm:$0xff]
        %s873 = scalar_lea.vmem [#allocation2], 256
        %v874 = vld [vmem:[%s873] sm:$0xff]
        %v875 = vld [vmem:[%s873 + $0x8] sm:$0xff]
        %v876 = vld [vmem:[%s873 + $0x10] sm:$0xff]
        %v877 = vld [vmem:[%s873 + $0x18] sm:$0xff]
        %v878 = vld [vmem:[%s873 + $0x20] sm:$0xff]
        %v879 = vld [vmem:[%s873 + $0x28] sm:$0xff]
        %v880 = vld [vmem:[%s873 + $0x30] sm:$0xff]
        %v881 = vld [vmem:[%s873 + $0x38] sm:$0xff]
        %882 = vxpose.xlu0.b32.start [1/16] %v753, 128
        %883 = vxpose.xlu0.b32.cont [2/16] %v756, 128
        %884 = vxpose.xlu0.b32.cont [3/16] %v759, 128
        %885 = vxpose.xlu0.b32.cont [4/16] %v762, 128
        %886 = vxpose.xlu0.b32.cont [5/16] 0.0, 128
        %887 = vxpose.xlu0.b32.cont [6/16] 0.0, 128
        %888 = vxpose.xlu0.b32.cont [7/16] 0.0, 128
        %889 = vxpose.xlu0.b32.cont [8/16] 0.0, 128
        %890 = vxpose.xlu0.b32.cont [9/16] 0.0, 128
        %891 = vxpose.xlu0.b32.cont [10/16] 0.0, 128
        %892 = vxpose.xlu0.b32.cont [11/16] 0.0, 128
        %893 = vxpose.xlu0.b32.cont [12/16] 0.0, 128
        %894 = vxpose.xlu0.b32.cont [13/16] 0.0, 128
        %895 = vxpose.xlu0.b32.cont [14/16] 0.0, 128
        %896 = vxpose.xlu0.b32.cont [15/16] 0.0, 128
        %897 = vxpose.xlu0.b32.end [16/16] 0.0, 128
        %v898 = vpop.trf.xlu0
        %v899 = vpop.trf.xlu0
        %v900 = vpop.trf.xlu0
        %v901 = vpop.trf.xlu0
        %v902 = vpop.trf.xlu0
        %v903 = vpop.trf.xlu0
        %v904 = vpop.trf.xlu0
        %v905 = vpop.trf.xlu0
        %v906 = vpop.trf.xlu0
        %v907 = vpop.trf.xlu0
        %v908 = vpop.trf.xlu0
        %v909 = vpop.trf.xlu0
        %v910 = vpop.trf.xlu0
        %v911 = vpop.trf.xlu0
        %v912 = vpop.trf.xlu0
        %v913 = vpop.trf.xlu0
        %914 = vxpose.xlu0.b32.start [1/16] %v818, 128
        %915 = vxpose.xlu0.b32.cont [2/16] %v821, 128
        %916 = vxpose.xlu0.b32.cont [3/16] %v824, 128
        %917 = vxpose.xlu0.b32.cont [4/16] %v827, 128
        %918 = vxpose.xlu0.b32.cont [5/16] 0.0, 128
        %919 = vxpose.xlu0.b32.cont [6/16] 0.0, 128
        %920 = vxpose.xlu0.b32.cont [7/16] 0.0, 128
        %921 = vxpose.xlu0.b32.cont [8/16] 0.0, 128
        %922 = vxpose.xlu0.b32.cont [9/16] 0.0, 128
        %923 = vxpose.xlu0.b32.cont [10/16] 0.0, 128
        %924 = vxpose.xlu0.b32.cont [11/16] 0.0, 128
        %925 = vxpose.xlu0.b32.cont [12/16] 0.0, 128
        %926 = vxpose.xlu0.b32.cont [13/16] 0.0, 128
        %927 = vxpose.xlu0.b32.cont [14/16] 0.0, 128
        %928 = vxpose.xlu0.b32.cont [15/16] 0.0, 128
        %929 = vxpose.xlu0.b32.end [16/16] 0.0, 128
        %v930 = vpop.trf.xlu0
        %v931 = vpop.trf.xlu0
        %v932 = vpop.trf.xlu0
        %v933 = vpop.trf.xlu0
        %v934 = vpop.trf.xlu0
        %v935 = vpop.trf.xlu0
        %v936 = vpop.trf.xlu0
        %v937 = vpop.trf.xlu0
        %v938 = vpop.trf.xlu0
        %v939 = vpop.trf.xlu0
        %v940 = vpop.trf.xlu0
        %v941 = vpop.trf.xlu0
        %v942 = vpop.trf.xlu0
        %v943 = vpop.trf.xlu0
        %v944 = vpop.trf.xlu0
        %v945 = vpop.trf.xlu0
        %vm946 = vcmask 261120
        %v948 = vsel %vm946, %v898, 0
        %v951 = vsel %vm946, %v899, 0
        %v954 = vsel %vm946, %v900, 0
        %v957 = vsel %vm946, %v901, 0
        %v960 = vsel %vm946, %v902, 0
        %v963 = vsel %vm946, %v903, 0
        %v966 = vsel %vm946, %v904, 0
        %v969 = vsel %vm946, %v905, 0
        %v972 = vsel %vm946, %v906, 0
        %v975 = vsel %vm946, %v907, 0
        %v978 = vsel %vm946, %v908, 0
        %v981 = vsel %vm946, %v909, 0
        %v984 = vsel %vm946, %v910, 0
        %v987 = vsel %vm946, %v911, 0
        %v990 = vsel %vm946, %v912, 0
        %v993 = vsel %vm946, %v913, 0
        %v996 = vsel %vm946, %v930, 0
        %v999 = vsel %vm946, %v931, 0
        %v1002 = vsel %vm946, %v932, 0
        %v1005 = vsel %vm946, %v933, 0
        %v1008 = vsel %vm946, %v934, 0
        %v1011 = vsel %vm946, %v935, 0
        %v1014 = vsel %vm946, %v936, 0
        %v1017 = vsel %vm946, %v937, 0
        %v1020 = vsel %vm946, %v938, 0
        %v1023 = vsel %vm946, %v939, 0
        %v1026 = vsel %vm946, %v940, 0
        %v1029 = vsel %vm946, %v941, 0
        %v1032 = vsel %vm946, %v942, 0
        %v1035 = vsel %vm946, %v943, 0
        %v1038 = vsel %vm946, %v944, 0
        %v1041 = vsel %vm946, %v945, 0
        %1043 = vmatpush.msra.mxu0 0.0
        %1044 = vmatpush.msra.mxu0 0.0
        %1045 = vmatpush.msra.mxu0 0.0
        %1046 = vmatpush.msra.mxu0 0.0
        %1047 = vmatpush.msra.mxu0 0.0
        %1048 = vmatpush.msra.mxu0 0.0
        %1049 = vmatpush.msra.mxu0 0.0
        %1050 = vmatpush.msra.mxu0 0.0
        %1051 = vmatpush.msra.mxu0 0.0
        %1052 = vmatpush.msra.mxu0 0.0
        %1053 = vmatpush.msra.mxu0 0.0
        %1054 = vmatpush.msra.mxu0 0.0
        %1055 = vmatpush.msra.mxu0 %v871
        %1056 = vmatpush.msra.mxu0 %v869
        %1057 = vmatpush.msra.mxu0 %v867
        %1058 = vmatpush.msra.mxu0 %v865
        %1059 = vmatmul.f32.gmra.mxu0 %v948
        %v1060 = vpop.f32.mrf.mxu0
        %v1061 = vadd.f32 0.0, %v1060
        %1062 = vmatmul.f32.gmra.mxu0 %v951
        %v1063 = vpop.f32.mrf.mxu0
        %v1064 = vadd.f32 0.0, %v1063
        %1065 = vmatmul.f32.gmra.mxu0 %v954
        %v1066 = vpop.f32.mrf.mxu0
        %v1067 = vadd.f32 0.0, %v1066
        %1068 = vmatmul.f32.gmra.mxu0 %v957
        %v1069 = vpop.f32.mrf.mxu0
        %v1070 = vadd.f32 0.0, %v1069
        %1071 = vmatmul.f32.gmra.mxu0 %v960
        %v1072 = vpop.f32.mrf.mxu0
        %v1073 = vadd.f32 0.0, %v1072
        %1074 = vmatmul.f32.gmra.mxu0 %v963
        %v1075 = vpop.f32.mrf.mxu0
        %v1076 = vadd.f32 0.0, %v1075
        %1077 = vmatmul.f32.gmra.mxu0 %v966
        %v1078 = vpop.f32.mrf.mxu0
        %v1079 = vadd.f32 0.0, %v1078
        %1080 = vmatmul.f32.gmra.mxu0 %v969
        %v1081 = vpop.f32.mrf.mxu0
        %v1082 = vadd.f32 0.0, %v1081
        %1083 = vmatmul.f32.gmra.mxu0 %v972
        %v1084 = vpop.f32.mrf.mxu0
        %v1085 = vadd.f32 0.0, %v1084
        %1086 = vmatmul.f32.gmra.mxu0 %v975
        %v1087 = vpop.f32.mrf.mxu0
        %v1088 = vadd.f32 0.0, %v1087
        %1089 = vmatmul.f32.gmra.mxu0 %v978
        %v1090 = vpop.f32.mrf.mxu0
        %v1091 = vadd.f32 0.0, %v1090
        %1092 = vmatmul.f32.gmra.mxu0 %v981
        %v1093 = vpop.f32.mrf.mxu0
        %v1094 = vadd.f32 0.0, %v1093
        %1095 = vmatmul.f32.gmra.mxu0 %v984
        %v1096 = vpop.f32.mrf.mxu0
        %v1097 = vadd.f32 0.0, %v1096
        %1098 = vmatmul.f32.gmra.mxu0 %v987
        %v1099 = vpop.f32.mrf.mxu0
        %v1100 = vadd.f32 0.0, %v1099
        %1101 = vmatmul.f32.gmra.mxu0 %v990
        %v1102 = vpop.f32.mrf.mxu0
        %v1103 = vadd.f32 0.0, %v1102
        %1104 = vmatmul.f32.gmra.mxu0 %v993
        %v1105 = vpop.f32.mrf.mxu0
        %v1106 = vadd.f32 0.0, %v1105
        %1107 = vmatmul.f32.gmra.mxu0 %v996
        %v1108 = vpop.f32.mrf.mxu0
        %v1109 = vadd.f32 0.0, %v1108
        %1110 = vmatmul.f32.gmra.mxu0 %v999
        %v1111 = vpop.f32.mrf.mxu0
        %v1112 = vadd.f32 0.0, %v1111
        %1113 = vmatmul.f32.gmra.mxu0 %v1002
        %v1114 = vpop.f32.mrf.mxu0
        %v1115 = vadd.f32 0.0, %v1114
        %1116 = vmatmul.f32.gmra.mxu0 %v1005
        %v1117 = vpop.f32.mrf.mxu0
        %v1118 = vadd.f32 0.0, %v1117
        %1119 = vmatmul.f32.gmra.mxu0 %v1008
        %v1120 = vpop.f32.mrf.mxu0
        %v1121 = vadd.f32 0.0, %v1120
        %1122 = vmatmul.f32.gmra.mxu0 %v1011
        %v1123 = vpop.f32.mrf.mxu0
        %v1124 = vadd.f32 0.0, %v1123
        %1125 = vmatmul.f32.gmra.mxu0 %v1014
        %v1126 = vpop.f32.mrf.mxu0
        %v1127 = vadd.f32 0.0, %v1126
        %1128 = vmatmul.f32.gmra.mxu0 %v1017
        %v1129 = vpop.f32.mrf.mxu0
        %v1130 = vadd.f32 0.0, %v1129
        %1131 = vmatmul.f32.gmra.mxu0 %v1020
        %v1132 = vpop.f32.mrf.mxu0
        %v1133 = vadd.f32 0.0, %v1132
        %1134 = vmatmul.f32.gmra.mxu0 %v1023
        %v1135 = vpop.f32.mrf.mxu0
        %v1136 = vadd.f32 0.0, %v1135
        %1137 = vmatmul.f32.gmra.mxu0 %v1026
        %v1138 = vpop.f32.mrf.mxu0
        %v1139 = vadd.f32 0.0, %v1138
        %1140 = vmatmul.f32.gmra.mxu0 %v1029
        %v1141 = vpop.f32.mrf.mxu0
        %v1142 = vadd.f32 0.0, %v1141
        %1143 = vmatmul.f32.gmra.mxu0 %v1032
        %v1144 = vpop.f32.mrf.mxu0
        %v1145 = vadd.f32 0.0, %v1144
        %1146 = vmatmul.f32.gmra.mxu0 %v1035
        %v1147 = vpop.f32.mrf.mxu0
        %v1148 = vadd.f32 0.0, %v1147
        %1149 = vmatmul.f32.gmra.mxu0 %v1038
        %v1150 = vpop.f32.mrf.mxu0
        %v1151 = vadd.f32 0.0, %v1150
        %1152 = vmatmul.f32.gmra.mxu0 %v1041
        %v1153 = vpop.f32.mrf.mxu0
        %v1154 = vadd.f32 0.0, %v1153
        %1155 = vdwg.mxu0
        %1156 = vmatpush.msra.mxu0 0.0
        %1157 = vmatpush.msra.mxu0 0.0
        %1158 = vmatpush.msra.mxu0 0.0
        %1159 = vmatpush.msra.mxu0 0.0
        %1160 = vmatpush.msra.mxu0 0.0
        %1161 = vmatpush.msra.mxu0 0.0
        %1162 = vmatpush.msra.mxu0 0.0
        %1163 = vmatpush.msra.mxu0 0.0
        %1164 = vmatpush.msra.mxu0 0.0
        %1165 = vmatpush.msra.mxu0 0.0
        %1166 = vmatpush.msra.mxu0 0.0
        %1167 = vmatpush.msra.mxu0 0.0
        %1168 = vmatpush.msra.mxu0 %v872
        %1169 = vmatpush.msra.mxu0 %v870
        %1170 = vmatpush.msra.mxu0 %v868
        %1171 = vmatpush.msra.mxu0 %v866
        %1172 = vmatmul.f32.gmra.mxu0 %v948
        %v1173 = vpop.f32.mrf.mxu0
        %v1174 = vadd.f32 0.0, %v1173
        %1175 = vmatmul.f32.gmra.mxu0 %v951
        %v1176 = vpop.f32.mrf.mxu0
        %v1177 = vadd.f32 0.0, %v1176
        %1178 = vmatmul.f32.gmra.mxu0 %v954
        %v1179 = vpop.f32.mrf.mxu0
        %v1180 = vadd.f32 0.0, %v1179
        %1181 = vmatmul.f32.gmra.mxu0 %v957
        %v1182 = vpop.f32.mrf.mxu0
        %v1183 = vadd.f32 0.0, %v1182
        %1184 = vmatmul.f32.gmra.mxu0 %v960
        %v1185 = vpop.f32.mrf.mxu0
        %v1186 = vadd.f32 0.0, %v1185
        %1187 = vmatmul.f32.gmra.mxu0 %v963
        %v1188 = vpop.f32.mrf.mxu0
        %v1189 = vadd.f32 0.0, %v1188
        %1190 = vmatmul.f32.gmra.mxu0 %v966
        %v1191 = vpop.f32.mrf.mxu0
        %v1192 = vadd.f32 0.0, %v1191
        %1193 = vmatmul.f32.gmra.mxu0 %v969
        %v1194 = vpop.f32.mrf.mxu0
        %v1195 = vadd.f32 0.0, %v1194
        %1196 = vmatmul.f32.gmra.mxu0 %v972
        %v1197 = vpop.f32.mrf.mxu0
        %v1198 = vadd.f32 0.0, %v1197
        %1199 = vmatmul.f32.gmra.mxu0 %v975
        %v1200 = vpop.f32.mrf.mxu0
        %v1201 = vadd.f32 0.0, %v1200
        %1202 = vmatmul.f32.gmra.mxu0 %v978
        %v1203 = vpop.f32.mrf.mxu0
        %v1204 = vadd.f32 0.0, %v1203
        %1205 = vmatmul.f32.gmra.mxu0 %v981
        %v1206 = vpop.f32.mrf.mxu0
        %v1207 = vadd.f32 0.0, %v1206
        %1208 = vmatmul.f32.gmra.mxu0 %v984
        %v1209 = vpop.f32.mrf.mxu0
        %v1210 = vadd.f32 0.0, %v1209
        %1211 = vmatmul.f32.gmra.mxu0 %v987
        %v1212 = vpop.f32.mrf.mxu0
        %v1213 = vadd.f32 0.0, %v1212
        %1214 = vmatmul.f32.gmra.mxu0 %v990
        %v1215 = vpop.f32.mrf.mxu0
        %v1216 = vadd.f32 0.0, %v1215
        %1217 = vmatmul.f32.gmra.mxu0 %v993
        %v1218 = vpop.f32.mrf.mxu0
        %v1219 = vadd.f32 0.0, %v1218
        %1220 = vmatmul.f32.gmra.mxu0 %v996
        %v1221 = vpop.f32.mrf.mxu0
        %v1222 = vadd.f32 0.0, %v1221
        %1223 = vmatmul.f32.gmra.mxu0 %v999
        %v1224 = vpop.f32.mrf.mxu0
        %v1225 = vadd.f32 0.0, %v1224
        %1226 = vmatmul.f32.gmra.mxu0 %v1002
        %v1227 = vpop.f32.mrf.mxu0
        %v1228 = vadd.f32 0.0, %v1227
        %1229 = vmatmul.f32.gmra.mxu0 %v1005
        %v1230 = vpop.f32.mrf.mxu0
        %v1231 = vadd.f32 0.0, %v1230
        %1232 = vmatmul.f32.gmra.mxu0 %v1008
        %v1233 = vpop.f32.mrf.mxu0
        %v1234 = vadd.f32 0.0, %v1233
        %1235 = vmatmul.f32.gmra.mxu0 %v1011
        %v1236 = vpop.f32.mrf.mxu0
        %v1237 = vadd.f32 0.0, %v1236
        %1238 = vmatmul.f32.gmra.mxu0 %v1014
        %v1239 = vpop.f32.mrf.mxu0
        %v1240 = vadd.f32 0.0, %v1239
        %1241 = vmatmul.f32.gmra.mxu0 %v1017
        %v1242 = vpop.f32.mrf.mxu0
        %v1243 = vadd.f32 0.0, %v1242
        %1244 = vmatmul.f32.gmra.mxu0 %v1020
        %v1245 = vpop.f32.mrf.mxu0
        %v1246 = vadd.f32 0.0, %v1245
        %1247 = vmatmul.f32.gmra.mxu0 %v1023
        %v1248 = vpop.f32.mrf.mxu0
        %v1249 = vadd.f32 0.0, %v1248
        %1250 = vmatmul.f32.gmra.mxu0 %v1026
        %v1251 = vpop.f32.mrf.mxu0
        %v1252 = vadd.f32 0.0, %v1251
        %1253 = vmatmul.f32.gmra.mxu0 %v1029
        %v1254 = vpop.f32.mrf.mxu0
        %v1255 = vadd.f32 0.0, %v1254
        %1256 = vmatmul.f32.gmra.mxu0 %v1032
        %v1257 = vpop.f32.mrf.mxu0
        %v1258 = vadd.f32 0.0, %v1257
        %1259 = vmatmul.f32.gmra.mxu0 %v1035
        %v1260 = vpop.f32.mrf.mxu0
        %v1261 = vadd.f32 0.0, %v1260
        %1262 = vmatmul.f32.gmra.mxu0 %v1038
        %v1263 = vpop.f32.mrf.mxu0
        %v1264 = vadd.f32 0.0, %v1263
        %1265 = vmatmul.f32.gmra.mxu0 %v1041
        %v1266 = vpop.f32.mrf.mxu0
        %v1267 = vadd.f32 0.0, %v1266
        %1268 = vdwg.mxu0
        %v1269 = vmax.f32 %v1061, %v1174
        %1270 = vmax.xlane.f32.xlu0 %v1269
        %v1271 = vpop.xlane.xlu0 %1270
        %v1272 = vmax.f32 %v1064, %v1177
        %1273 = vmax.xlane.f32.xlu0 %v1272
        %v1274 = vpop.xlane.xlu0 %1273
        %v1275 = vmax.f32 %v1067, %v1180
        %1276 = vmax.xlane.f32.xlu0 %v1275
        %v1277 = vpop.xlane.xlu0 %1276
        %v1278 = vmax.f32 %v1070, %v1183
        %1279 = vmax.xlane.f32.xlu0 %v1278
        %v1280 = vpop.xlane.xlu0 %1279
        %v1281 = vmax.f32 %v1073, %v1186
        %1282 = vmax.xlane.f32.xlu0 %v1281
        %v1283 = vpop.xlane.xlu0 %1282
        %v1284 = vmax.f32 %v1076, %v1189
        %1285 = vmax.xlane.f32.xlu0 %v1284
        %v1286 = vpop.xlane.xlu0 %1285
        %v1287 = vmax.f32 %v1079, %v1192
        %1288 = vmax.xlane.f32.xlu0 %v1287
        %v1289 = vpop.xlane.xlu0 %1288
        %v1290 = vmax.f32 %v1082, %v1195
        %1291 = vmax.xlane.f32.xlu0 %v1290
        %v1292 = vpop.xlane.xlu0 %1291
        %v1293 = vmax.f32 %v1085, %v1198
        %1294 = vmax.xlane.f32.xlu0 %v1293
        %v1295 = vpop.xlane.xlu0 %1294
        %v1296 = vmax.f32 %v1088, %v1201
        %1297 = vmax.xlane.f32.xlu0 %v1296
        %v1298 = vpop.xlane.xlu0 %1297
        %v1299 = vmax.f32 %v1091, %v1204
        %1300 = vmax.xlane.f32.xlu0 %v1299
        %v1301 = vpop.xlane.xlu0 %1300
        %v1302 = vmax.f32 %v1094, %v1207
        %1303 = vmax.xlane.f32.xlu0 %v1302
        %v1304 = vpop.xlane.xlu0 %1303
        %v1305 = vmax.f32 %v1097, %v1210
        %1306 = vmax.xlane.f32.xlu0 %v1305
        %v1307 = vpop.xlane.xlu0 %1306
        %v1308 = vmax.f32 %v1100, %v1213
        %1309 = vmax.xlane.f32.xlu0 %v1308
        %v1310 = vpop.xlane.xlu0 %1309
        %v1311 = vmax.f32 %v1103, %v1216
        %1312 = vmax.xlane.f32.xlu0 %v1311
        %v1313 = vpop.xlane.xlu0 %1312
        %v1314 = vmax.f32 %v1106, %v1219
        %1315 = vmax.xlane.f32.xlu0 %v1314
        %v1316 = vpop.xlane.xlu0 %1315
        %v1317 = vmax.f32 %v1109, %v1222
        %1318 = vmax.xlane.f32.xlu0 %v1317
        %v1319 = vpop.xlane.xlu0 %1318
        %v1320 = vmax.f32 %v1112, %v1225
        %1321 = vmax.xlane.f32.xlu0 %v1320
        %v1322 = vpop.xlane.xlu0 %1321
        %v1323 = vmax.f32 %v1115, %v1228
        %1324 = vmax.xlane.f32.xlu0 %v1323
        %v1325 = vpop.xlane.xlu0 %1324
        %v1326 = vmax.f32 %v1118, %v1231
        %1327 = vmax.xlane.f32.xlu0 %v1326
        %v1328 = vpop.xlane.xlu0 %1327
        %v1329 = vmax.f32 %v1121, %v1234
        %1330 = vmax.xlane.f32.xlu0 %v1329
        %v1331 = vpop.xlane.xlu0 %1330
        %v1332 = vmax.f32 %v1124, %v1237
        %1333 = vmax.xlane.f32.xlu0 %v1332
        %v1334 = vpop.xlane.xlu0 %1333
        %v1335 = vmax.f32 %v1127, %v1240
        %1336 = vmax.xlane.f32.xlu0 %v1335
        %v1337 = vpop.xlane.xlu0 %1336
        %v1338 = vmax.f32 %v1130, %v1243
        %1339 = vmax.xlane.f32.xlu0 %v1338
        %v1340 = vpop.xlane.xlu0 %1339
        %v1341 = vmax.f32 %v1133, %v1246
        %1342 = vmax.xlane.f32.xlu0 %v1341
        %v1343 = vpop.xlane.xlu0 %1342
        %v1344 = vmax.f32 %v1136, %v1249
        %1345 = vmax.xlane.f32.xlu0 %v1344
        %v1346 = vpop.xlane.xlu0 %1345
        %v1347 = vmax.f32 %v1139, %v1252
        %1348 = vmax.xlane.f32.xlu0 %v1347
        %v1349 = vpop.xlane.xlu0 %1348
        %v1350 = vmax.f32 %v1142, %v1255
        %1351 = vmax.xlane.f32.xlu0 %v1350
        %v1352 = vpop.xlane.xlu0 %1351
        %v1353 = vmax.f32 %v1145, %v1258
        %1354 = vmax.xlane.f32.xlu0 %v1353
        %v1355 = vpop.xlane.xlu0 %1354
        %v1356 = vmax.f32 %v1148, %v1261
        %1357 = vmax.xlane.f32.xlu0 %v1356
        %v1358 = vpop.xlane.xlu0 %1357
        %v1359 = vmax.f32 %v1151, %v1264
        %1360 = vmax.xlane.f32.xlu0 %v1359
        %v1361 = vpop.xlane.xlu0 %1360
        %v1362 = vmax.f32 %v1154, %v1267
        %1363 = vmax.xlane.f32.xlu0 %v1362
        %v1364 = vpop.xlane.xlu0 %1363
        %v1365 = vsub.f32 %v1061, %v1271
        %v1366 = vsub.f32 %v1174, %v1271
        %v1367 = vsub.f32 %v1064, %v1274
        %v1368 = vsub.f32 %v1177, %v1274
        %v1369 = vsub.f32 %v1067, %v1277
        %v1370 = vsub.f32 %v1180, %v1277
        %v1371 = vsub.f32 %v1070, %v1280
        %v1372 = vsub.f32 %v1183, %v1280
        %v1373 = vsub.f32 %v1073, %v1283
        %v1374 = vsub.f32 %v1186, %v1283
        %v1375 = vsub.f32 %v1076, %v1286
        %v1376 = vsub.f32 %v1189, %v1286
        %v1377 = vsub.f32 %v1079, %v1289
        %v1378 = vsub.f32 %v1192, %v1289
        %v1379 = vsub.f32 %v1082, %v1292
        %v1380 = vsub.f32 %v1195, %v1292
        %v1381 = vsub.f32 %v1085, %v1295
        %v1382 = vsub.f32 %v1198, %v1295
        %v1383 = vsub.f32 %v1088, %v1298
        %v1384 = vsub.f32 %v1201, %v1298
        %v1385 = vsub.f32 %v1091, %v1301
        %v1386 = vsub.f32 %v1204, %v1301
        %v1387 = vsub.f32 %v1094, %v1304
        %v1388 = vsub.f32 %v1207, %v1304
        %v1389 = vsub.f32 %v1097, %v1307
        %v1390 = vsub.f32 %v1210, %v1307
        %v1391 = vsub.f32 %v1100, %v1310
        %v1392 = vsub.f32 %v1213, %v1310
        %v1393 = vsub.f32 %v1103, %v1313
        %v1394 = vsub.f32 %v1216, %v1313
        %v1395 = vsub.f32 %v1106, %v1316
        %v1396 = vsub.f32 %v1219, %v1316
        %v1397 = vsub.f32 %v1109, %v1319
        %v1398 = vsub.f32 %v1222, %v1319
        %v1399 = vsub.f32 %v1112, %v1322
        %v1400 = vsub.f32 %v1225, %v1322
        %v1401 = vsub.f32 %v1115, %v1325
        %v1402 = vsub.f32 %v1228, %v1325
        %v1403 = vsub.f32 %v1118, %v1328
        %v1404 = vsub.f32 %v1231, %v1328
        %v1405 = vsub.f32 %v1121, %v1331
        %v1406 = vsub.f32 %v1234, %v1331
        %v1407 = vsub.f32 %v1124, %v1334
        %v1408 = vsub.f32 %v1237, %v1334
        %v1409 = vsub.f32 %v1127, %v1337
        %v1410 = vsub.f32 %v1240, %v1337
        %v1411 = vsub.f32 %v1130, %v1340
        %v1412 = vsub.f32 %v1243, %v1340
        %v1413 = vsub.f32 %v1133, %v1343
        %v1414 = vsub.f32 %v1246, %v1343
        %v1415 = vsub.f32 %v1136, %v1346
        %v1416 = vsub.f32 %v1249, %v1346
        %v1417 = vsub.f32 %v1139, %v1349
        %v1418 = vsub.f32 %v1252, %v1349
        %v1419 = vsub.f32 %v1142, %v1352
        %v1420 = vsub.f32 %v1255, %v1352
        %v1421 = vsub.f32 %v1145, %v1355
        %v1422 = vsub.f32 %v1258, %v1355
        %v1423 = vsub.f32 %v1148, %v1358
        %v1424 = vsub.f32 %v1261, %v1358
        %v1425 = vsub.f32 %v1151, %v1361
        %v1426 = vsub.f32 %v1264, %v1361
        %v1427 = vsub.f32 %v1154, %v1364
        %v1428 = vsub.f32 %v1267, %v1364
        %v1429 = vmul.f32 %v1365, 1.442695
        %v1430 = vpow.pop %v1429
        %v1431 = vmul.f32 %v1366, 1.442695
        %v1432 = vpow.pop %v1431
        %v1433 = vmul.f32 %v1367, 1.442695
        %v1434 = vpow.pop %v1433
        %v1435 = vmul.f32 %v1368, 1.442695
        %v1436 = vpow.pop %v1435
        %v1437 = vmul.f32 %v1369, 1.442695
        %v1438 = vpow.pop %v1437
        %v1439 = vmul.f32 %v1370, 1.442695
        %v1440 = vpow.pop %v1439
        %v1441 = vmul.f32 %v1371, 1.442695
        %v1442 = vpow.pop %v1441
        %v1443 = vmul.f32 %v1372, 1.442695
        %v1444 = vpow.pop %v1443
        %v1445 = vmul.f32 %v1373, 1.442695
        %v1446 = vpow.pop %v1445
        %v1447 = vmul.f32 %v1374, 1.442695
        %v1448 = vpow.pop %v1447
        %v1449 = vmul.f32 %v1375, 1.442695
        %v1450 = vpow.pop %v1449
        %v1451 = vmul.f32 %v1376, 1.442695
        %v1452 = vpow.pop %v1451
        %v1453 = vmul.f32 %v1377, 1.442695
        %v1454 = vpow.pop %v1453
        %v1455 = vmul.f32 %v1378, 1.442695
        %v1456 = vpow.pop %v1455
        %v1457 = vmul.f32 %v1379, 1.442695
        %v1458 = vpow.pop %v1457
        %v1459 = vmul.f32 %v1380, 1.442695
        %v1460 = vpow.pop %v1459
        %v1461 = vmul.f32 %v1381, 1.442695
        %v1462 = vpow.pop %v1461
        %v1463 = vmul.f32 %v1382, 1.442695
        %v1464 = vpow.pop %v1463
        %v1465 = vmul.f32 %v1383, 1.442695
        %v1466 = vpow.pop %v1465
        %v1467 = vmul.f32 %v1384, 1.442695
        %v1468 = vpow.pop %v1467
        %v1469 = vmul.f32 %v1385, 1.442695
        %v1470 = vpow.pop %v1469
        %v1471 = vmul.f32 %v1386, 1.442695
        %v1472 = vpow.pop %v1471
        %v1473 = vmul.f32 %v1387, 1.442695
        %v1474 = vpow.pop %v1473
        %v1475 = vmul.f32 %v1388, 1.442695
        %v1476 = vpow.pop %v1475
        %v1477 = vmul.f32 %v1389, 1.442695
        %v1478 = vpow.pop %v1477
        %v1479 = vmul.f32 %v1390, 1.442695
        %v1480 = vpow.pop %v1479
        %v1481 = vmul.f32 %v1391, 1.442695
        %v1482 = vpow.pop %v1481
        %v1483 = vmul.f32 %v1392, 1.442695
        %v1484 = vpow.pop %v1483
        %v1485 = vmul.f32 %v1393, 1.442695
        %v1486 = vpow.pop %v1485
        %v1487 = vmul.f32 %v1394, 1.442695
        %v1488 = vpow.pop %v1487
        %v1489 = vmul.f32 %v1395, 1.442695
        %v1490 = vpow.pop %v1489
        %v1491 = vmul.f32 %v1396, 1.442695
        %v1492 = vpow.pop %v1491
        %v1493 = vmul.f32 %v1397, 1.442695
        %v1494 = vpow.pop %v1493
        %v1495 = vmul.f32 %v1398, 1.442695
        %v1496 = vpow.pop %v1495
        %v1497 = vmul.f32 %v1399, 1.442695
        %v1498 = vpow.pop %v1497
        %v1499 = vmul.f32 %v1400, 1.442695
        %v1500 = vpow.pop %v1499
        %v1501 = vmul.f32 %v1401, 1.442695
        %v1502 = vpow.pop %v1501
        %v1503 = vmul.f32 %v1402, 1.442695
        %v1504 = vpow.pop %v1503
        %v1505 = vmul.f32 %v1403, 1.442695
        %v1506 = vpow.pop %v1505
        %v1507 = vmul.f32 %v1404, 1.442695
        %v1508 = vpow.pop %v1507
        %v1509 = vmul.f32 %v1405, 1.442695
        %v1510 = vpow.pop %v1509
        %v1511 = vmul.f32 %v1406, 1.442695
        %v1512 = vpow.pop %v1511
        %v1513 = vmul.f32 %v1407, 1.442695
        %v1514 = vpow.pop %v1513
        %v1515 = vmul.f32 %v1408, 1.442695
        %v1516 = vpow.pop %v1515
        %v1517 = vmul.f32 %v1409, 1.442695
        %v1518 = vpow.pop %v1517
        %v1519 = vmul.f32 %v1410, 1.442695
        %v1520 = vpow.pop %v1519
        %v1521 = vmul.f32 %v1411, 1.442695
        %v1522 = vpow.pop %v1521
        %v1523 = vmul.f32 %v1412, 1.442695
        %v1524 = vpow.pop %v1523
        %v1525 = vmul.f32 %v1413, 1.442695
        %v1526 = vpow.pop %v1525
        %v1527 = vmul.f32 %v1414, 1.442695
        %v1528 = vpow.pop %v1527
        %v1529 = vmul.f32 %v1415, 1.442695
        %v1530 = vpow.pop %v1529
        %v1531 = vmul.f32 %v1416, 1.442695
        %v1532 = vpow.pop %v1531
        %v1533 = vmul.f32 %v1417, 1.442695
        %v1534 = vpow.pop %v1533
        %v1535 = vmul.f32 %v1418, 1.442695
        %v1536 = vpow.pop %v1535
        %v1537 = vmul.f32 %v1419, 1.442695
        %v1538 = vpow.pop %v1537
        %v1539 = vmul.f32 %v1420, 1.442695
        %v1540 = vpow.pop %v1539
        %v1541 = vmul.f32 %v1421, 1.442695
        %v1542 = vpow.pop %v1541
        %v1543 = vmul.f32 %v1422, 1.442695
        %v1544 = vpow.pop %v1543
        %v1545 = vmul.f32 %v1423, 1.442695
        %v1546 = vpow.pop %v1545
        %v1547 = vmul.f32 %v1424, 1.442695
        %v1548 = vpow.pop %v1547
        %v1549 = vmul.f32 %v1425, 1.442695
        %v1550 = vpow.pop %v1549
        %v1551 = vmul.f32 %v1426, 1.442695
        %v1552 = vpow.pop %v1551
        %v1553 = vmul.f32 %v1427, 1.442695
        %v1554 = vpow.pop %v1553
        %v1555 = vmul.f32 %v1428, 1.442695
        %v1556 = vpow.pop %v1555
        %v1557 = vadd.f32 %v1430, %v1432
        %1558 = vadd.xlane.f32.xlu0 %v1557
        %v1559 = vpop.xlane.xlu0 %1558
        %v1560 = vadd.f32 %v1434, %v1436
        %1561 = vadd.xlane.f32.xlu0 %v1560
        %v1562 = vpop.xlane.xlu0 %1561
        %v1563 = vadd.f32 %v1438, %v1440
        %1564 = vadd.xlane.f32.xlu0 %v1563
        %v1565 = vpop.xlane.xlu0 %1564
        %v1566 = vadd.f32 %v1442, %v1444
        %1567 = vadd.xlane.f32.xlu0 %v1566
        %v1568 = vpop.xlane.xlu0 %1567
        %v1569 = vadd.f32 %v1446, %v1448
        %1570 = vadd.xlane.f32.xlu0 %v1569
        %v1571 = vpop.xlane.xlu0 %1570
        %v1572 = vadd.f32 %v1450, %v1452
        %1573 = vadd.xlane.f32.xlu0 %v1572
        %v1574 = vpop.xlane.xlu0 %1573
        %v1575 = vadd.f32 %v1454, %v1456
        %1576 = vadd.xlane.f32.xlu0 %v1575
        %v1577 = vpop.xlane.xlu0 %1576
        %v1578 = vadd.f32 %v1458, %v1460
        %1579 = vadd.xlane.f32.xlu0 %v1578
        %v1580 = vpop.xlane.xlu0 %1579
        %v1581 = vadd.f32 %v1462, %v1464
        %1582 = vadd.xlane.f32.xlu0 %v1581
        %v1583 = vpop.xlane.xlu0 %1582
        %v1584 = vadd.f32 %v1466, %v1468
        %1585 = vadd.xlane.f32.xlu0 %v1584
        %v1586 = vpop.xlane.xlu0 %1585
        %v1587 = vadd.f32 %v1470, %v1472
        %1588 = vadd.xlane.f32.xlu0 %v1587
        %v1589 = vpop.xlane.xlu0 %1588
        %v1590 = vadd.f32 %v1474, %v1476
        %1591 = vadd.xlane.f32.xlu0 %v1590
        %v1592 = vpop.xlane.xlu0 %1591
        %v1593 = vadd.f32 %v1478, %v1480
        %1594 = vadd.xlane.f32.xlu0 %v1593
        %v1595 = vpop.xlane.xlu0 %1594
        %v1596 = vadd.f32 %v1482, %v1484
        %1597 = vadd.xlane.f32.xlu0 %v1596
        %v1598 = vpop.xlane.xlu0 %1597
        %v1599 = vadd.f32 %v1486, %v1488
        %1600 = vadd.xlane.f32.xlu0 %v1599
        %v1601 = vpop.xlane.xlu0 %1600
        %v1602 = vadd.f32 %v1490, %v1492
        %1603 = vadd.xlane.f32.xlu0 %v1602
        %v1604 = vpop.xlane.xlu0 %1603
        %v1605 = vadd.f32 %v1494, %v1496
        %1606 = vadd.xlane.f32.xlu0 %v1605
        %v1607 = vpop.xlane.xlu0 %1606
        %v1608 = vadd.f32 %v1498, %v1500
        %1609 = vadd.xlane.f32.xlu0 %v1608
        %v1610 = vpop.xlane.xlu0 %1609
        %v1611 = vadd.f32 %v1502, %v1504
        %1612 = vadd.xlane.f32.xlu0 %v1611
        %v1613 = vpop.xlane.xlu0 %1612
        %v1614 = vadd.f32 %v1506, %v1508
        %1615 = vadd.xlane.f32.xlu0 %v1614
        %v1616 = vpop.xlane.xlu0 %1615
        %v1617 = vadd.f32 %v1510, %v1512
        %1618 = vadd.xlane.f32.xlu0 %v1617
        %v1619 = vpop.xlane.xlu0 %1618
        %v1620 = vadd.f32 %v1514, %v1516
        %1621 = vadd.xlane.f32.xlu0 %v1620
        %v1622 = vpop.xlane.xlu0 %1621
        %v1623 = vadd.f32 %v1518, %v1520
        %1624 = vadd.xlane.f32.xlu0 %v1623
        %v1625 = vpop.xlane.xlu0 %1624
        %v1626 = vadd.f32 %v1522, %v1524
        %1627 = vadd.xlane.f32.xlu0 %v1626
        %v1628 = vpop.xlane.xlu0 %1627
        %v1629 = vadd.f32 %v1526, %v1528
        %1630 = vadd.xlane.f32.xlu0 %v1629
        %v1631 = vpop.xlane.xlu0 %1630
        %v1632 = vadd.f32 %v1530, %v1532
        %1633 = vadd.xlane.f32.xlu0 %v1632
        %v1634 = vpop.xlane.xlu0 %1633
        %v1635 = vadd.f32 %v1534, %v1536
        %1636 = vadd.xlane.f32.xlu0 %v1635
        %v1637 = vpop.xlane.xlu0 %1636
        %v1638 = vadd.f32 %v1538, %v1540
        %1639 = vadd.xlane.f32.xlu0 %v1638
        %v1640 = vpop.xlane.xlu0 %1639
        %v1641 = vadd.f32 %v1542, %v1544
        %1642 = vadd.xlane.f32.xlu0 %v1641
        %v1643 = vpop.xlane.xlu0 %1642
        %v1644 = vadd.f32 %v1546, %v1548
        %1645 = vadd.xlane.f32.xlu0 %v1644
        %v1646 = vpop.xlane.xlu0 %1645
        %v1647 = vadd.f32 %v1550, %v1552
        %1648 = vadd.xlane.f32.xlu0 %v1647
        %v1649 = vpop.xlane.xlu0 %1648
        %v1650 = vadd.f32 %v1554, %v1556
        %1651 = vadd.xlane.f32.xlu0 %v1650
        %v1652 = vpop.xlane.xlu0 %1651
        %v1653 = vrcp.pop %v1559
        %v1654 = vmul.f32 %v1559, %v1653
        %v1655 = vsub.f32 1.0, %v1654
        %v1656 = vmul.f32 %v1653, %v1655
        %v1657 = vadd.f32 %v1653, %v1656
        %vm1658 = vweird.f32 %v1559
        %vm1659 = vweird.f32 %v1653
        %vm1660 = vmor %vm1658, %vm1659
        %v1661 = vsel %vm1660, %v1653, %v1657
        %v1662 = vand.u32 2147483647, %v1559
        %vm1663 = vcmp.eq.f32.partialorder %v1662, 8.507059e+37
        %v1664 = vand.u32 %v1559, 2147483648
        %v1665 = vor.u32 1.1754944e-38, %v1664
        %v1666 = vsel %vm1663, %v1665, %v1661
        %v1667 = vrcp.pop %v1562
        %v1668 = vmul.f32 %v1562, %v1667
        %v1669 = vsub.f32 1.0, %v1668
        %v1670 = vmul.f32 %v1667, %v1669
        %v1671 = vadd.f32 %v1667, %v1670
        %vm1672 = vweird.f32 %v1562
        %vm1673 = vweird.f32 %v1667
        %vm1674 = vmor %vm1672, %vm1673
        %v1675 = vsel %vm1674, %v1667, %v1671
        %v1676 = vand.u32 2147483647, %v1562
        %vm1677 = vcmp.eq.f32.partialorder %v1676, 8.507059e+37
        %v1678 = vand.u32 %v1562, 2147483648
        %v1679 = vor.u32 1.1754944e-38, %v1678
        %v1680 = vsel %vm1677, %v1679, %v1675
        %v1681 = vrcp.pop %v1565
        %v1682 = vmul.f32 %v1565, %v1681
        %v1683 = vsub.f32 1.0, %v1682
        %v1684 = vmul.f32 %v1681, %v1683
        %v1685 = vadd.f32 %v1681, %v1684
        %vm1686 = vweird.f32 %v1565
        %vm1687 = vweird.f32 %v1681
        %vm1688 = vmor %vm1686, %vm1687
        %v1689 = vsel %vm1688, %v1681, %v1685
        %v1690 = vand.u32 2147483647, %v1565
        %vm1691 = vcmp.eq.f32.partialorder %v1690, 8.507059e+37
        %v1692 = vand.u32 %v1565, 2147483648
        %v1693 = vor.u32 1.1754944e-38, %v1692
        %v1694 = vsel %vm1691, %v1693, %v1689
        %v1695 = vrcp.pop %v1568
        %v1696 = vmul.f32 %v1568, %v1695
        %v1697 = vsub.f32 1.0, %v1696
        %v1698 = vmul.f32 %v1695, %v1697
        %v1699 = vadd.f32 %v1695, %v1698
        %vm1700 = vweird.f32 %v1568
        %vm1701 = vweird.f32 %v1695
        %vm1702 = vmor %vm1700, %vm1701
        %v1703 = vsel %vm1702, %v1695, %v1699
        %v1704 = vand.u32 2147483647, %v1568
        %vm1705 = vcmp.eq.f32.partialorder %v1704, 8.507059e+37
        %v1706 = vand.u32 %v1568, 2147483648
        %v1707 = vor.u32 1.1754944e-38, %v1706
        %v1708 = vsel %vm1705, %v1707, %v1703
        %v1709 = vrcp.pop %v1571
        %v1710 = vmul.f32 %v1571, %v1709
        %v1711 = vsub.f32 1.0, %v1710
        %v1712 = vmul.f32 %v1709, %v1711
        %v1713 = vadd.f32 %v1709, %v1712
        %vm1714 = vweird.f32 %v1571
        %vm1715 = vweird.f32 %v1709
        %vm1716 = vmor %vm1714, %vm1715
        %v1717 = vsel %vm1716, %v1709, %v1713
        %v1718 = vand.u32 2147483647, %v1571
        %vm1719 = vcmp.eq.f32.partialorder %v1718, 8.507059e+37
        %v1720 = vand.u32 %v1571, 2147483648
        %v1721 = vor.u32 1.1754944e-38, %v1720
        %v1722 = vsel %vm1719, %v1721, %v1717
        %v1723 = vrcp.pop %v1574
        %v1724 = vmul.f32 %v1574, %v1723
        %v1725 = vsub.f32 1.0, %v1724
        %v1726 = vmul.f32 %v1723, %v1725
        %v1727 = vadd.f32 %v1723, %v1726
        %vm1728 = vweird.f32 %v1574
        %vm1729 = vweird.f32 %v1723
        %vm1730 = vmor %vm1728, %vm1729
        %v1731 = vsel %vm1730, %v1723, %v1727
        %v1732 = vand.u32 2147483647, %v1574
        %vm1733 = vcmp.eq.f32.partialorder %v1732, 8.507059e+37
        %v1734 = vand.u32 %v1574, 2147483648
        %v1735 = vor.u32 1.1754944e-38, %v1734
        %v1736 = vsel %vm1733, %v1735, %v1731
        %v1737 = vrcp.pop %v1577
        %v1738 = vmul.f32 %v1577, %v1737
        %v1739 = vsub.f32 1.0, %v1738
        %v1740 = vmul.f32 %v1737, %v1739
        %v1741 = vadd.f32 %v1737, %v1740
        %vm1742 = vweird.f32 %v1577
        %vm1743 = vweird.f32 %v1737
        %vm1744 = vmor %vm1742, %vm1743
        %v1745 = vsel %vm1744, %v1737, %v1741
        %v1746 = vand.u32 2147483647, %v1577
        %vm1747 = vcmp.eq.f32.partialorder %v1746, 8.507059e+37
        %v1748 = vand.u32 %v1577, 2147483648
        %v1749 = vor.u32 1.1754944e-38, %v1748
        %v1750 = vsel %vm1747, %v1749, %v1745
        %v1751 = vrcp.pop %v1580
        %v1752 = vmul.f32 %v1580, %v1751
        %v1753 = vsub.f32 1.0, %v1752
        %v1754 = vmul.f32 %v1751, %v1753
        %v1755 = vadd.f32 %v1751, %v1754
        %vm1756 = vweird.f32 %v1580
        %vm1757 = vweird.f32 %v1751
        %vm1758 = vmor %vm1756, %vm1757
        %v1759 = vsel %vm1758, %v1751, %v1755
        %v1760 = vand.u32 2147483647, %v1580
        %vm1761 = vcmp.eq.f32.partialorder %v1760, 8.507059e+37
        %v1762 = vand.u32 %v1580, 2147483648
        %v1763 = vor.u32 1.1754944e-38, %v1762
        %v1764 = vsel %vm1761, %v1763, %v1759
        %v1765 = vrcp.pop %v1583
        %v1766 = vmul.f32 %v1583, %v1765
        %v1767 = vsub.f32 1.0, %v1766
        %v1768 = vmul.f32 %v1765, %v1767
        %v1769 = vadd.f32 %v1765, %v1768
        %vm1770 = vweird.f32 %v1583
        %vm1771 = vweird.f32 %v1765
        %vm1772 = vmor %vm1770, %vm1771
        %v1773 = vsel %vm1772, %v1765, %v1769
        %v1774 = vand.u32 2147483647, %v1583
        %vm1775 = vcmp.eq.f32.partialorder %v1774, 8.507059e+37
        %v1776 = vand.u32 %v1583, 2147483648
        %v1777 = vor.u32 1.1754944e-38, %v1776
        %v1778 = vsel %vm1775, %v1777, %v1773
        %v1779 = vrcp.pop %v1586
        %v1780 = vmul.f32 %v1586, %v1779
        %v1781 = vsub.f32 1.0, %v1780
        %v1782 = vmul.f32 %v1779, %v1781
        %v1783 = vadd.f32 %v1779, %v1782
        %vm1784 = vweird.f32 %v1586
        %vm1785 = vweird.f32 %v1779
        %vm1786 = vmor %vm1784, %vm1785
        %v1787 = vsel %vm1786, %v1779, %v1783
        %v1788 = vand.u32 2147483647, %v1586
        %vm1789 = vcmp.eq.f32.partialorder %v1788, 8.507059e+37
        %v1790 = vand.u32 %v1586, 2147483648
        %v1791 = vor.u32 1.1754944e-38, %v1790
        %v1792 = vsel %vm1789, %v1791, %v1787
        %v1793 = vrcp.pop %v1589
        %v1794 = vmul.f32 %v1589, %v1793
        %v1795 = vsub.f32 1.0, %v1794
        %v1796 = vmul.f32 %v1793, %v1795
        %v1797 = vadd.f32 %v1793, %v1796
        %vm1798 = vweird.f32 %v1589
        %vm1799 = vweird.f32 %v1793
        %vm1800 = vmor %vm1798, %vm1799
        %v1801 = vsel %vm1800, %v1793, %v1797
        %v1802 = vand.u32 2147483647, %v1589
        %vm1803 = vcmp.eq.f32.partialorder %v1802, 8.507059e+37
        %v1804 = vand.u32 %v1589, 2147483648
        %v1805 = vor.u32 1.1754944e-38, %v1804
        %v1806 = vsel %vm1803, %v1805, %v1801
        %v1807 = vrcp.pop %v1592
        %v1808 = vmul.f32 %v1592, %v1807
        %v1809 = vsub.f32 1.0, %v1808
        %v1810 = vmul.f32 %v1807, %v1809
        %v1811 = vadd.f32 %v1807, %v1810
        %vm1812 = vweird.f32 %v1592
        %vm1813 = vweird.f32 %v1807
        %vm1814 = vmor %vm1812, %vm1813
        %v1815 = vsel %vm1814, %v1807, %v1811
        %v1816 = vand.u32 2147483647, %v1592
        %vm1817 = vcmp.eq.f32.partialorder %v1816, 8.507059e+37
        %v1818 = vand.u32 %v1592, 2147483648
        %v1819 = vor.u32 1.1754944e-38, %v1818
        %v1820 = vsel %vm1817, %v1819, %v1815
        %v1821 = vrcp.pop %v1595
        %v1822 = vmul.f32 %v1595, %v1821
        %v1823 = vsub.f32 1.0, %v1822
        %v1824 = vmul.f32 %v1821, %v1823
        %v1825 = vadd.f32 %v1821, %v1824
        %vm1826 = vweird.f32 %v1595
        %vm1827 = vweird.f32 %v1821
        %vm1828 = vmor %vm1826, %vm1827
        %v1829 = vsel %vm1828, %v1821, %v1825
        %v1830 = vand.u32 2147483647, %v1595
        %vm1831 = vcmp.eq.f32.partialorder %v1830, 8.507059e+37
        %v1832 = vand.u32 %v1595, 2147483648
        %v1833 = vor.u32 1.1754944e-38, %v1832
        %v1834 = vsel %vm1831, %v1833, %v1829
        %v1835 = vrcp.pop %v1598
        %v1836 = vmul.f32 %v1598, %v1835
        %v1837 = vsub.f32 1.0, %v1836
        %v1838 = vmul.f32 %v1835, %v1837
        %v1839 = vadd.f32 %v1835, %v1838
        %vm1840 = vweird.f32 %v1598
        %vm1841 = vweird.f32 %v1835
        %vm1842 = vmor %vm1840, %vm1841
        %v1843 = vsel %vm1842, %v1835, %v1839
        %v1844 = vand.u32 2147483647, %v1598
        %vm1845 = vcmp.eq.f32.partialorder %v1844, 8.507059e+37
        %v1846 = vand.u32 %v1598, 2147483648
        %v1847 = vor.u32 1.1754944e-38, %v1846
        %v1848 = vsel %vm1845, %v1847, %v1843
        %v1849 = vrcp.pop %v1601
        %v1850 = vmul.f32 %v1601, %v1849
        %v1851 = vsub.f32 1.0, %v1850
        %v1852 = vmul.f32 %v1849, %v1851
        %v1853 = vadd.f32 %v1849, %v1852
        %vm1854 = vweird.f32 %v1601
        %vm1855 = vweird.f32 %v1849
        %vm1856 = vmor %vm1854, %vm1855
        %v1857 = vsel %vm1856, %v1849, %v1853
        %v1858 = vand.u32 2147483647, %v1601
        %vm1859 = vcmp.eq.f32.partialorder %v1858, 8.507059e+37
        %v1860 = vand.u32 %v1601, 2147483648
        %v1861 = vor.u32 1.1754944e-38, %v1860
        %v1862 = vsel %vm1859, %v1861, %v1857
        %v1863 = vrcp.pop %v1604
        %v1864 = vmul.f32 %v1604, %v1863
        %v1865 = vsub.f32 1.0, %v1864
        %v1866 = vmul.f32 %v1863, %v1865
        %v1867 = vadd.f32 %v1863, %v1866
        %vm1868 = vweird.f32 %v1604
        %vm1869 = vweird.f32 %v1863
        %vm1870 = vmor %vm1868, %vm1869
        %v1871 = vsel %vm1870, %v1863, %v1867
        %v1872 = vand.u32 2147483647, %v1604
        %vm1873 = vcmp.eq.f32.partialorder %v1872, 8.507059e+37
        %v1874 = vand.u32 %v1604, 2147483648
        %v1875 = vor.u32 1.1754944e-38, %v1874
        %v1876 = vsel %vm1873, %v1875, %v1871
        %v1877 = vrcp.pop %v1607
        %v1878 = vmul.f32 %v1607, %v1877
        %v1879 = vsub.f32 1.0, %v1878
        %v1880 = vmul.f32 %v1877, %v1879
        %v1881 = vadd.f32 %v1877, %v1880
        %vm1882 = vweird.f32 %v1607
        %vm1883 = vweird.f32 %v1877
        %vm1884 = vmor %vm1882, %vm1883
        %v1885 = vsel %vm1884, %v1877, %v1881
        %v1886 = vand.u32 2147483647, %v1607
        %vm1887 = vcmp.eq.f32.partialorder %v1886, 8.507059e+37
        %v1888 = vand.u32 %v1607, 2147483648
        %v1889 = vor.u32 1.1754944e-38, %v1888
        %v1890 = vsel %vm1887, %v1889, %v1885
        %v1891 = vrcp.pop %v1610
        %v1892 = vmul.f32 %v1610, %v1891
        %v1893 = vsub.f32 1.0, %v1892
        %v1894 = vmul.f32 %v1891, %v1893
        %v1895 = vadd.f32 %v1891, %v1894
        %vm1896 = vweird.f32 %v1610
        %vm1897 = vweird.f32 %v1891
        %vm1898 = vmor %vm1896, %vm1897
        %v1899 = vsel %vm1898, %v1891, %v1895
        %v1900 = vand.u32 2147483647, %v1610
        %vm1901 = vcmp.eq.f32.partialorder %v1900, 8.507059e+37
        %v1902 = vand.u32 %v1610, 2147483648
        %v1903 = vor.u32 1.1754944e-38, %v1902
        %v1904 = vsel %vm1901, %v1903, %v1899
        %v1905 = vrcp.pop %v1613
        %v1906 = vmul.f32 %v1613, %v1905
        %v1907 = vsub.f32 1.0, %v1906
        %v1908 = vmul.f32 %v1905, %v1907
        %v1909 = vadd.f32 %v1905, %v1908
        %vm1910 = vweird.f32 %v1613
        %vm1911 = vweird.f32 %v1905
        %vm1912 = vmor %vm1910, %vm1911
        %v1913 = vsel %vm1912, %v1905, %v1909
        %v1914 = vand.u32 2147483647, %v1613
        %vm1915 = vcmp.eq.f32.partialorder %v1914, 8.507059e+37
        %v1916 = vand.u32 %v1613, 2147483648
        %v1917 = vor.u32 1.1754944e-38, %v1916
        %v1918 = vsel %vm1915, %v1917, %v1913
        %v1919 = vrcp.pop %v1616
        %v1920 = vmul.f32 %v1616, %v1919
        %v1921 = vsub.f32 1.0, %v1920
        %v1922 = vmul.f32 %v1919, %v1921
        %v1923 = vadd.f32 %v1919, %v1922
        %vm1924 = vweird.f32 %v1616
        %vm1925 = vweird.f32 %v1919
        %vm1926 = vmor %vm1924, %vm1925
        %v1927 = vsel %vm1926, %v1919, %v1923
        %v1928 = vand.u32 2147483647, %v1616
        %vm1929 = vcmp.eq.f32.partialorder %v1928, 8.507059e+37
        %v1930 = vand.u32 %v1616, 2147483648
        %v1931 = vor.u32 1.1754944e-38, %v1930
        %v1932 = vsel %vm1929, %v1931, %v1927
        %v1933 = vrcp.pop %v1619
        %v1934 = vmul.f32 %v1619, %v1933
        %v1935 = vsub.f32 1.0, %v1934
        %v1936 = vmul.f32 %v1933, %v1935
        %v1937 = vadd.f32 %v1933, %v1936
        %vm1938 = vweird.f32 %v1619
        %vm1939 = vweird.f32 %v1933
        %vm1940 = vmor %vm1938, %vm1939
        %v1941 = vsel %vm1940, %v1933, %v1937
        %v1942 = vand.u32 2147483647, %v1619
        %vm1943 = vcmp.eq.f32.partialorder %v1942, 8.507059e+37
        %v1944 = vand.u32 %v1619, 2147483648
        %v1945 = vor.u32 1.1754944e-38, %v1944
        %v1946 = vsel %vm1943, %v1945, %v1941
        %v1947 = vrcp.pop %v1622
        %v1948 = vmul.f32 %v1622, %v1947
        %v1949 = vsub.f32 1.0, %v1948
        %v1950 = vmul.f32 %v1947, %v1949
        %v1951 = vadd.f32 %v1947, %v1950
        %vm1952 = vweird.f32 %v1622
        %vm1953 = vweird.f32 %v1947
        %vm1954 = vmor %vm1952, %vm1953
        %v1955 = vsel %vm1954, %v1947, %v1951
        %v1956 = vand.u32 2147483647, %v1622
        %vm1957 = vcmp.eq.f32.partialorder %v1956, 8.507059e+37
        %v1958 = vand.u32 %v1622, 2147483648
        %v1959 = vor.u32 1.1754944e-38, %v1958
        %v1960 = vsel %vm1957, %v1959, %v1955
        %v1961 = vrcp.pop %v1625
        %v1962 = vmul.f32 %v1625, %v1961
        %v1963 = vsub.f32 1.0, %v1962
        %v1964 = vmul.f32 %v1961, %v1963
        %v1965 = vadd.f32 %v1961, %v1964
        %vm1966 = vweird.f32 %v1625
        %vm1967 = vweird.f32 %v1961
        %vm1968 = vmor %vm1966, %vm1967
        %v1969 = vsel %vm1968, %v1961, %v1965
        %v1970 = vand.u32 2147483647, %v1625
        %vm1971 = vcmp.eq.f32.partialorder %v1970, 8.507059e+37
        %v1972 = vand.u32 %v1625, 2147483648
        %v1973 = vor.u32 1.1754944e-38, %v1972
        %v1974 = vsel %vm1971, %v1973, %v1969
        %v1975 = vrcp.pop %v1628
        %v1976 = vmul.f32 %v1628, %v1975
        %v1977 = vsub.f32 1.0, %v1976
        %v1978 = vmul.f32 %v1975, %v1977
        %v1979 = vadd.f32 %v1975, %v1978
        %vm1980 = vweird.f32 %v1628
        %vm1981 = vweird.f32 %v1975
        %vm1982 = vmor %vm1980, %vm1981
        %v1983 = vsel %vm1982, %v1975, %v1979
        %v1984 = vand.u32 2147483647, %v1628
        %vm1985 = vcmp.eq.f32.partialorder %v1984, 8.507059e+37
        %v1986 = vand.u32 %v1628, 2147483648
        %v1987 = vor.u32 1.1754944e-38, %v1986
        %v1988 = vsel %vm1985, %v1987, %v1983
        %v1989 = vrcp.pop %v1631
        %v1990 = vmul.f32 %v1631, %v1989
        %v1991 = vsub.f32 1.0, %v1990
        %v1992 = vmul.f32 %v1989, %v1991
        %v1993 = vadd.f32 %v1989, %v1992
        %vm1994 = vweird.f32 %v1631
        %vm1995 = vweird.f32 %v1989
        %vm1996 = vmor %vm1994, %vm1995
        %v1997 = vsel %vm1996, %v1989, %v1993
        %v1998 = vand.u32 2147483647, %v1631
        %vm1999 = vcmp.eq.f32.partialorder %v1998, 8.507059e+37
        %v2000 = vand.u32 %v1631, 2147483648
        %v2001 = vor.u32 1.1754944e-38, %v2000
        %v2002 = vsel %vm1999, %v2001, %v1997
        %v2003 = vrcp.pop %v1634
        %v2004 = vmul.f32 %v1634, %v2003
        %v2005 = vsub.f32 1.0, %v2004
        %v2006 = vmul.f32 %v2003, %v2005
        %v2007 = vadd.f32 %v2003, %v2006
        %vm2008 = vweird.f32 %v1634
        %vm2009 = vweird.f32 %v2003
        %vm2010 = vmor %vm2008, %vm2009
        %v2011 = vsel %vm2010, %v2003, %v2007
        %v2012 = vand.u32 2147483647, %v1634
        %vm2013 = vcmp.eq.f32.partialorder %v2012, 8.507059e+37
        %v2014 = vand.u32 %v1634, 2147483648
        %v2015 = vor.u32 1.1754944e-38, %v2014
        %v2016 = vsel %vm2013, %v2015, %v2011
        %v2017 = vrcp.pop %v1637
        %v2018 = vmul.f32 %v1637, %v2017
        %v2019 = vsub.f32 1.0, %v2018
        %v2020 = vmul.f32 %v2017, %v2019
        %v2021 = vadd.f32 %v2017, %v2020
        %vm2022 = vweird.f32 %v1637
        %vm2023 = vweird.f32 %v2017
        %vm2024 = vmor %vm2022, %vm2023
        %v2025 = vsel %vm2024, %v2017, %v2021
        %v2026 = vand.u32 2147483647, %v1637
        %vm2027 = vcmp.eq.f32.partialorder %v2026, 8.507059e+37
        %v2028 = vand.u32 %v1637, 2147483648
        %v2029 = vor.u32 1.1754944e-38, %v2028
        %v2030 = vsel %vm2027, %v2029, %v2025
        %v2031 = vrcp.pop %v1640
        %v2032 = vmul.f32 %v1640, %v2031
        %v2033 = vsub.f32 1.0, %v2032
        %v2034 = vmul.f32 %v2031, %v2033
        %v2035 = vadd.f32 %v2031, %v2034
        %vm2036 = vweird.f32 %v1640
        %vm2037 = vweird.f32 %v2031
        %vm2038 = vmor %vm2036, %vm2037
        %v2039 = vsel %vm2038, %v2031, %v2035
        %v2040 = vand.u32 2147483647, %v1640
        %vm2041 = vcmp.eq.f32.partialorder %v2040, 8.507059e+37
        %v2042 = vand.u32 %v1640, 2147483648
        %v2043 = vor.u32 1.1754944e-38, %v2042
        %v2044 = vsel %vm2041, %v2043, %v2039
        %v2045 = vrcp.pop %v1643
        %v2046 = vmul.f32 %v1643, %v2045
        %v2047 = vsub.f32 1.0, %v2046
        %v2048 = vmul.f32 %v2045, %v2047
        %v2049 = vadd.f32 %v2045, %v2048
        %vm2050 = vweird.f32 %v1643
        %vm2051 = vweird.f32 %v2045
        %vm2052 = vmor %vm2050, %vm2051
        %v2053 = vsel %vm2052, %v2045, %v2049
        %v2054 = vand.u32 2147483647, %v1643
        %vm2055 = vcmp.eq.f32.partialorder %v2054, 8.507059e+37
        %v2056 = vand.u32 %v1643, 2147483648
        %v2057 = vor.u32 1.1754944e-38, %v2056
        %v2058 = vsel %vm2055, %v2057, %v2053
        %v2059 = vrcp.pop %v1646
        %v2060 = vmul.f32 %v1646, %v2059
        %v2061 = vsub.f32 1.0, %v2060
        %v2062 = vmul.f32 %v2059, %v2061
        %v2063 = vadd.f32 %v2059, %v2062
        %vm2064 = vweird.f32 %v1646
        %vm2065 = vweird.f32 %v2059
        %vm2066 = vmor %vm2064, %vm2065
        %v2067 = vsel %vm2066, %v2059, %v2063
        %v2068 = vand.u32 2147483647, %v1646
        %vm2069 = vcmp.eq.f32.partialorder %v2068, 8.507059e+37
        %v2070 = vand.u32 %v1646, 2147483648
        %v2071 = vor.u32 1.1754944e-38, %v2070
        %v2072 = vsel %vm2069, %v2071, %v2067
        %v2073 = vrcp.pop %v1649
        %v2074 = vmul.f32 %v1649, %v2073
        %v2075 = vsub.f32 1.0, %v2074
        %v2076 = vmul.f32 %v2073, %v2075
        %v2077 = vadd.f32 %v2073, %v2076
        %vm2078 = vweird.f32 %v1649
        %vm2079 = vweird.f32 %v2073
        %vm2080 = vmor %vm2078, %vm2079
        %v2081 = vsel %vm2080, %v2073, %v2077
        %v2082 = vand.u32 2147483647, %v1649
        %vm2083 = vcmp.eq.f32.partialorder %v2082, 8.507059e+37
        %v2084 = vand.u32 %v1649, 2147483648
        %v2085 = vor.u32 1.1754944e-38, %v2084
        %v2086 = vsel %vm2083, %v2085, %v2081
        %v2087 = vrcp.pop %v1652
        %v2088 = vmul.f32 %v1652, %v2087
        %v2089 = vsub.f32 1.0, %v2088
        %v2090 = vmul.f32 %v2087, %v2089
        %v2091 = vadd.f32 %v2087, %v2090
        %vm2092 = vweird.f32 %v1652
        %vm2093 = vweird.f32 %v2087
        %vm2094 = vmor %vm2092, %vm2093
        %v2095 = vsel %vm2094, %v2087, %v2091
        %v2096 = vand.u32 2147483647, %v1652
        %vm2097 = vcmp.eq.f32.partialorder %v2096, 8.507059e+37
        %v2098 = vand.u32 %v1652, 2147483648
        %v2099 = vor.u32 1.1754944e-38, %v2098
        %v2100 = vsel %vm2097, %v2099, %v2095
        %v2101 = vmul.f32 %v1430, %v1666
        %v2102 = vmul.f32 %v1432, %v1666
        %v2103 = vmul.f32 %v1434, %v1680
        %v2104 = vmul.f32 %v1436, %v1680
        %v2105 = vmul.f32 %v1438, %v1694
        %v2106 = vmul.f32 %v1440, %v1694
        %v2107 = vmul.f32 %v1442, %v1708
        %v2108 = vmul.f32 %v1444, %v1708
        %v2109 = vmul.f32 %v1446, %v1722
        %v2110 = vmul.f32 %v1448, %v1722
        %v2111 = vmul.f32 %v1450, %v1736
        %v2112 = vmul.f32 %v1452, %v1736
        %v2113 = vmul.f32 %v1454, %v1750
        %v2114 = vmul.f32 %v1456, %v1750
        %v2115 = vmul.f32 %v1458, %v1764
        %v2116 = vmul.f32 %v1460, %v1764
        %v2117 = vmul.f32 %v1462, %v1778
        %v2118 = vmul.f32 %v1464, %v1778
        %v2119 = vmul.f32 %v1466, %v1792
        %v2120 = vmul.f32 %v1468, %v1792
        %v2121 = vmul.f32 %v1470, %v1806
        %v2122 = vmul.f32 %v1472, %v1806
        %v2123 = vmul.f32 %v1474, %v1820
        %v2124 = vmul.f32 %v1476, %v1820
        %v2125 = vmul.f32 %v1478, %v1834
        %v2126 = vmul.f32 %v1480, %v1834
        %v2127 = vmul.f32 %v1482, %v1848
        %v2128 = vmul.f32 %v1484, %v1848
        %v2129 = vmul.f32 %v1486, %v1862
        %v2130 = vmul.f32 %v1488, %v1862
        %v2131 = vmul.f32 %v1490, %v1876
        %v2132 = vmul.f32 %v1492, %v1876
        %v2133 = vmul.f32 %v1494, %v1890
        %v2134 = vmul.f32 %v1496, %v1890
        %v2135 = vmul.f32 %v1498, %v1904
        %v2136 = vmul.f32 %v1500, %v1904
        %v2137 = vmul.f32 %v1502, %v1918
        %v2138 = vmul.f32 %v1504, %v1918
        %v2139 = vmul.f32 %v1506, %v1932
        %v2140 = vmul.f32 %v1508, %v1932
        %v2141 = vmul.f32 %v1510, %v1946
        %v2142 = vmul.f32 %v1512, %v1946
        %v2143 = vmul.f32 %v1514, %v1960
        %v2144 = vmul.f32 %v1516, %v1960
        %v2145 = vmul.f32 %v1518, %v1974
        %v2146 = vmul.f32 %v1520, %v1974
        %v2147 = vmul.f32 %v1522, %v1988
        %v2148 = vmul.f32 %v1524, %v1988
        %v2149 = vmul.f32 %v1526, %v2002
        %v2150 = vmul.f32 %v1528, %v2002
        %v2151 = vmul.f32 %v1530, %v2016
        %v2152 = vmul.f32 %v1532, %v2016
        %v2153 = vmul.f32 %v1534, %v2030
        %v2154 = vmul.f32 %v1536, %v2030
        %v2155 = vmul.f32 %v1538, %v2044
        %v2156 = vmul.f32 %v1540, %v2044
        %v2157 = vmul.f32 %v1542, %v2058
        %v2158 = vmul.f32 %v1544, %v2058
        %v2159 = vmul.f32 %v1546, %v2072
        %v2160 = vmul.f32 %v1548, %v2072
        %v2161 = vmul.f32 %v1550, %v2086
        %v2162 = vmul.f32 %v1552, %v2086
        %v2163 = vmul.f32 %v1554, %v2100
        %v2164 = vmul.f32 %v1556, %v2100
        %2165 = vmatpush.xpose.msra.mxu0 %v2131
        %2166 = vmatpush.xpose.msra.mxu0 %v2129
        %2167 = vmatpush.xpose.msra.mxu0 %v2127
        %2168 = vmatpush.xpose.msra.mxu0 %v2125
        %2169 = vmatpush.xpose.msra.mxu0 %v2123
        %2170 = vmatpush.xpose.msra.mxu0 %v2121
        %2171 = vmatpush.xpose.msra.mxu0 %v2119
        %2172 = vmatpush.xpose.msra.mxu0 %v2117
        %2173 = vmatpush.xpose.msra.mxu0 %v2115
        %2174 = vmatpush.xpose.msra.mxu0 %v2113
        %2175 = vmatpush.xpose.msra.mxu0 %v2111
        %2176 = vmatpush.xpose.msra.mxu0 %v2109
        %2177 = vmatpush.xpose.msra.mxu0 %v2107
        %2178 = vmatpush.xpose.msra.mxu0 %v2105
        %2179 = vmatpush.xpose.msra.mxu0 %v2103
        %2180 = vmatpush.xpose.msra.mxu0 %v2101
        %2181 = vmatmul.f32.gmra.mxu0 %v874
        %v2182 = vpop.f32.mrf.mxu0
        %v2183 = vadd.f32 0.0, %v2182
        %2184 = vmatmul.f32.gmra.mxu0 %v876
        %v2185 = vpop.f32.mrf.mxu0
        %v2186 = vadd.f32 0.0, %v2185
        %2187 = vmatmul.f32.gmra.mxu0 %v878
        %v2188 = vpop.f32.mrf.mxu0
        %v2189 = vadd.f32 0.0, %v2188
        %2190 = vmatmul.f32.gmra.mxu0 %v880
        %v2191 = vpop.f32.mrf.mxu0
        %v2192 = vadd.f32 0.0, %v2191
        %2193 = vdwg.mxu0
        %2194 = vmatpush.xpose.msra.mxu0 %v2132
        %2195 = vmatpush.xpose.msra.mxu0 %v2130
        %2196 = vmatpush.xpose.msra.mxu0 %v2128
        %2197 = vmatpush.xpose.msra.mxu0 %v2126
        %2198 = vmatpush.xpose.msra.mxu0 %v2124
        %2199 = vmatpush.xpose.msra.mxu0 %v2122
        %2200 = vmatpush.xpose.msra.mxu0 %v2120
        %2201 = vmatpush.xpose.msra.mxu0 %v2118
        %2202 = vmatpush.xpose.msra.mxu0 %v2116
        %2203 = vmatpush.xpose.msra.mxu0 %v2114
        %2204 = vmatpush.xpose.msra.mxu0 %v2112
        %2205 = vmatpush.xpose.msra.mxu0 %v2110
        %2206 = vmatpush.xpose.msra.mxu0 %v2108
        %2207 = vmatpush.xpose.msra.mxu0 %v2106
        %2208 = vmatpush.xpose.msra.mxu0 %v2104
        %2209 = vmatpush.xpose.msra.mxu0 %v2102
        %2210 = vmatmul.f32.gmra.mxu0 %v875
        %v2211 = vpop.f32.mrf.mxu0
        %v2212 = vadd.f32 %v2183, %v2211
        %2213 = vmatmul.f32.gmra.mxu0 %v877
        %v2214 = vpop.f32.mrf.mxu0
        %v2215 = vadd.f32 %v2186, %v2214
        %2216 = vmatmul.f32.gmra.mxu0 %v879
        %v2217 = vpop.f32.mrf.mxu0
        %v2218 = vadd.f32 %v2189, %v2217
        %2219 = vmatmul.f32.gmra.mxu0 %v881
        %v2220 = vpop.f32.mrf.mxu0
        %v2221 = vadd.f32 %v2192, %v2220
        %2222 = vdwg.mxu0
        %2223 = vmatpush.xpose.msra.mxu0 %v2163
        %2224 = vmatpush.xpose.msra.mxu0 %v2161
        %2225 = vmatpush.xpose.msra.mxu0 %v2159
        %2226 = vmatpush.xpose.msra.mxu0 %v2157
        %2227 = vmatpush.xpose.msra.mxu0 %v2155
        %2228 = vmatpush.xpose.msra.mxu0 %v2153
        %2229 = vmatpush.xpose.msra.mxu0 %v2151
        %2230 = vmatpush.xpose.msra.mxu0 %v2149
        %2231 = vmatpush.xpose.msra.mxu0 %v2147
        %2232 = vmatpush.xpose.msra.mxu0 %v2145
        %2233 = vmatpush.xpose.msra.mxu0 %v2143
        %2234 = vmatpush.xpose.msra.mxu0 %v2141
        %2235 = vmatpush.xpose.msra.mxu0 %v2139
        %2236 = vmatpush.xpose.msra.mxu0 %v2137
        %2237 = vmatpush.xpose.msra.mxu0 %v2135
        %2238 = vmatpush.xpose.msra.mxu0 %v2133
        %2239 = vmatmul.f32.gmra.mxu0 %v874
        %v2240 = vpop.f32.mrf.mxu0
        %v2241 = vadd.f32 0.0, %v2240
        %2242 = vmatmul.f32.gmra.mxu0 %v876
        %v2243 = vpop.f32.mrf.mxu0
        %v2244 = vadd.f32 0.0, %v2243
        %2245 = vmatmul.f32.gmra.mxu0 %v878
        %v2246 = vpop.f32.mrf.mxu0
        %v2247 = vadd.f32 0.0, %v2246
        %2248 = vmatmul.f32.gmra.mxu0 %v880
        %v2249 = vpop.f32.mrf.mxu0
        %v2250 = vadd.f32 0.0, %v2249
        %2251 = vdwg.mxu0
        %2252 = vmatpush.xpose.msra.mxu0 %v2164
        %2253 = vmatpush.xpose.msra.mxu0 %v2162
        %2254 = vmatpush.xpose.msra.mxu0 %v2160
        %2255 = vmatpush.xpose.msra.mxu0 %v2158
        %2256 = vmatpush.xpose.msra.mxu0 %v2156
        %2257 = vmatpush.xpose.msra.mxu0 %v2154
        %2258 = vmatpush.xpose.msra.mxu0 %v2152
        %2259 = vmatpush.xpose.msra.mxu0 %v2150
        %2260 = vmatpush.xpose.msra.mxu0 %v2148
        %2261 = vmatpush.xpose.msra.mxu0 %v2146
        %2262 = vmatpush.xpose.msra.mxu0 %v2144
        %2263 = vmatpush.xpose.msra.mxu0 %v2142
        %2264 = vmatpush.xpose.msra.mxu0 %v2140
        %2265 = vmatpush.xpose.msra.mxu0 %v2138
        %2266 = vmatpush.xpose.msra.mxu0 %v2136
        %2267 = vmatpush.xpose.msra.mxu0 %v2134
        %2268 = vmatmul.f32.gmra.mxu0 %v875
        %v2269 = vpop.f32.mrf.mxu0
        %v2270 = vadd.f32 %v2241, %v2269
        %2271 = vmatmul.f32.gmra.mxu0 %v877
        %v2272 = vpop.f32.mrf.mxu0
        %v2273 = vadd.f32 %v2244, %v2272
        %2274 = vmatmul.f32.gmra.mxu0 %v879
        %v2275 = vpop.f32.mrf.mxu0
        %v2276 = vadd.f32 %v2247, %v2275
        %2277 = vmatmul.f32.gmra.mxu0 %v881
        %v2278 = vpop.f32.mrf.mxu0
        %v2279 = vadd.f32 %v2250, %v2278
        %2280 = vdwg.mxu0
        %s2281 = scalar_lea.vmem [#allocation2], 64
        %v2282 = vld [vmem:[%s2281] sm:$0xff]
        %v2283 = vld [vmem:[%s2281 + $0x8] sm:$0xff]
        %v2284 = vld [vmem:[%s2281 + $0x10] sm:$0xff]
        %v2285 = vld [vmem:[%s2281 + $0x18] sm:$0xff]
        %v2286 = vld [vmem:[%s2281 + $0x20] sm:$0xff]
        %v2287 = vld [vmem:[%s2281 + $0x28] sm:$0xff]
        %v2288 = vld [vmem:[%s2281 + $0x30] sm:$0xff]
        %v2289 = vld [vmem:[%s2281 + $0x38] sm:$0xff]
        %s2290 = scalar_lea.vmem [#allocation2], 320
        %v2291 = vld [vmem:[%s2290] sm:$0xff]
        %v2292 = vld [vmem:[%s2290 + $0x8] sm:$0xff]
        %v2293 = vld [vmem:[%s2290 + $0x10] sm:$0xff]
        %v2294 = vld [vmem:[%s2290 + $0x18] sm:$0xff]
        %v2295 = vld [vmem:[%s2290 + $0x20] sm:$0xff]
        %v2296 = vld [vmem:[%s2290 + $0x28] sm:$0xff]
        %v2297 = vld [vmem:[%s2290 + $0x30] sm:$0xff]
        %v2298 = vld [vmem:[%s2290 + $0x38] sm:$0xff]
        %2299 = vxpose.xlu0.b32.start [1/16] %v765, 128
        %2300 = vxpose.xlu0.b32.cont [2/16] %v768, 128
        %2301 = vxpose.xlu0.b32.cont [3/16] %v771, 128
        %2302 = vxpose.xlu0.b32.cont [4/16] %v774, 128
        %2303 = vxpose.xlu0.b32.cont [5/16] 0.0, 128
        %2304 = vxpose.xlu0.b32.cont [6/16] 0.0, 128
        %2305 = vxpose.xlu0.b32.cont [7/16] 0.0, 128
        %2306 = vxpose.xlu0.b32.cont [8/16] 0.0, 128
        %2307 = vxpose.xlu0.b32.cont [9/16] 0.0, 128
        %2308 = vxpose.xlu0.b32.cont [10/16] 0.0, 128
        %2309 = vxpose.xlu0.b32.cont [11/16] 0.0, 128
        %2310 = vxpose.xlu0.b32.cont [12/16] 0.0, 128
        %2311 = vxpose.xlu0.b32.cont [13/16] 0.0, 128
        %2312 = vxpose.xlu0.b32.cont [14/16] 0.0, 128
        %2313 = vxpose.xlu0.b32.cont [15/16] 0.0, 128
        %2314 = vxpose.xlu0.b32.end [16/16] 0.0, 128
        %v2315 = vpop.trf.xlu0
        %v2316 = vpop.trf.xlu0
        %v2317 = vpop.trf.xlu0
        %v2318 = vpop.trf.xlu0
        %v2319 = vpop.trf.xlu0
        %v2320 = vpop.trf.xlu0
        %v2321 = vpop.trf.xlu0
        %v2322 = vpop.trf.xlu0
        %v2323 = vpop.trf.xlu0
        %v2324 = vpop.trf.xlu0
        %v2325 = vpop.trf.xlu0
        %v2326 = vpop.trf.xlu0
        %v2327 = vpop.trf.xlu0
        %v2328 = vpop.trf.xlu0
        %v2329 = vpop.trf.xlu0
        %v2330 = vpop.trf.xlu0
        %2331 = vxpose.xlu0.b32.start [1/16] %v830, 128
        %2332 = vxpose.xlu0.b32.cont [2/16] %v833, 128
        %2333 = vxpose.xlu0.b32.cont [3/16] %v836, 128
        %2334 = vxpose.xlu0.b32.cont [4/16] %v839, 128
        %2335 = vxpose.xlu0.b32.cont [5/16] 0.0, 128
        %2336 = vxpose.xlu0.b32.cont [6/16] 0.0, 128
        %2337 = vxpose.xlu0.b32.cont [7/16] 0.0, 128
        %2338 = vxpose.xlu0.b32.cont [8/16] 0.0, 128
        %2339 = vxpose.xlu0.b32.cont [9/16] 0.0, 128
        %2340 = vxpose.xlu0.b32.cont [10/16] 0.0, 128
        %2341 = vxpose.xlu0.b32.cont [11/16] 0.0, 128
        %2342 = vxpose.xlu0.b32.cont [12/16] 0.0, 128
        %2343 = vxpose.xlu0.b32.cont [13/16] 0.0, 128
        %2344 = vxpose.xlu0.b32.cont [14/16] 0.0, 128
        %2345 = vxpose.xlu0.b32.cont [15/16] 0.0, 128
        %2346 = vxpose.xlu0.b32.end [16/16] 0.0, 128
        %v2347 = vpop.trf.xlu0
        %v2348 = vpop.trf.xlu0
        %v2349 = vpop.trf.xlu0
        %v2350 = vpop.trf.xlu0
        %v2351 = vpop.trf.xlu0
        %v2352 = vpop.trf.xlu0
        %v2353 = vpop.trf.xlu0
        %v2354 = vpop.trf.xlu0
        %v2355 = vpop.trf.xlu0
        %v2356 = vpop.trf.xlu0
        %v2357 = vpop.trf.xlu0
        %v2358 = vpop.trf.xlu0
        %v2359 = vpop.trf.xlu0
        %v2360 = vpop.trf.xlu0
        %v2361 = vpop.trf.xlu0
        %v2362 = vpop.trf.xlu0
        %v2364 = vsel %vm946, %v2315, 0
        %v2367 = vsel %vm946, %v2316, 0
        %v2370 = vsel %vm946, %v2317, 0
        %v2373 = vsel %vm946, %v2318, 0
        %v2376 = vsel %vm946, %v2319, 0
        %v2379 = vsel %vm946, %v2320, 0
        %v2382 = vsel %vm946, %v2321, 0
        %v2385 = vsel %vm946, %v2322, 0
        %v2388 = vsel %vm946, %v2323, 0
        %v2391 = vsel %vm946, %v2324, 0
        %v2394 = vsel %vm946, %v2325, 0
        %v2397 = vsel %vm946, %v2326, 0
        %v2400 = vsel %vm946, %v2327, 0
        %v2403 = vsel %vm946, %v2328, 0
        %v2406 = vsel %vm946, %v2329, 0
        %v2409 = vsel %vm946, %v2330, 0
        %v2412 = vsel %vm946, %v2347, 0
        %v2415 = vsel %vm946, %v2348, 0
        %v2418 = vsel %vm946, %v2349, 0
        %v2421 = vsel %vm946, %v2350, 0
        %v2424 = vsel %vm946, %v2351, 0
        %v2427 = vsel %vm946, %v2352, 0
        %v2430 = vsel %vm946, %v2353, 0
        %v2433 = vsel %vm946, %v2354, 0
        %v2436 = vsel %vm946, %v2355, 0
        %v2439 = vsel %vm946, %v2356, 0
        %v2442 = vsel %vm946, %v2357, 0
        %v2445 = vsel %vm946, %v2358, 0
        %v2448 = vsel %vm946, %v2359, 0
        %v2451 = vsel %vm946, %v2360, 0
        %v2454 = vsel %vm946, %v2361, 0
        %v2457 = vsel %vm946, %v2362, 0
        %2459 = vmatpush.msra.mxu0 0.0
        %2460 = vmatpush.msra.mxu0 0.0
        %2461 = vmatpush.msra.mxu0 0.0
        %2462 = vmatpush.msra.mxu0 0.0
        %2463 = vmatpush.msra.mxu0 0.0
        %2464 = vmatpush.msra.mxu0 0.0
        %2465 = vmatpush.msra.mxu0 0.0
        %2466 = vmatpush.msra.mxu0 0.0
        %2467 = vmatpush.msra.mxu0 0.0
        %2468 = vmatpush.msra.mxu0 0.0
        %2469 = vmatpush.msra.mxu0 0.0
        %2470 = vmatpush.msra.mxu0 0.0
        %2471 = vmatpush.msra.mxu0 %v2288
        %2472 = vmatpush.msra.mxu0 %v2286
        %2473 = vmatpush.msra.mxu0 %v2284
        %2474 = vmatpush.msra.mxu0 %v2282
        %2475 = vmatmul.f32.gmra.mxu0 %v2364
        %v2476 = vpop.f32.mrf.mxu0
        %v2477 = vadd.f32 0.0, %v2476
        %2478 = vmatmul.f32.gmra.mxu0 %v2367
        %v2479 = vpop.f32.mrf.mxu0
        %v2480 = vadd.f32 0.0, %v2479
        %2481 = vmatmul.f32.gmra.mxu0 %v2370
        %v2482 = vpop.f32.mrf.mxu0
        %v2483 = vadd.f32 0.0, %v2482
        %2484 = vmatmul.f32.gmra.mxu0 %v2373
        %v2485 = vpop.f32.mrf.mxu0
        %v2486 = vadd.f32 0.0, %v2485
        %2487 = vmatmul.f32.gmra.mxu0 %v2376
        %v2488 = vpop.f32.mrf.mxu0
        %v2489 = vadd.f32 0.0, %v2488
        %2490 = vmatmul.f32.gmra.mxu0 %v2379
        %v2491 = vpop.f32.mrf.mxu0
        %v2492 = vadd.f32 0.0, %v2491
        %2493 = vmatmul.f32.gmra.mxu0 %v2382
        %v2494 = vpop.f32.mrf.mxu0
        %v2495 = vadd.f32 0.0, %v2494
        %2496 = vmatmul.f32.gmra.mxu0 %v2385
        %v2497 = vpop.f32.mrf.mxu0
        %v2498 = vadd.f32 0.0, %v2497
        %2499 = vmatmul.f32.gmra.mxu0 %v2388
        %v2500 = vpop.f32.mrf.mxu0
        %v2501 = vadd.f32 0.0, %v2500
        %2502 = vmatmul.f32.gmra.mxu0 %v2391
        %v2503 = vpop.f32.mrf.mxu0
        %v2504 = vadd.f32 0.0, %v2503
        %2505 = vmatmul.f32.gmra.mxu0 %v2394
        %v2506 = vpop.f32.mrf.mxu0
        %v2507 = vadd.f32 0.0, %v2506
        %2508 = vmatmul.f32.gmra.mxu0 %v2397
        %v2509 = vpop.f32.mrf.mxu0
        %v2510 = vadd.f32 0.0, %v2509
        %2511 = vmatmul.f32.gmra.mxu0 %v2400
        %v2512 = vpop.f32.mrf.mxu0
        %v2513 = vadd.f32 0.0, %v2512
        %2514 = vmatmul.f32.gmra.mxu0 %v2403
        %v2515 = vpop.f32.mrf.mxu0
        %v2516 = vadd.f32 0.0, %v2515
        %2517 = vmatmul.f32.gmra.mxu0 %v2406
        %v2518 = vpop.f32.mrf.mxu0
        %v2519 = vadd.f32 0.0, %v2518
        %2520 = vmatmul.f32.gmra.mxu0 %v2409
        %v2521 = vpop.f32.mrf.mxu0
        %v2522 = vadd.f32 0.0, %v2521
        %2523 = vmatmul.f32.gmra.mxu0 %v2412
        %v2524 = vpop.f32.mrf.mxu0
        %v2525 = vadd.f32 0.0, %v2524
        %2526 = vmatmul.f32.gmra.mxu0 %v2415
        %v2527 = vpop.f32.mrf.mxu0
        %v2528 = vadd.f32 0.0, %v2527
        %2529 = vmatmul.f32.gmra.mxu0 %v2418
        %v2530 = vpop.f32.mrf.mxu0
        %v2531 = vadd.f32 0.0, %v2530
        %2532 = vmatmul.f32.gmra.mxu0 %v2421
        %v2533 = vpop.f32.mrf.mxu0
        %v2534 = vadd.f32 0.0, %v2533
        %2535 = vmatmul.f32.gmra.mxu0 %v2424
        %v2536 = vpop.f32.mrf.mxu0
        %v2537 = vadd.f32 0.0, %v2536
        %2538 = vmatmul.f32.gmra.mxu0 %v2427
        %v2539 = vpop.f32.mrf.mxu0
        %v2540 = vadd.f32 0.0, %v2539
        %2541 = vmatmul.f32.gmra.mxu0 %v2430
        %v2542 = vpop.f32.mrf.mxu0
        %v2543 = vadd.f32 0.0, %v2542
        %2544 = vmatmul.f32.gmra.mxu0 %v2433
        %v2545 = vpop.f32.mrf.mxu0
        %v2546 = vadd.f32 0.0, %v2545
        %2547 = vmatmul.f32.gmra.mxu0 %v2436
        %v2548 = vpop.f32.mrf.mxu0
        %v2549 = vadd.f32 0.0, %v2548
        %2550 = vmatmul.f32.gmra.mxu0 %v2439
        %v2551 = vpop.f32.mrf.mxu0
        %v2552 = vadd.f32 0.0, %v2551
        %2553 = vmatmul.f32.gmra.mxu0 %v2442
        %v2554 = vpop.f32.mrf.mxu0
        %v2555 = vadd.f32 0.0, %v2554
        %2556 = vmatmul.f32.gmra.mxu0 %v2445
        %v2557 = vpop.f32.mrf.mxu0
        %v2558 = vadd.f32 0.0, %v2557
        %2559 = vmatmul.f32.gmra.mxu0 %v2448
        %v2560 = vpop.f32.mrf.mxu0
        %v2561 = vadd.f32 0.0, %v2560
        %2562 = vmatmul.f32.gmra.mxu0 %v2451
        %v2563 = vpop.f32.mrf.mxu0
        %v2564 = vadd.f32 0.0, %v2563
        %2565 = vmatmul.f32.gmra.mxu0 %v2454
        %v2566 = vpop.f32.mrf.mxu0
        %v2567 = vadd.f32 0.0, %v2566
        %2568 = vmatmul.f32.gmra.mxu0 %v2457
        %v2569 = vpop.f32.mrf.mxu0
        %v2570 = vadd.f32 0.0, %v2569
        %2571 = vdwg.mxu0
        %2572 = vmatpush.msra.mxu0 0.0
        %2573 = vmatpush.msra.mxu0 0.0
        %2574 = vmatpush.msra.mxu0 0.0
        %2575 = vmatpush.msra.mxu0 0.0
        %2576 = vmatpush.msra.mxu0 0.0
        %2577 = vmatpush.msra.mxu0 0.0
        %2578 = vmatpush.msra.mxu0 0.0
        %2579 = vmatpush.msra.mxu0 0.0
        %2580 = vmatpush.msra.mxu0 0.0
        %2581 = vmatpush.msra.mxu0 0.0
        %2582 = vmatpush.msra.mxu0 0.0
        %2583 = vmatpush.msra.mxu0 0.0
        %2584 = vmatpush.msra.mxu0 %v2289
        %2585 = vmatpush.msra.mxu0 %v2287
        %2586 = vmatpush.msra.mxu0 %v2285
        %2587 = vmatpush.msra.mxu0 %v2283
        %2588 = vmatmul.f32.gmra.mxu0 %v2364
        %v2589 = vpop.f32.mrf.mxu0
        %v2590 = vadd.f32 0.0, %v2589
        %2591 = vmatmul.f32.gmra.mxu0 %v2367
        %v2592 = vpop.f32.mrf.mxu0
        %v2593 = vadd.f32 0.0, %v2592
        %2594 = vmatmul.f32.gmra.mxu0 %v2370
        %v2595 = vpop.f32.mrf.mxu0
        %v2596 = vadd.f32 0.0, %v2595
        %2597 = vmatmul.f32.gmra.mxu0 %v2373
        %v2598 = vpop.f32.mrf.mxu0
        %v2599 = vadd.f32 0.0, %v2598
        %2600 = vmatmul.f32.gmra.mxu0 %v2376
        %v2601 = vpop.f32.mrf.mxu0
        %v2602 = vadd.f32 0.0, %v2601
        %2603 = vmatmul.f32.gmra.mxu0 %v2379
        %v2604 = vpop.f32.mrf.mxu0
        %v2605 = vadd.f32 0.0, %v2604
        %2606 = vmatmul.f32.gmra.mxu0 %v2382
        %v2607 = vpop.f32.mrf.mxu0
        %v2608 = vadd.f32 0.0, %v2607
        %2609 = vmatmul.f32.gmra.mxu0 %v2385
        %v2610 = vpop.f32.mrf.mxu0
        %v2611 = vadd.f32 0.0, %v2610
        %2612 = vmatmul.f32.gmra.mxu0 %v2388
        %v2613 = vpop.f32.mrf.mxu0
        %v2614 = vadd.f32 0.0, %v2613
        %2615 = vmatmul.f32.gmra.mxu0 %v2391
        %v2616 = vpop.f32.mrf.mxu0
        %v2617 = vadd.f32 0.0, %v2616
        %2618 = vmatmul.f32.gmra.mxu0 %v2394
        %v2619 = vpop.f32.mrf.mxu0
        %v2620 = vadd.f32 0.0, %v2619
        %2621 = vmatmul.f32.gmra.mxu0 %v2397
        %v2622 = vpop.f32.mrf.mxu0
        %v2623 = vadd.f32 0.0, %v2622
        %2624 = vmatmul.f32.gmra.mxu0 %v2400
        %v2625 = vpop.f32.mrf.mxu0
        %v2626 = vadd.f32 0.0, %v2625
        %2627 = vmatmul.f32.gmra.mxu0 %v2403
        %v2628 = vpop.f32.mrf.mxu0
        %v2629 = vadd.f32 0.0, %v2628
        %2630 = vmatmul.f32.gmra.mxu0 %v2406
        %v2631 = vpop.f32.mrf.mxu0
        %v2632 = vadd.f32 0.0, %v2631
        %2633 = vmatmul.f32.gmra.mxu0 %v2409
        %v2634 = vpop.f32.mrf.mxu0
        %v2635 = vadd.f32 0.0, %v2634
        %2636 = vmatmul.f32.gmra.mxu0 %v2412
        %v2637 = vpop.f32.mrf.mxu0
        %v2638 = vadd.f32 0.0, %v2637
        %2639 = vmatmul.f32.gmra.mxu0 %v2415
        %v2640 = vpop.f32.mrf.mxu0
        %v2641 = vadd.f32 0.0, %v2640
        %2642 = vmatmul.f32.gmra.mxu0 %v2418
        %v2643 = vpop.f32.mrf.mxu0
        %v2644 = vadd.f32 0.0, %v2643
        %2645 = vmatmul.f32.gmra.mxu0 %v2421
        %v2646 = vpop.f32.mrf.mxu0
        %v2647 = vadd.f32 0.0, %v2646
        %2648 = vmatmul.f32.gmra.mxu0 %v2424
        %v2649 = vpop.f32.mrf.mxu0
        %v2650 = vadd.f32 0.0, %v2649
        %2651 = vmatmul.f32.gmra.mxu0 %v2427
        %v2652 = vpop.f32.mrf.mxu0
        %v2653 = vadd.f32 0.0, %v2652
        %2654 = vmatmul.f32.gmra.mxu0 %v2430
        %v2655 = vpop.f32.mrf.mxu0
        %v2656 = vadd.f32 0.0, %v2655
        %2657 = vmatmul.f32.gmra.mxu0 %v2433
        %v2658 = vpop.f32.mrf.mxu0
        %v2659 = vadd.f32 0.0, %v2658
        %2660 = vmatmul.f32.gmra.mxu0 %v2436
        %v2661 = vpop.f32.mrf.mxu0
        %v2662 = vadd.f32 0.0, %v2661
        %2663 = vmatmul.f32.gmra.mxu0 %v2439
        %v2664 = vpop.f32.mrf.mxu0
        %v2665 = vadd.f32 0.0, %v2664
        %2666 = vmatmul.f32.gmra.mxu0 %v2442
        %v2667 = vpop.f32.mrf.mxu0
        %v2668 = vadd.f32 0.0, %v2667
        %2669 = vmatmul.f32.gmra.mxu0 %v2445
        %v2670 = vpop.f32.mrf.mxu0
        %v2671 = vadd.f32 0.0, %v2670
        %2672 = vmatmul.f32.gmra.mxu0 %v2448
        %v2673 = vpop.f32.mrf.mxu0
        %v2674 = vadd.f32 0.0, %v2673
        %2675 = vmatmul.f32.gmra.mxu0 %v2451
        %v2676 = vpop.f32.mrf.mxu0
        %v2677 = vadd.f32 0.0, %v2676
        %2678 = vmatmul.f32.gmra.mxu0 %v2454
        %v2679 = vpop.f32.mrf.mxu0
        %v2680 = vadd.f32 0.0, %v2679
        %2681 = vmatmul.f32.gmra.mxu0 %v2457
        %v2682 = vpop.f32.mrf.mxu0
        %v2683 = vadd.f32 0.0, %v2682
        %2684 = vdwg.mxu0
        %v2685 = vmax.f32 %v2477, %v2590
        %2686 = vmax.xlane.f32.xlu0 %v2685
        %v2687 = vpop.xlane.xlu0 %2686
        %v2688 = vmax.f32 %v2480, %v2593
        %2689 = vmax.xlane.f32.xlu0 %v2688
        %v2690 = vpop.xlane.xlu0 %2689
        %v2691 = vmax.f32 %v2483, %v2596
        %2692 = vmax.xlane.f32.xlu0 %v2691
        %v2693 = vpop.xlane.xlu0 %2692
        %v2694 = vmax.f32 %v2486, %v2599
        %2695 = vmax.xlane.f32.xlu0 %v2694
        %v2696 = vpop.xlane.xlu0 %2695
        %v2697 = vmax.f32 %v2489, %v2602
        %2698 = vmax.xlane.f32.xlu0 %v2697
        %v2699 = vpop.xlane.xlu0 %2698
        %v2700 = vmax.f32 %v2492, %v2605
        %2701 = vmax.xlane.f32.xlu0 %v2700
        %v2702 = vpop.xlane.xlu0 %2701
        %v2703 = vmax.f32 %v2495, %v2608
        %2704 = vmax.xlane.f32.xlu0 %v2703
        %v2705 = vpop.xlane.xlu0 %2704
        %v2706 = vmax.f32 %v2498, %v2611
        %2707 = vmax.xlane.f32.xlu0 %v2706
        %v2708 = vpop.xlane.xlu0 %2707
        %v2709 = vmax.f32 %v2501, %v2614
        %2710 = vmax.xlane.f32.xlu0 %v2709
        %v2711 = vpop.xlane.xlu0 %2710
        %v2712 = vmax.f32 %v2504, %v2617
        %2713 = vmax.xlane.f32.xlu0 %v2712
        %v2714 = vpop.xlane.xlu0 %2713
        %v2715 = vmax.f32 %v2507, %v2620
        %2716 = vmax.xlane.f32.xlu0 %v2715
        %v2717 = vpop.xlane.xlu0 %2716
        %v2718 = vmax.f32 %v2510, %v2623
        %2719 = vmax.xlane.f32.xlu0 %v2718
        %v2720 = vpop.xlane.xlu0 %2719
        %v2721 = vmax.f32 %v2513, %v2626
        %2722 = vmax.xlane.f32.xlu0 %v2721
        %v2723 = vpop.xlane.xlu0 %2722
        %v2724 = vmax.f32 %v2516, %v2629
        %2725 = vmax.xlane.f32.xlu0 %v2724
        %v2726 = vpop.xlane.xlu0 %2725
        %v2727 = vmax.f32 %v2519, %v2632
        %2728 = vmax.xlane.f32.xlu0 %v2727
        %v2729 = vpop.xlane.xlu0 %2728
        %v2730 = vmax.f32 %v2522, %v2635
        %2731 = vmax.xlane.f32.xlu0 %v2730
        %v2732 = vpop.xlane.xlu0 %2731
        %v2733 = vmax.f32 %v2525, %v2638
        %2734 = vmax.xlane.f32.xlu0 %v2733
        %v2735 = vpop.xlane.xlu0 %2734
        %v2736 = vmax.f32 %v2528, %v2641
        %2737 = vmax.xlane.f32.xlu0 %v2736
        %v2738 = vpop.xlane.xlu0 %2737
        %v2739 = vmax.f32 %v2531, %v2644
        %2740 = vmax.xlane.f32.xlu0 %v2739
        %v2741 = vpop.xlane.xlu0 %2740
        %v2742 = vmax.f32 %v2534, %v2647
        %2743 = vmax.xlane.f32.xlu0 %v2742
        %v2744 = vpop.xlane.xlu0 %2743
        %v2745 = vmax.f32 %v2537, %v2650
        %2746 = vmax.xlane.f32.xlu0 %v2745
        %v2747 = vpop.xlane.xlu0 %2746
        %v2748 = vmax.f32 %v2540, %v2653
        %2749 = vmax.xlane.f32.xlu0 %v2748
        %v2750 = vpop.xlane.xlu0 %2749
        %v2751 = vmax.f32 %v2543, %v2656
        %2752 = vmax.xlane.f32.xlu0 %v2751
        %v2753 = vpop.xlane.xlu0 %2752
        %v2754 = vmax.f32 %v2546, %v2659
        %2755 = vmax.xlane.f32.xlu0 %v2754
        %v2756 = vpop.xlane.xlu0 %2755
        %v2757 = vmax.f32 %v2549, %v2662
        %2758 = vmax.xlane.f32.xlu0 %v2757
        %v2759 = vpop.xlane.xlu0 %2758
        %v2760 = vmax.f32 %v2552, %v2665
        %2761 = vmax.xlane.f32.xlu0 %v2760
        %v2762 = vpop.xlane.xlu0 %2761
        %v2763 = vmax.f32 %v2555, %v2668
        %2764 = vmax.xlane.f32.xlu0 %v2763
        %v2765 = vpop.xlane.xlu0 %2764
        %v2766 = vmax.f32 %v2558, %v2671
        %2767 = vmax.xlane.f32.xlu0 %v2766
        %v2768 = vpop.xlane.xlu0 %2767
        %v2769 = vmax.f32 %v2561, %v2674
        %2770 = vmax.xlane.f32.xlu0 %v2769
        %v2771 = vpop.xlane.xlu0 %2770
        %v2772 = vmax.f32 %v2564, %v2677
        %2773 = vmax.xlane.f32.xlu0 %v2772
        %v2774 = vpop.xlane.xlu0 %2773
        %v2775 = vmax.f32 %v2567, %v2680
        %2776 = vmax.xlane.f32.xlu0 %v2775
        %v2777 = vpop.xlane.xlu0 %2776
        %v2778 = vmax.f32 %v2570, %v2683
        %2779 = vmax.xlane.f32.xlu0 %v2778
        %v2780 = vpop.xlane.xlu0 %2779
        %v2781 = vsub.f32 %v2477, %v2687
        %v2782 = vsub.f32 %v2590, %v2687
        %v2783 = vsub.f32 %v2480, %v2690
        %v2784 = vsub.f32 %v2593, %v2690
        %v2785 = vsub.f32 %v2483, %v2693
        %v2786 = vsub.f32 %v2596, %v2693
        %v2787 = vsub.f32 %v2486, %v2696
        %v2788 = vsub.f32 %v2599, %v2696
        %v2789 = vsub.f32 %v2489, %v2699
        %v2790 = vsub.f32 %v2602, %v2699
        %v2791 = vsub.f32 %v2492, %v2702
        %v2792 = vsub.f32 %v2605, %v2702
        %v2793 = vsub.f32 %v2495, %v2705
        %v2794 = vsub.f32 %v2608, %v2705
        %v2795 = vsub.f32 %v2498, %v2708
        %v2796 = vsub.f32 %v2611, %v2708
        %v2797 = vsub.f32 %v2501, %v2711
        %v2798 = vsub.f32 %v2614, %v2711
        %v2799 = vsub.f32 %v2504, %v2714
        %v2800 = vsub.f32 %v2617, %v2714
        %v2801 = vsub.f32 %v2507, %v2717
        %v2802 = vsub.f32 %v2620, %v2717
        %v2803 = vsub.f32 %v2510, %v2720
        %v2804 = vsub.f32 %v2623, %v2720
        %v2805 = vsub.f32 %v2513, %v2723
        %v2806 = vsub.f32 %v2626, %v2723
        %v2807 = vsub.f32 %v2516, %v2726
        %v2808 = vsub.f32 %v2629, %v2726
        %v2809 = vsub.f32 %v2519, %v2729
        %v2810 = vsub.f32 %v2632, %v2729
        %v2811 = vsub.f32 %v2522, %v2732
        %v2812 = vsub.f32 %v2635, %v2732
        %v2813 = vsub.f32 %v2525, %v2735
        %v2814 = vsub.f32 %v2638, %v2735
        %v2815 = vsub.f32 %v2528, %v2738
        %v2816 = vsub.f32 %v2641, %v2738
        %v2817 = vsub.f32 %v2531, %v2741
        %v2818 = vsub.f32 %v2644, %v2741
        %v2819 = vsub.f32 %v2534, %v2744
        %v2820 = vsub.f32 %v2647, %v2744
        %v2821 = vsub.f32 %v2537, %v2747
        %v2822 = vsub.f32 %v2650, %v2747
        %v2823 = vsub.f32 %v2540, %v2750
        %v2824 = vsub.f32 %v2653, %v2750
        %v2825 = vsub.f32 %v2543, %v2753
        %v2826 = vsub.f32 %v2656, %v2753
        %v2827 = vsub.f32 %v2546, %v2756
        %v2828 = vsub.f32 %v2659, %v2756
        %v2829 = vsub.f32 %v2549, %v2759
        %v2830 = vsub.f32 %v2662, %v2759
        %v2831 = vsub.f32 %v2552, %v2762
        %v2832 = vsub.f32 %v2665, %v2762
        %v2833 = vsub.f32 %v2555, %v2765
        %v2834 = vsub.f32 %v2668, %v2765
        %v2835 = vsub.f32 %v2558, %v2768
        %v2836 = vsub.f32 %v2671, %v2768
        %v2837 = vsub.f32 %v2561, %v2771
        %v2838 = vsub.f32 %v2674, %v2771
        %v2839 = vsub.f32 %v2564, %v2774
        %v2840 = vsub.f32 %v2677, %v2774
        %v2841 = vsub.f32 %v2567, %v2777
        %v2842 = vsub.f32 %v2680, %v2777
        %v2843 = vsub.f32 %v2570, %v2780
        %v2844 = vsub.f32 %v2683, %v2780
        %v2845 = vmul.f32 %v2781, 1.442695
        %v2846 = vpow.pop %v2845
        %v2847 = vmul.f32 %v2782, 1.442695
        %v2848 = vpow.pop %v2847
        %v2849 = vmul.f32 %v2783, 1.442695
        %v2850 = vpow.pop %v2849
        %v2851 = vmul.f32 %v2784, 1.442695
        %v2852 = vpow.pop %v2851
        %v2853 = vmul.f32 %v2785, 1.442695
        %v2854 = vpow.pop %v2853
        %v2855 = vmul.f32 %v2786, 1.442695
        %v2856 = vpow.pop %v2855
        %v2857 = vmul.f32 %v2787, 1.442695
        %v2858 = vpow.pop %v2857
        %v2859 = vmul.f32 %v2788, 1.442695
        %v2860 = vpow.pop %v2859
        %v2861 = vmul.f32 %v2789, 1.442695
        %v2862 = vpow.pop %v2861
        %v2863 = vmul.f32 %v2790, 1.442695
        %v2864 = vpow.pop %v2863
        %v2865 = vmul.f32 %v2791, 1.442695
        %v2866 = vpow.pop %v2865
        %v2867 = vmul.f32 %v2792, 1.442695
        %v2868 = vpow.pop %v2867
        %v2869 = vmul.f32 %v2793, 1.442695
        %v2870 = vpow.pop %v2869
        %v2871 = vmul.f32 %v2794, 1.442695
        %v2872 = vpow.pop %v2871
        %v2873 = vmul.f32 %v2795, 1.442695
        %v2874 = vpow.pop %v2873
        %v2875 = vmul.f32 %v2796, 1.442695
        %v2876 = vpow.pop %v2875
        %v2877 = vmul.f32 %v2797, 1.442695
        %v2878 = vpow.pop %v2877
        %v2879 = vmul.f32 %v2798, 1.442695
        %v2880 = vpow.pop %v2879
        %v2881 = vmul.f32 %v2799, 1.442695
        %v2882 = vpow.pop %v2881
        %v2883 = vmul.f32 %v2800, 1.442695
        %v2884 = vpow.pop %v2883
        %v2885 = vmul.f32 %v2801, 1.442695
        %v2886 = vpow.pop %v2885
        %v2887 = vmul.f32 %v2802, 1.442695
        %v2888 = vpow.pop %v2887
        %v2889 = vmul.f32 %v2803, 1.442695
        %v2890 = vpow.pop %v2889
        %v2891 = vmul.f32 %v2804, 1.442695
        %v2892 = vpow.pop %v2891
        %v2893 = vmul.f32 %v2805, 1.442695
        %v2894 = vpow.pop %v2893
        %v2895 = vmul.f32 %v2806, 1.442695
        %v2896 = vpow.pop %v2895
        %v2897 = vmul.f32 %v2807, 1.442695
        %v2898 = vpow.pop %v2897
        %v2899 = vmul.f32 %v2808, 1.442695
        %v2900 = vpow.pop %v2899
        %v2901 = vmul.f32 %v2809, 1.442695
        %v2902 = vpow.pop %v2901
        %v2903 = vmul.f32 %v2810, 1.442695
        %v2904 = vpow.pop %v2903
        %v2905 = vmul.f32 %v2811, 1.442695
        %v2906 = vpow.pop %v2905
        %v2907 = vmul.f32 %v2812, 1.442695
        %v2908 = vpow.pop %v2907
        %v2909 = vmul.f32 %v2813, 1.442695
        %v2910 = vpow.pop %v2909
        %v2911 = vmul.f32 %v2814, 1.442695
        %v2912 = vpow.pop %v2911
        %v2913 = vmul.f32 %v2815, 1.442695
        %v2914 = vpow.pop %v2913
        %v2915 = vmul.f32 %v2816, 1.442695
        %v2916 = vpow.pop %v2915
        %v2917 = vmul.f32 %v2817, 1.442695
        %v2918 = vpow.pop %v2917
        %v2919 = vmul.f32 %v2818, 1.442695
        %v2920 = vpow.pop %v2919
        %v2921 = vmul.f32 %v2819, 1.442695
        %v2922 = vpow.pop %v2921
        %v2923 = vmul.f32 %v2820, 1.442695
        %v2924 = vpow.pop %v2923
        %v2925 = vmul.f32 %v2821, 1.442695
        %v2926 = vpow.pop %v2925
        %v2927 = vmul.f32 %v2822, 1.442695
        %v2928 = vpow.pop %v2927
        %v2929 = vmul.f32 %v2823, 1.442695
        %v2930 = vpow.pop %v2929
        %v2931 = vmul.f32 %v2824, 1.442695
        %v2932 = vpow.pop %v2931
        %v2933 = vmul.f32 %v2825, 1.442695
        %v2934 = vpow.pop %v2933
        %v2935 = vmul.f32 %v2826, 1.442695
        %v2936 = vpow.pop %v2935
        %v2937 = vmul.f32 %v2827, 1.442695
        %v2938 = vpow.pop %v2937
        %v2939 = vmul.f32 %v2828, 1.442695
        %v2940 = vpow.pop %v2939
        %v2941 = vmul.f32 %v2829, 1.442695
        %v2942 = vpow.pop %v2941
        %v2943 = vmul.f32 %v2830, 1.442695
        %v2944 = vpow.pop %v2943
        %v2945 = vmul.f32 %v2831, 1.442695
        %v2946 = vpow.pop %v2945
        %v2947 = vmul.f32 %v2832, 1.442695
        %v2948 = vpow.pop %v2947
        %v2949 = vmul.f32 %v2833, 1.442695
        %v2950 = vpow.pop %v2949
        %v2951 = vmul.f32 %v2834, 1.442695
        %v2952 = vpow.pop %v2951
        %v2953 = vmul.f32 %v2835, 1.442695
        %v2954 = vpow.pop %v2953
        %v2955 = vmul.f32 %v2836, 1.442695
        %v2956 = vpow.pop %v2955
        %v2957 = vmul.f32 %v2837, 1.442695
        %v2958 = vpow.pop %v2957
        %v2959 = vmul.f32 %v2838, 1.442695
        %v2960 = vpow.pop %v2959
        %v2961 = vmul.f32 %v2839, 1.442695
        %v2962 = vpow.pop %v2961
        %v2963 = vmul.f32 %v2840, 1.442695
        %v2964 = vpow.pop %v2963
        %v2965 = vmul.f32 %v2841, 1.442695
        %v2966 = vpow.pop %v2965
        %v2967 = vmul.f32 %v2842, 1.442695
        %v2968 = vpow.pop %v2967
        %v2969 = vmul.f32 %v2843, 1.442695
        %v2970 = vpow.pop %v2969
        %v2971 = vmul.f32 %v2844, 1.442695
        %v2972 = vpow.pop %v2971
        %v2973 = vadd.f32 %v2846, %v2848
        %2974 = vadd.xlane.f32.xlu0 %v2973
        %v2975 = vpop.xlane.xlu0 %2974
        %v2976 = vadd.f32 %v2850, %v2852
        %2977 = vadd.xlane.f32.xlu0 %v2976
        %v2978 = vpop.xlane.xlu0 %2977
        %v2979 = vadd.f32 %v2854, %v2856
        %2980 = vadd.xlane.f32.xlu0 %v2979
        %v2981 = vpop.xlane.xlu0 %2980
        %v2982 = vadd.f32 %v2858, %v2860
        %2983 = vadd.xlane.f32.xlu0 %v2982
        %v2984 = vpop.xlane.xlu0 %2983
        %v2985 = vadd.f32 %v2862, %v2864
        %2986 = vadd.xlane.f32.xlu0 %v2985
        %v2987 = vpop.xlane.xlu0 %2986
        %v2988 = vadd.f32 %v2866, %v2868
        %2989 = vadd.xlane.f32.xlu0 %v2988
        %v2990 = vpop.xlane.xlu0 %2989
        %v2991 = vadd.f32 %v2870, %v2872
        %2992 = vadd.xlane.f32.xlu0 %v2991
        %v2993 = vpop.xlane.xlu0 %2992
        %v2994 = vadd.f32 %v2874, %v2876
        %2995 = vadd.xlane.f32.xlu0 %v2994
        %v2996 = vpop.xlane.xlu0 %2995
        %v2997 = vadd.f32 %v2878, %v2880
        %2998 = vadd.xlane.f32.xlu0 %v2997
        %v2999 = vpop.xlane.xlu0 %2998
        %v3000 = vadd.f32 %v2882, %v2884
        %3001 = vadd.xlane.f32.xlu0 %v3000
        %v3002 = vpop.xlane.xlu0 %3001
        %v3003 = vadd.f32 %v2886, %v2888
        %3004 = vadd.xlane.f32.xlu0 %v3003
        %v3005 = vpop.xlane.xlu0 %3004
        %v3006 = vadd.f32 %v2890, %v2892
        %3007 = vadd.xlane.f32.xlu0 %v3006
        %v3008 = vpop.xlane.xlu0 %3007
        %v3009 = vadd.f32 %v2894, %v2896
        %3010 = vadd.xlane.f32.xlu0 %v3009
        %v3011 = vpop.xlane.xlu0 %3010
        %v3012 = vadd.f32 %v2898, %v2900
        %3013 = vadd.xlane.f32.xlu0 %v3012
        %v3014 = vpop.xlane.xlu0 %3013
        %v3015 = vadd.f32 %v2902, %v2904
        %3016 = vadd.xlane.f32.xlu0 %v3015
        %v3017 = vpop.xlane.xlu0 %3016
        %v3018 = vadd.f32 %v2906, %v2908
        %3019 = vadd.xlane.f32.xlu0 %v3018
        %v3020 = vpop.xlane.xlu0 %3019
        %v3021 = vadd.f32 %v2910, %v2912
        %3022 = vadd.xlane.f32.xlu0 %v3021
        %v3023 = vpop.xlane.xlu0 %3022
        %v3024 = vadd.f32 %v2914, %v2916
        %3025 = vadd.xlane.f32.xlu0 %v3024
        %v3026 = vpop.xlane.xlu0 %3025
        %v3027 = vadd.f32 %v2918, %v2920
        %3028 = vadd.xlane.f32.xlu0 %v3027
        %v3029 = vpop.xlane.xlu0 %3028
        %v3030 = vadd.f32 %v2922, %v2924
        %3031 = vadd.xlane.f32.xlu0 %v3030
        %v3032 = vpop.xlane.xlu0 %3031
        %v3033 = vadd.f32 %v2926, %v2928
        %3034 = vadd.xlane.f32.xlu0 %v3033
        %v3035 = vpop.xlane.xlu0 %3034
        %v3036 = vadd.f32 %v2930, %v2932
        %3037 = vadd.xlane.f32.xlu0 %v3036
        %v3038 = vpop.xlane.xlu0 %3037
        %v3039 = vadd.f32 %v2934, %v2936
        %3040 = vadd.xlane.f32.xlu0 %v3039
        %v3041 = vpop.xlane.xlu0 %3040
        %v3042 = vadd.f32 %v2938, %v2940
        %3043 = vadd.xlane.f32.xlu0 %v3042
        %v3044 = vpop.xlane.xlu0 %3043
        %v3045 = vadd.f32 %v2942, %v2944
        %3046 = vadd.xlane.f32.xlu0 %v3045
        %v3047 = vpop.xlane.xlu0 %3046
        %v3048 = vadd.f32 %v2946, %v2948
        %3049 = vadd.xlane.f32.xlu0 %v3048
        %v3050 = vpop.xlane.xlu0 %3049
        %v3051 = vadd.f32 %v2950, %v2952
        %3052 = vadd.xlane.f32.xlu0 %v3051
        %v3053 = vpop.xlane.xlu0 %3052
        %v3054 = vadd.f32 %v2954, %v2956
        %3055 = vadd.xlane.f32.xlu0 %v3054
        %v3056 = vpop.xlane.xlu0 %3055
        %v3057 = vadd.f32 %v2958, %v2960
        %3058 = vadd.xlane.f32.xlu0 %v3057
        %v3059 = vpop.xlane.xlu0 %3058
        %v3060 = vadd.f32 %v2962, %v2964
        %3061 = vadd.xlane.f32.xlu0 %v3060
        %v3062 = vpop.xlane.xlu0 %3061
        %v3063 = vadd.f32 %v2966, %v2968
        %3064 = vadd.xlane.f32.xlu0 %v3063
        %v3065 = vpop.xlane.xlu0 %3064
        %v3066 = vadd.f32 %v2970, %v2972
        %3067 = vadd.xlane.f32.xlu0 %v3066
        %v3068 = vpop.xlane.xlu0 %3067
        %v3069 = vrcp.pop %v2975
        %v3070 = vmul.f32 %v2975, %v3069
        %v3071 = vsub.f32 1.0, %v3070
        %v3072 = vmul.f32 %v3069, %v3071
        %v3073 = vadd.f32 %v3069, %v3072
        %vm3074 = vweird.f32 %v2975
        %vm3075 = vweird.f32 %v3069
        %vm3076 = vmor %vm3074, %vm3075
        %v3077 = vsel %vm3076, %v3069, %v3073
        %v3078 = vand.u32 2147483647, %v2975
        %vm3079 = vcmp.eq.f32.partialorder %v3078, 8.507059e+37
        %v3080 = vand.u32 %v2975, 2147483648
        %v3081 = vor.u32 1.1754944e-38, %v3080
        %v3082 = vsel %vm3079, %v3081, %v3077
        %v3083 = vrcp.pop %v2978
        %v3084 = vmul.f32 %v2978, %v3083
        %v3085 = vsub.f32 1.0, %v3084
        %v3086 = vmul.f32 %v3083, %v3085
        %v3087 = vadd.f32 %v3083, %v3086
        %vm3088 = vweird.f32 %v2978
        %vm3089 = vweird.f32 %v3083
        %vm3090 = vmor %vm3088, %vm3089
        %v3091 = vsel %vm3090, %v3083, %v3087
        %v3092 = vand.u32 2147483647, %v2978
        %vm3093 = vcmp.eq.f32.partialorder %v3092, 8.507059e+37
        %v3094 = vand.u32 %v2978, 2147483648
        %v3095 = vor.u32 1.1754944e-38, %v3094
        %v3096 = vsel %vm3093, %v3095, %v3091
        %v3097 = vrcp.pop %v2981
        %v3098 = vmul.f32 %v2981, %v3097
        %v3099 = vsub.f32 1.0, %v3098
        %v3100 = vmul.f32 %v3097, %v3099
        %v3101 = vadd.f32 %v3097, %v3100
        %vm3102 = vweird.f32 %v2981
        %vm3103 = vweird.f32 %v3097
        %vm3104 = vmor %vm3102, %vm3103
        %v3105 = vsel %vm3104, %v3097, %v3101
        %v3106 = vand.u32 2147483647, %v2981
        %vm3107 = vcmp.eq.f32.partialorder %v3106, 8.507059e+37
        %v3108 = vand.u32 %v2981, 2147483648
        %v3109 = vor.u32 1.1754944e-38, %v3108
        %v3110 = vsel %vm3107, %v3109, %v3105
        %v3111 = vrcp.pop %v2984
        %v3112 = vmul.f32 %v2984, %v3111
        %v3113 = vsub.f32 1.0, %v3112
        %v3114 = vmul.f32 %v3111, %v3113
        %v3115 = vadd.f32 %v3111, %v3114
        %vm3116 = vweird.f32 %v2984
        %vm3117 = vweird.f32 %v3111
        %vm3118 = vmor %vm3116, %vm3117
        %v3119 = vsel %vm3118, %v3111, %v3115
        %v3120 = vand.u32 2147483647, %v2984
        %vm3121 = vcmp.eq.f32.partialorder %v3120, 8.507059e+37
        %v3122 = vand.u32 %v2984, 2147483648
        %v3123 = vor.u32 1.1754944e-38, %v3122
        %v3124 = vsel %vm3121, %v3123, %v3119
        %v3125 = vrcp.pop %v2987
        %v3126 = vmul.f32 %v2987, %v3125
        %v3127 = vsub.f32 1.0, %v3126
        %v3128 = vmul.f32 %v3125, %v3127
        %v3129 = vadd.f32 %v3125, %v3128
        %vm3130 = vweird.f32 %v2987
        %vm3131 = vweird.f32 %v3125
        %vm3132 = vmor %vm3130, %vm3131
        %v3133 = vsel %vm3132, %v3125, %v3129
        %v3134 = vand.u32 2147483647, %v2987
        %vm3135 = vcmp.eq.f32.partialorder %v3134, 8.507059e+37
        %v3136 = vand.u32 %v2987, 2147483648
        %v3137 = vor.u32 1.1754944e-38, %v3136
        %v3138 = vsel %vm3135, %v3137, %v3133
        %v3139 = vrcp.pop %v2990
        %v3140 = vmul.f32 %v2990, %v3139
        %v3141 = vsub.f32 1.0, %v3140
        %v3142 = vmul.f32 %v3139, %v3141
        %v3143 = vadd.f32 %v3139, %v3142
        %vm3144 = vweird.f32 %v2990
        %vm3145 = vweird.f32 %v3139
        %vm3146 = vmor %vm3144, %vm3145
        %v3147 = vsel %vm3146, %v3139, %v3143
        %v3148 = vand.u32 2147483647, %v2990
        %vm3149 = vcmp.eq.f32.partialorder %v3148, 8.507059e+37
        %v3150 = vand.u32 %v2990, 2147483648
        %v3151 = vor.u32 1.1754944e-38, %v3150
        %v3152 = vsel %vm3149, %v3151, %v3147
        %v3153 = vrcp.pop %v2993
        %v3154 = vmul.f32 %v2993, %v3153
        %v3155 = vsub.f32 1.0, %v3154
        %v3156 = vmul.f32 %v3153, %v3155
        %v3157 = vadd.f32 %v3153, %v3156
        %vm3158 = vweird.f32 %v2993
        %vm3159 = vweird.f32 %v3153
        %vm3160 = vmor %vm3158, %vm3159
        %v3161 = vsel %vm3160, %v3153, %v3157
        %v3162 = vand.u32 2147483647, %v2993
        %vm3163 = vcmp.eq.f32.partialorder %v3162, 8.507059e+37
        %v3164 = vand.u32 %v2993, 2147483648
        %v3165 = vor.u32 1.1754944e-38, %v3164
        %v3166 = vsel %vm3163, %v3165, %v3161
        %v3167 = vrcp.pop %v2996
        %v3168 = vmul.f32 %v2996, %v3167
        %v3169 = vsub.f32 1.0, %v3168
        %v3170 = vmul.f32 %v3167, %v3169
        %v3171 = vadd.f32 %v3167, %v3170
        %vm3172 = vweird.f32 %v2996
        %vm3173 = vweird.f32 %v3167
        %vm3174 = vmor %vm3172, %vm3173
        %v3175 = vsel %vm3174, %v3167, %v3171
        %v3176 = vand.u32 2147483647, %v2996
        %vm3177 = vcmp.eq.f32.partialorder %v3176, 8.507059e+37
        %v3178 = vand.u32 %v2996, 2147483648
        %v3179 = vor.u32 1.1754944e-38, %v3178
        %v3180 = vsel %vm3177, %v3179, %v3175
        %v3181 = vrcp.pop %v2999
        %v3182 = vmul.f32 %v2999, %v3181
        %v3183 = vsub.f32 1.0, %v3182
        %v3184 = vmul.f32 %v3181, %v3183
        %v3185 = vadd.f32 %v3181, %v3184
        %vm3186 = vweird.f32 %v2999
        %vm3187 = vweird.f32 %v3181
        %vm3188 = vmor %vm3186, %vm3187
        %v3189 = vsel %vm3188, %v3181, %v3185
        %v3190 = vand.u32 2147483647, %v2999
        %vm3191 = vcmp.eq.f32.partialorder %v3190, 8.507059e+37
        %v3192 = vand.u32 %v2999, 2147483648
        %v3193 = vor.u32 1.1754944e-38, %v3192
        %v3194 = vsel %vm3191, %v3193, %v3189
        %v3195 = vrcp.pop %v3002
        %v3196 = vmul.f32 %v3002, %v3195
        %v3197 = vsub.f32 1.0, %v3196
        %v3198 = vmul.f32 %v3195, %v3197
        %v3199 = vadd.f32 %v3195, %v3198
        %vm3200 = vweird.f32 %v3002
        %vm3201 = vweird.f32 %v3195
        %vm3202 = vmor %vm3200, %vm3201
        %v3203 = vsel %vm3202, %v3195, %v3199
        %v3204 = vand.u32 2147483647, %v3002
        %vm3205 = vcmp.eq.f32.partialorder %v3204, 8.507059e+37
        %v3206 = vand.u32 %v3002, 2147483648
        %v3207 = vor.u32 1.1754944e-38, %v3206
        %v3208 = vsel %vm3205, %v3207, %v3203
        %v3209 = vrcp.pop %v3005
        %v3210 = vmul.f32 %v3005, %v3209
        %v3211 = vsub.f32 1.0, %v3210
        %v3212 = vmul.f32 %v3209, %v3211
        %v3213 = vadd.f32 %v3209, %v3212
        %vm3214 = vweird.f32 %v3005
        %vm3215 = vweird.f32 %v3209
        %vm3216 = vmor %vm3214, %vm3215
        %v3217 = vsel %vm3216, %v3209, %v3213
        %v3218 = vand.u32 2147483647, %v3005
        %vm3219 = vcmp.eq.f32.partialorder %v3218, 8.507059e+37
        %v3220 = vand.u32 %v3005, 2147483648
        %v3221 = vor.u32 1.1754944e-38, %v3220
        %v3222 = vsel %vm3219, %v3221, %v3217
        %v3223 = vrcp.pop %v3008
        %v3224 = vmul.f32 %v3008, %v3223
        %v3225 = vsub.f32 1.0, %v3224
        %v3226 = vmul.f32 %v3223, %v3225
        %v3227 = vadd.f32 %v3223, %v3226
        %vm3228 = vweird.f32 %v3008
        %vm3229 = vweird.f32 %v3223
        %vm3230 = vmor %vm3228, %vm3229
        %v3231 = vsel %vm3230, %v3223, %v3227
        %v3232 = vand.u32 2147483647, %v3008
        %vm3233 = vcmp.eq.f32.partialorder %v3232, 8.507059e+37
        %v3234 = vand.u32 %v3008, 2147483648
        %v3235 = vor.u32 1.1754944e-38, %v3234
        %v3236 = vsel %vm3233, %v3235, %v3231
        %v3237 = vrcp.pop %v3011
        %v3238 = vmul.f32 %v3011, %v3237
        %v3239 = vsub.f32 1.0, %v3238
        %v3240 = vmul.f32 %v3237, %v3239
        %v3241 = vadd.f32 %v3237, %v3240
        %vm3242 = vweird.f32 %v3011
        %vm3243 = vweird.f32 %v3237
        %vm3244 = vmor %vm3242, %vm3243
        %v3245 = vsel %vm3244, %v3237, %v3241
        %v3246 = vand.u32 2147483647, %v3011
        %vm3247 = vcmp.eq.f32.partialorder %v3246, 8.507059e+37
        %v3248 = vand.u32 %v3011, 2147483648
        %v3249 = vor.u32 1.1754944e-38, %v3248
        %v3250 = vsel %vm3247, %v3249, %v3245
        %v3251 = vrcp.pop %v3014
        %v3252 = vmul.f32 %v3014, %v3251
        %v3253 = vsub.f32 1.0, %v3252
        %v3254 = vmul.f32 %v3251, %v3253
        %v3255 = vadd.f32 %v3251, %v3254
        %vm3256 = vweird.f32 %v3014
        %vm3257 = vweird.f32 %v3251
        %vm3258 = vmor %vm3256, %vm3257
        %v3259 = vsel %vm3258, %v3251, %v3255
        %v3260 = vand.u32 2147483647, %v3014
        %vm3261 = vcmp.eq.f32.partialorder %v3260, 8.507059e+37
        %v3262 = vand.u32 %v3014, 2147483648
        %v3263 = vor.u32 1.1754944e-38, %v3262
        %v3264 = vsel %vm3261, %v3263, %v3259
        %v3265 = vrcp.pop %v3017
        %v3266 = vmul.f32 %v3017, %v3265
        %v3267 = vsub.f32 1.0, %v3266
        %v3268 = vmul.f32 %v3265, %v3267
        %v3269 = vadd.f32 %v3265, %v3268
        %vm3270 = vweird.f32 %v3017
        %vm3271 = vweird.f32 %v3265
        %vm3272 = vmor %vm3270, %vm3271
        %v3273 = vsel %vm3272, %v3265, %v3269
        %v3274 = vand.u32 2147483647, %v3017
        %vm3275 = vcmp.eq.f32.partialorder %v3274, 8.507059e+37
        %v3276 = vand.u32 %v3017, 2147483648
        %v3277 = vor.u32 1.1754944e-38, %v3276
        %v3278 = vsel %vm3275, %v3277, %v3273
        %v3279 = vrcp.pop %v3020
        %v3280 = vmul.f32 %v3020, %v3279
        %v3281 = vsub.f32 1.0, %v3280
        %v3282 = vmul.f32 %v3279, %v3281
        %v3283 = vadd.f32 %v3279, %v3282
        %vm3284 = vweird.f32 %v3020
        %vm3285 = vweird.f32 %v3279
        %vm3286 = vmor %vm3284, %vm3285
        %v3287 = vsel %vm3286, %v3279, %v3283
        %v3288 = vand.u32 2147483647, %v3020
        %vm3289 = vcmp.eq.f32.partialorder %v3288, 8.507059e+37
        %v3290 = vand.u32 %v3020, 2147483648
        %v3291 = vor.u32 1.1754944e-38, %v3290
        %v3292 = vsel %vm3289, %v3291, %v3287
        %v3293 = vrcp.pop %v3023
        %v3294 = vmul.f32 %v3023, %v3293
        %v3295 = vsub.f32 1.0, %v3294
        %v3296 = vmul.f32 %v3293, %v3295
        %v3297 = vadd.f32 %v3293, %v3296
        %vm3298 = vweird.f32 %v3023
        %vm3299 = vweird.f32 %v3293
        %vm3300 = vmor %vm3298, %vm3299
        %v3301 = vsel %vm3300, %v3293, %v3297
        %v3302 = vand.u32 2147483647, %v3023
        %vm3303 = vcmp.eq.f32.partialorder %v3302, 8.507059e+37
        %v3304 = vand.u32 %v3023, 2147483648
        %v3305 = vor.u32 1.1754944e-38, %v3304
        %v3306 = vsel %vm3303, %v3305, %v3301
        %v3307 = vrcp.pop %v3026
        %v3308 = vmul.f32 %v3026, %v3307
        %v3309 = vsub.f32 1.0, %v3308
        %v3310 = vmul.f32 %v3307, %v3309
        %v3311 = vadd.f32 %v3307, %v3310
        %vm3312 = vweird.f32 %v3026
        %vm3313 = vweird.f32 %v3307
        %vm3314 = vmor %vm3312, %vm3313
        %v3315 = vsel %vm3314, %v3307, %v3311
        %v3316 = vand.u32 2147483647, %v3026
        %vm3317 = vcmp.eq.f32.partialorder %v3316, 8.507059e+37
        %v3318 = vand.u32 %v3026, 2147483648
        %v3319 = vor.u32 1.1754944e-38, %v3318
        %v3320 = vsel %vm3317, %v3319, %v3315
        %v3321 = vrcp.pop %v3029
        %v3322 = vmul.f32 %v3029, %v3321
        %v3323 = vsub.f32 1.0, %v3322
        %v3324 = vmul.f32 %v3321, %v3323
        %v3325 = vadd.f32 %v3321, %v3324
        %vm3326 = vweird.f32 %v3029
        %vm3327 = vweird.f32 %v3321
        %vm3328 = vmor %vm3326, %vm3327
        %v3329 = vsel %vm3328, %v3321, %v3325
        %v3330 = vand.u32 2147483647, %v3029
        %vm3331 = vcmp.eq.f32.partialorder %v3330, 8.507059e+37
        %v3332 = vand.u32 %v3029, 2147483648
        %v3333 = vor.u32 1.1754944e-38, %v3332
        %v3334 = vsel %vm3331, %v3333, %v3329
        %v3335 = vrcp.pop %v3032
        %v3336 = vmul.f32 %v3032, %v3335
        %v3337 = vsub.f32 1.0, %v3336
        %v3338 = vmul.f32 %v3335, %v3337
        %v3339 = vadd.f32 %v3335, %v3338
        %vm3340 = vweird.f32 %v3032
        %vm3341 = vweird.f32 %v3335
        %vm3342 = vmor %vm3340, %vm3341
        %v3343 = vsel %vm3342, %v3335, %v3339
        %v3344 = vand.u32 2147483647, %v3032
        %vm3345 = vcmp.eq.f32.partialorder %v3344, 8.507059e+37
        %v3346 = vand.u32 %v3032, 2147483648
        %v3347 = vor.u32 1.1754944e-38, %v3346
        %v3348 = vsel %vm3345, %v3347, %v3343
        %v3349 = vrcp.pop %v3035
        %v3350 = vmul.f32 %v3035, %v3349
        %v3351 = vsub.f32 1.0, %v3350
        %v3352 = vmul.f32 %v3349, %v3351
        %v3353 = vadd.f32 %v3349, %v3352
        %vm3354 = vweird.f32 %v3035
        %vm3355 = vweird.f32 %v3349
        %vm3356 = vmor %vm3354, %vm3355
        %v3357 = vsel %vm3356, %v3349, %v3353
        %v3358 = vand.u32 2147483647, %v3035
        %vm3359 = vcmp.eq.f32.partialorder %v3358, 8.507059e+37
        %v3360 = vand.u32 %v3035, 2147483648
        %v3361 = vor.u32 1.1754944e-38, %v3360
        %v3362 = vsel %vm3359, %v3361, %v3357
        %v3363 = vrcp.pop %v3038
        %v3364 = vmul.f32 %v3038, %v3363
        %v3365 = vsub.f32 1.0, %v3364
        %v3366 = vmul.f32 %v3363, %v3365
        %v3367 = vadd.f32 %v3363, %v3366
        %vm3368 = vweird.f32 %v3038
        %vm3369 = vweird.f32 %v3363
        %vm3370 = vmor %vm3368, %vm3369
        %v3371 = vsel %vm3370, %v3363, %v3367
        %v3372 = vand.u32 2147483647, %v3038
        %vm3373 = vcmp.eq.f32.partialorder %v3372, 8.507059e+37
        %v3374 = vand.u32 %v3038, 2147483648
        %v3375 = vor.u32 1.1754944e-38, %v3374
        %v3376 = vsel %vm3373, %v3375, %v3371
        %v3377 = vrcp.pop %v3041
        %v3378 = vmul.f32 %v3041, %v3377
        %v3379 = vsub.f32 1.0, %v3378
        %v3380 = vmul.f32 %v3377, %v3379
        %v3381 = vadd.f32 %v3377, %v3380
        %vm3382 = vweird.f32 %v3041
        %vm3383 = vweird.f32 %v3377
        %vm3384 = vmor %vm3382, %vm3383
        %v3385 = vsel %vm3384, %v3377, %v3381
        %v3386 = vand.u32 2147483647, %v3041
        %vm3387 = vcmp.eq.f32.partialorder %v3386, 8.507059e+37
        %v3388 = vand.u32 %v3041, 2147483648
        %v3389 = vor.u32 1.1754944e-38, %v3388
        %v3390 = vsel %vm3387, %v3389, %v3385
        %v3391 = vrcp.pop %v3044
        %v3392 = vmul.f32 %v3044, %v3391
        %v3393 = vsub.f32 1.0, %v3392
        %v3394 = vmul.f32 %v3391, %v3393
        %v3395 = vadd.f32 %v3391, %v3394
        %vm3396 = vweird.f32 %v3044
        %vm3397 = vweird.f32 %v3391
        %vm3398 = vmor %vm3396, %vm3397
        %v3399 = vsel %vm3398, %v3391, %v3395
        %v3400 = vand.u32 2147483647, %v3044
        %vm3401 = vcmp.eq.f32.partialorder %v3400, 8.507059e+37
        %v3402 = vand.u32 %v3044, 2147483648
        %v3403 = vor.u32 1.1754944e-38, %v3402
        %v3404 = vsel %vm3401, %v3403, %v3399
        %v3405 = vrcp.pop %v3047
        %v3406 = vmul.f32 %v3047, %v3405
        %v3407 = vsub.f32 1.0, %v3406
        %v3408 = vmul.f32 %v3405, %v3407
        %v3409 = vadd.f32 %v3405, %v3408
        %vm3410 = vweird.f32 %v3047
        %vm3411 = vweird.f32 %v3405
        %vm3412 = vmor %vm3410, %vm3411
        %v3413 = vsel %vm3412, %v3405, %v3409
        %v3414 = vand.u32 2147483647, %v3047
        %vm3415 = vcmp.eq.f32.partialorder %v3414, 8.507059e+37
        %v3416 = vand.u32 %v3047, 2147483648
        %v3417 = vor.u32 1.1754944e-38, %v3416
        %v3418 = vsel %vm3415, %v3417, %v3413
        %v3419 = vrcp.pop %v3050
        %v3420 = vmul.f32 %v3050, %v3419
        %v3421 = vsub.f32 1.0, %v3420
        %v3422 = vmul.f32 %v3419, %v3421
        %v3423 = vadd.f32 %v3419, %v3422
        %vm3424 = vweird.f32 %v3050
        %vm3425 = vweird.f32 %v3419
        %vm3426 = vmor %vm3424, %vm3425
        %v3427 = vsel %vm3426, %v3419, %v3423
        %v3428 = vand.u32 2147483647, %v3050
        %vm3429 = vcmp.eq.f32.partialorder %v3428, 8.507059e+37
        %v3430 = vand.u32 %v3050, 2147483648
        %v3431 = vor.u32 1.1754944e-38, %v3430
        %v3432 = vsel %vm3429, %v3431, %v3427
        %v3433 = vrcp.pop %v3053
        %v3434 = vmul.f32 %v3053, %v3433
        %v3435 = vsub.f32 1.0, %v3434
        %v3436 = vmul.f32 %v3433, %v3435
        %v3437 = vadd.f32 %v3433, %v3436
        %vm3438 = vweird.f32 %v3053
        %vm3439 = vweird.f32 %v3433
        %vm3440 = vmor %vm3438, %vm3439
        %v3441 = vsel %vm3440, %v3433, %v3437
        %v3442 = vand.u32 2147483647, %v3053
        %vm3443 = vcmp.eq.f32.partialorder %v3442, 8.507059e+37
        %v3444 = vand.u32 %v3053, 2147483648
        %v3445 = vor.u32 1.1754944e-38, %v3444
        %v3446 = vsel %vm3443, %v3445, %v3441
        %v3447 = vrcp.pop %v3056
        %v3448 = vmul.f32 %v3056, %v3447
        %v3449 = vsub.f32 1.0, %v3448
        %v3450 = vmul.f32 %v3447, %v3449
        %v3451 = vadd.f32 %v3447, %v3450
        %vm3452 = vweird.f32 %v3056
        %vm3453 = vweird.f32 %v3447
        %vm3454 = vmor %vm3452, %vm3453
        %v3455 = vsel %vm3454, %v3447, %v3451
        %v3456 = vand.u32 2147483647, %v3056
        %vm3457 = vcmp.eq.f32.partialorder %v3456, 8.507059e+37
        %v3458 = vand.u32 %v3056, 2147483648
        %v3459 = vor.u32 1.1754944e-38, %v3458
        %v3460 = vsel %vm3457, %v3459, %v3455
        %v3461 = vrcp.pop %v3059
        %v3462 = vmul.f32 %v3059, %v3461
        %v3463 = vsub.f32 1.0, %v3462
        %v3464 = vmul.f32 %v3461, %v3463
        %v3465 = vadd.f32 %v3461, %v3464
        %vm3466 = vweird.f32 %v3059
        %vm3467 = vweird.f32 %v3461
        %vm3468 = vmor %vm3466, %vm3467
        %v3469 = vsel %vm3468, %v3461, %v3465
        %v3470 = vand.u32 2147483647, %v3059
        %vm3471 = vcmp.eq.f32.partialorder %v3470, 8.507059e+37
        %v3472 = vand.u32 %v3059, 2147483648
        %v3473 = vor.u32 1.1754944e-38, %v3472
        %v3474 = vsel %vm3471, %v3473, %v3469
        %v3475 = vrcp.pop %v3062
        %v3476 = vmul.f32 %v3062, %v3475
        %v3477 = vsub.f32 1.0, %v3476
        %v3478 = vmul.f32 %v3475, %v3477
        %v3479 = vadd.f32 %v3475, %v3478
        %vm3480 = vweird.f32 %v3062
        %vm3481 = vweird.f32 %v3475
        %vm3482 = vmor %vm3480, %vm3481
        %v3483 = vsel %vm3482, %v3475, %v3479
        %v3484 = vand.u32 2147483647, %v3062
        %vm3485 = vcmp.eq.f32.partialorder %v3484, 8.507059e+37
        %v3486 = vand.u32 %v3062, 2147483648
        %v3487 = vor.u32 1.1754944e-38, %v3486
        %v3488 = vsel %vm3485, %v3487, %v3483
        %v3489 = vrcp.pop %v3065
        %v3490 = vmul.f32 %v3065, %v3489
        %v3491 = vsub.f32 1.0, %v3490
        %v3492 = vmul.f32 %v3489, %v3491
        %v3493 = vadd.f32 %v3489, %v3492
        %vm3494 = vweird.f32 %v3065
        %vm3495 = vweird.f32 %v3489
        %vm3496 = vmor %vm3494, %vm3495
        %v3497 = vsel %vm3496, %v3489, %v3493
        %v3498 = vand.u32 2147483647, %v3065
        %vm3499 = vcmp.eq.f32.partialorder %v3498, 8.507059e+37
        %v3500 = vand.u32 %v3065, 2147483648
        %v3501 = vor.u32 1.1754944e-38, %v3500
        %v3502 = vsel %vm3499, %v3501, %v3497
        %v3503 = vrcp.pop %v3068
        %v3504 = vmul.f32 %v3068, %v3503
        %v3505 = vsub.f32 1.0, %v3504
        %v3506 = vmul.f32 %v3503, %v3505
        %v3507 = vadd.f32 %v3503, %v3506
        %vm3508 = vweird.f32 %v3068
        %vm3509 = vweird.f32 %v3503
        %vm3510 = vmor %vm3508, %vm3509
        %v3511 = vsel %vm3510, %v3503, %v3507
        %v3512 = vand.u32 2147483647, %v3068
        %vm3513 = vcmp.eq.f32.partialorder %v3512, 8.507059e+37
        %v3514 = vand.u32 %v3068, 2147483648
        %v3515 = vor.u32 1.1754944e-38, %v3514
        %v3516 = vsel %vm3513, %v3515, %v3511
        %v3517 = vmul.f32 %v2846, %v3082
        %v3518 = vmul.f32 %v2848, %v3082
        %v3519 = vmul.f32 %v2850, %v3096
        %v3520 = vmul.f32 %v2852, %v3096
        %v3521 = vmul.f32 %v2854, %v3110
        %v3522 = vmul.f32 %v2856, %v3110
        %v3523 = vmul.f32 %v2858, %v3124
        %v3524 = vmul.f32 %v2860, %v3124
        %v3525 = vmul.f32 %v2862, %v3138
        %v3526 = vmul.f32 %v2864, %v3138
        %v3527 = vmul.f32 %v2866, %v3152
        %v3528 = vmul.f32 %v2868, %v3152
        %v3529 = vmul.f32 %v2870, %v3166
        %v3530 = vmul.f32 %v2872, %v3166
        %v3531 = vmul.f32 %v2874, %v3180
        %v3532 = vmul.f32 %v2876, %v3180
        %v3533 = vmul.f32 %v2878, %v3194
        %v3534 = vmul.f32 %v2880, %v3194
        %v3535 = vmul.f32 %v2882, %v3208
        %v3536 = vmul.f32 %v2884, %v3208
        %v3537 = vmul.f32 %v2886, %v3222
        %v3538 = vmul.f32 %v2888, %v3222
        %v3539 = vmul.f32 %v2890, %v3236
        %v3540 = vmul.f32 %v2892, %v3236
        %v3541 = vmul.f32 %v2894, %v3250
        %v3542 = vmul.f32 %v2896, %v3250
        %v3543 = vmul.f32 %v2898, %v3264
        %v3544 = vmul.f32 %v2900, %v3264
        %v3545 = vmul.f32 %v2902, %v3278
        %v3546 = vmul.f32 %v2904, %v3278
        %v3547 = vmul.f32 %v2906, %v3292
        %v3548 = vmul.f32 %v2908, %v3292
        %v3549 = vmul.f32 %v2910, %v3306
        %v3550 = vmul.f32 %v2912, %v3306
        %v3551 = vmul.f32 %v2914, %v3320
        %v3552 = vmul.f32 %v2916, %v3320
        %v3553 = vmul.f32 %v2918, %v3334
        %v3554 = vmul.f32 %v2920, %v3334
        %v3555 = vmul.f32 %v2922, %v3348
        %v3556 = vmul.f32 %v2924, %v3348
        %v3557 = vmul.f32 %v2926, %v3362
        %v3558 = vmul.f32 %v2928, %v3362
        %v3559 = vmul.f32 %v2930, %v3376
        %v3560 = vmul.f32 %v2932, %v3376
        %v3561 = vmul.f32 %v2934, %v3390
        %v3562 = vmul.f32 %v2936, %v3390
        %v3563 = vmul.f32 %v2938, %v3404
        %v3564 = vmul.f32 %v2940, %v3404
        %v3565 = vmul.f32 %v2942, %v3418
        %v3566 = vmul.f32 %v2944, %v3418
        %v3567 = vmul.f32 %v2946, %v3432
        %v3568 = vmul.f32 %v2948, %v3432
        %v3569 = vmul.f32 %v2950, %v3446
        %v3570 = vmul.f32 %v2952, %v3446
        %v3571 = vmul.f32 %v2954, %v3460
        %v3572 = vmul.f32 %v2956, %v3460
        %v3573 = vmul.f32 %v2958, %v3474
        %v3574 = vmul.f32 %v2960, %v3474
        %v3575 = vmul.f32 %v2962, %v3488
        %v3576 = vmul.f32 %v2964, %v3488
        %v3577 = vmul.f32 %v2966, %v3502
        %v3578 = vmul.f32 %v2968, %v3502
        %v3579 = vmul.f32 %v2970, %v3516
        %v3580 = vmul.f32 %v2972, %v3516
        %3581 = vmatpush.xpose.msra.mxu0 %v3547
        %3582 = vmatpush.xpose.msra.mxu0 %v3545
        %3583 = vmatpush.xpose.msra.mxu0 %v3543
        %3584 = vmatpush.xpose.msra.mxu0 %v3541
        %3585 = vmatpush.xpose.msra.mxu0 %v3539
        %3586 = vmatpush.xpose.msra.mxu0 %v3537
        %3587 = vmatpush.xpose.msra.mxu0 %v3535
        %3588 = vmatpush.xpose.msra.mxu0 %v3533
        %3589 = vmatpush.xpose.msra.mxu0 %v3531
        %3590 = vmatpush.xpose.msra.mxu0 %v3529
        %3591 = vmatpush.xpose.msra.mxu0 %v3527
        %3592 = vmatpush.xpose.msra.mxu0 %v3525
        %3593 = vmatpush.xpose.msra.mxu0 %v3523
        %3594 = vmatpush.xpose.msra.mxu0 %v3521
        %3595 = vmatpush.xpose.msra.mxu0 %v3519
        %3596 = vmatpush.xpose.msra.mxu0 %v3517
        %3597 = vmatmul.f32.gmra.mxu0 %v2291
        %v3598 = vpop.f32.mrf.mxu0
        %v3599 = vadd.f32 0.0, %v3598
        %3600 = vmatmul.f32.gmra.mxu0 %v2293
        %v3601 = vpop.f32.mrf.mxu0
        %v3602 = vadd.f32 0.0, %v3601
        %3603 = vmatmul.f32.gmra.mxu0 %v2295
        %v3604 = vpop.f32.mrf.mxu0
        %v3605 = vadd.f32 0.0, %v3604
        %3606 = vmatmul.f32.gmra.mxu0 %v2297
        %v3607 = vpop.f32.mrf.mxu0
        %v3608 = vadd.f32 0.0, %v3607
        %3609 = vdwg.mxu0
        %3610 = vmatpush.xpose.msra.mxu0 %v3548
        %3611 = vmatpush.xpose.msra.mxu0 %v3546
        %3612 = vmatpush.xpose.msra.mxu0 %v3544
        %3613 = vmatpush.xpose.msra.mxu0 %v3542
        %3614 = vmatpush.xpose.msra.mxu0 %v3540
        %3615 = vmatpush.xpose.msra.mxu0 %v3538
        %3616 = vmatpush.xpose.msra.mxu0 %v3536
        %3617 = vmatpush.xpose.msra.mxu0 %v3534
        %3618 = vmatpush.xpose.msra.mxu0 %v3532
        %3619 = vmatpush.xpose.msra.mxu0 %v3530
        %3620 = vmatpush.xpose.msra.mxu0 %v3528
        %3621 = vmatpush.xpose.msra.mxu0 %v3526
        %3622 = vmatpush.xpose.msra.mxu0 %v3524
        %3623 = vmatpush.xpose.msra.mxu0 %v3522
        %3624 = vmatpush.xpose.msra.mxu0 %v3520
        %3625 = vmatpush.xpose.msra.mxu0 %v3518
        %3626 = vmatmul.f32.gmra.mxu0 %v2292
        %v3627 = vpop.f32.mrf.mxu0
        %v3628 = vadd.f32 %v3599, %v3627
        %3629 = vmatmul.f32.gmra.mxu0 %v2294
        %v3630 = vpop.f32.mrf.mxu0
        %v3631 = vadd.f32 %v3602, %v3630
        %3632 = vmatmul.f32.gmra.mxu0 %v2296
        %v3633 = vpop.f32.mrf.mxu0
        %v3634 = vadd.f32 %v3605, %v3633
        %3635 = vmatmul.f32.gmra.mxu0 %v2298
        %v3636 = vpop.f32.mrf.mxu0
        %v3637 = vadd.f32 %v3608, %v3636
        %3638 = vdwg.mxu0
        %3639 = vmatpush.xpose.msra.mxu0 %v3579
        %3640 = vmatpush.xpose.msra.mxu0 %v3577
        %3641 = vmatpush.xpose.msra.mxu0 %v3575
        %3642 = vmatpush.xpose.msra.mxu0 %v3573
        %3643 = vmatpush.xpose.msra.mxu0 %v3571
        %3644 = vmatpush.xpose.msra.mxu0 %v3569
        %3645 = vmatpush.xpose.msra.mxu0 %v3567
        %3646 = vmatpush.xpose.msra.mxu0 %v3565
        %3647 = vmatpush.xpose.msra.mxu0 %v3563
        %3648 = vmatpush.xpose.msra.mxu0 %v3561
        %3649 = vmatpush.xpose.msra.mxu0 %v3559
        %3650 = vmatpush.xpose.msra.mxu0 %v3557
        %3651 = vmatpush.xpose.msra.mxu0 %v3555
        %3652 = vmatpush.xpose.msra.mxu0 %v3553
        %3653 = vmatpush.xpose.msra.mxu0 %v3551
        %3654 = vmatpush.xpose.msra.mxu0 %v3549
        %3655 = vmatmul.f32.gmra.mxu0 %v2291
        %v3656 = vpop.f32.mrf.mxu0
        %v3657 = vadd.f32 0.0, %v3656
        %3658 = vmatmul.f32.gmra.mxu0 %v2293
        %v3659 = vpop.f32.mrf.mxu0
        %v3660 = vadd.f32 0.0, %v3659
        %3661 = vmatmul.f32.gmra.mxu0 %v2295
        %v3662 = vpop.f32.mrf.mxu0
        %v3663 = vadd.f32 0.0, %v3662
        %3664 = vmatmul.f32.gmra.mxu0 %v2297
        %v3665 = vpop.f32.mrf.mxu0
        %v3666 = vadd.f32 0.0, %v3665
        %3667 = vdwg.mxu0
        %3668 = vmatpush.xpose.msra.mxu0 %v3580
        %3669 = vmatpush.xpose.msra.mxu0 %v3578
        %3670 = vmatpush.xpose.msra.mxu0 %v3576
        %3671 = vmatpush.xpose.msra.mxu0 %v3574
        %3672 = vmatpush.xpose.msra.mxu0 %v3572
        %3673 = vmatpush.xpose.msra.mxu0 %v3570
        %3674 = vmatpush.xpose.msra.mxu0 %v3568
        %3675 = vmatpush.xpose.msra.mxu0 %v3566
        %3676 = vmatpush.xpose.msra.mxu0 %v3564
        %3677 = vmatpush.xpose.msra.mxu0 %v3562
        %3678 = vmatpush.xpose.msra.mxu0 %v3560
        %3679 = vmatpush.xpose.msra.mxu0 %v3558
        %3680 = vmatpush.xpose.msra.mxu0 %v3556
        %3681 = vmatpush.xpose.msra.mxu0 %v3554
        %3682 = vmatpush.xpose.msra.mxu0 %v3552
        %3683 = vmatpush.xpose.msra.mxu0 %v3550
        %3684 = vmatmul.f32.gmra.mxu0 %v2292
        %v3685 = vpop.f32.mrf.mxu0
        %v3686 = vadd.f32 %v3657, %v3685
        %3687 = vmatmul.f32.gmra.mxu0 %v2294
        %v3688 = vpop.f32.mrf.mxu0
        %v3689 = vadd.f32 %v3660, %v3688
        %3690 = vmatmul.f32.gmra.mxu0 %v2296
        %v3691 = vpop.f32.mrf.mxu0
        %v3692 = vadd.f32 %v3663, %v3691
        %3693 = vmatmul.f32.gmra.mxu0 %v2298
        %v3694 = vpop.f32.mrf.mxu0
        %v3695 = vadd.f32 %v3666, %v3694
        %3696 = vdwg.mxu0
        %s3697 = scalar_lea.vmem [#allocation2], 128
        %v3698 = vld [vmem:[%s3697] sm:$0xff]
        %v3699 = vld [vmem:[%s3697 + $0x8] sm:$0xff]
        %v3700 = vld [vmem:[%s3697 + $0x10] sm:$0xff]
        %v3701 = vld [vmem:[%s3697 + $0x18] sm:$0xff]
        %v3702 = vld [vmem:[%s3697 + $0x20] sm:$0xff]
        %v3703 = vld [vmem:[%s3697 + $0x28] sm:$0xff]
        %v3704 = vld [vmem:[%s3697 + $0x30] sm:$0xff]
        %v3705 = vld [vmem:[%s3697 + $0x38] sm:$0xff]
        %s3706 = scalar_lea.vmem [#allocation2], 384
        %v3707 = vld [vmem:[%s3706] sm:$0xff]
        %v3708 = vld [vmem:[%s3706 + $0x8] sm:$0xff]
        %v3709 = vld [vmem:[%s3706 + $0x10] sm:$0xff]
        %v3710 = vld [vmem:[%s3706 + $0x18] sm:$0xff]
        %v3711 = vld [vmem:[%s3706 + $0x20] sm:$0xff]
        %v3712 = vld [vmem:[%s3706 + $0x28] sm:$0xff]
        %v3713 = vld [vmem:[%s3706 + $0x30] sm:$0xff]
        %v3714 = vld [vmem:[%s3706 + $0x38] sm:$0xff]
        %3715 = vxpose.xlu0.b32.start [1/16] %v777, 128
        %3716 = vxpose.xlu0.b32.cont [2/16] %v780, 128
        %3717 = vxpose.xlu0.b32.cont [3/16] %v783, 128
        %3718 = vxpose.xlu0.b32.cont [4/16] %v786, 128
        %3719 = vxpose.xlu0.b32.cont [5/16] 0.0, 128
        %3720 = vxpose.xlu0.b32.cont [6/16] 0.0, 128
        %3721 = vxpose.xlu0.b32.cont [7/16] 0.0, 128
        %3722 = vxpose.xlu0.b32.cont [8/16] 0.0, 128
        %3723 = vxpose.xlu0.b32.cont [9/16] 0.0, 128
        %3724 = vxpose.xlu0.b32.cont [10/16] 0.0, 128
        %3725 = vxpose.xlu0.b32.cont [11/16] 0.0, 128
        %3726 = vxpose.xlu0.b32.cont [12/16] 0.0, 128
        %3727 = vxpose.xlu0.b32.cont [13/16] 0.0, 128
        %3728 = vxpose.xlu0.b32.cont [14/16] 0.0, 128
        %3729 = vxpose.xlu0.b32.cont [15/16] 0.0, 128
        %3730 = vxpose.xlu0.b32.end [16/16] 0.0, 128
        %v3731 = vpop.trf.xlu0
        %v3732 = vpop.trf.xlu0
        %v3733 = vpop.trf.xlu0
        %v3734 = vpop.trf.xlu0
        %v3735 = vpop.trf.xlu0
        %v3736 = vpop.trf.xlu0
        %v3737 = vpop.trf.xlu0
        %v3738 = vpop.trf.xlu0
        %v3739 = vpop.trf.xlu0
        %v3740 = vpop.trf.xlu0
        %v3741 = vpop.trf.xlu0
        %v3742 = vpop.trf.xlu0
        %v3743 = vpop.trf.xlu0
        %v3744 = vpop.trf.xlu0
        %v3745 = vpop.trf.xlu0
        %v3746 = vpop.trf.xlu0
        %3747 = vxpose.xlu0.b32.start [1/16] %v842, 128
        %3748 = vxpose.xlu0.b32.cont [2/16] %v845, 128
        %3749 = vxpose.xlu0.b32.cont [3/16] %v848, 128
        %3750 = vxpose.xlu0.b32.cont [4/16] %v851, 128
        %3751 = vxpose.xlu0.b32.cont [5/16] 0.0, 128
        %3752 = vxpose.xlu0.b32.cont [6/16] 0.0, 128
        %3753 = vxpose.xlu0.b32.cont [7/16] 0.0, 128
        %3754 = vxpose.xlu0.b32.cont [8/16] 0.0, 128
        %3755 = vxpose.xlu0.b32.cont [9/16] 0.0, 128
        %3756 = vxpose.xlu0.b32.cont [10/16] 0.0, 128
        %3757 = vxpose.xlu0.b32.cont [11/16] 0.0, 128
        %3758 = vxpose.xlu0.b32.cont [12/16] 0.0, 128
        %3759 = vxpose.xlu0.b32.cont [13/16] 0.0, 128
        %3760 = vxpose.xlu0.b32.cont [14/16] 0.0, 128
        %3761 = vxpose.xlu0.b32.cont [15/16] 0.0, 128
        %3762 = vxpose.xlu0.b32.end [16/16] 0.0, 128
        %v3763 = vpop.trf.xlu0
        %v3764 = vpop.trf.xlu0
        %v3765 = vpop.trf.xlu0
        %v3766 = vpop.trf.xlu0
        %v3767 = vpop.trf.xlu0
        %v3768 = vpop.trf.xlu0
        %v3769 = vpop.trf.xlu0
        %v3770 = vpop.trf.xlu0
        %v3771 = vpop.trf.xlu0
        %v3772 = vpop.trf.xlu0
        %v3773 = vpop.trf.xlu0
        %v3774 = vpop.trf.xlu0
        %v3775 = vpop.trf.xlu0
        %v3776 = vpop.trf.xlu0
        %v3777 = vpop.trf.xlu0
        %v3778 = vpop.trf.xlu0
        %v3780 = vsel %vm946, %v3731, 0
        %v3783 = vsel %vm946, %v3732, 0
        %v3786 = vsel %vm946, %v3733, 0
        %v3789 = vsel %vm946, %v3734, 0
        %v3792 = vsel %vm946, %v3735, 0
        %v3795 = vsel %vm946, %v3736, 0
        %v3798 = vsel %vm946, %v3737, 0
        %v3801 = vsel %vm946, %v3738, 0
        %v3804 = vsel %vm946, %v3739, 0
        %v3807 = vsel %vm946, %v3740, 0
        %v3810 = vsel %vm946, %v3741, 0
        %v3813 = vsel %vm946, %v3742, 0
        %v3816 = vsel %vm946, %v3743, 0
        %v3819 = vsel %vm946, %v3744, 0
        %v3822 = vsel %vm946, %v3745, 0
        %v3825 = vsel %vm946, %v3746, 0
        %v3828 = vsel %vm946, %v3763, 0
        %v3831 = vsel %vm946, %v3764, 0
        %v3834 = vsel %vm946, %v3765, 0
        %v3837 = vsel %vm946, %v3766, 0
        %v3840 = vsel %vm946, %v3767, 0
        %v3843 = vsel %vm946, %v3768, 0
        %v3846 = vsel %vm946, %v3769, 0
        %v3849 = vsel %vm946, %v3770, 0
        %v3852 = vsel %vm946, %v3771, 0
        %v3855 = vsel %vm946, %v3772, 0
        %v3858 = vsel %vm946, %v3773, 0
        %v3861 = vsel %vm946, %v3774, 0
        %v3864 = vsel %vm946, %v3775, 0
        %v3867 = vsel %vm946, %v3776, 0
        %v3870 = vsel %vm946, %v3777, 0
        %v3873 = vsel %vm946, %v3778, 0
        %3875 = vmatpush.msra.mxu0 0.0
        %3876 = vmatpush.msra.mxu0 0.0
        %3877 = vmatpush.msra.mxu0 0.0
        %3878 = vmatpush.msra.mxu0 0.0
        %3879 = vmatpush.msra.mxu0 0.0
        %3880 = vmatpush.msra.mxu0 0.0
        %3881 = vmatpush.msra.mxu0 0.0
        %3882 = vmatpush.msra.mxu0 0.0
        %3883 = vmatpush.msra.mxu0 0.0
        %3884 = vmatpush.msra.mxu0 0.0
        %3885 = vmatpush.msra.mxu0 0.0
        %3886 = vmatpush.msra.mxu0 0.0
        %3887 = vmatpush.msra.mxu0 %v3704
        %3888 = vmatpush.msra.mxu0 %v3702
        %3889 = vmatpush.msra.mxu0 %v3700
        %3890 = vmatpush.msra.mxu0 %v3698
        %3891 = vmatmul.f32.gmra.mxu0 %v3780
        %v3892 = vpop.f32.mrf.mxu0
        %v3893 = vadd.f32 0.0, %v3892
        %3894 = vmatmul.f32.gmra.mxu0 %v3783
        %v3895 = vpop.f32.mrf.mxu0
        %v3896 = vadd.f32 0.0, %v3895
        %3897 = vmatmul.f32.gmra.mxu0 %v3786
        %v3898 = vpop.f32.mrf.mxu0
        %v3899 = vadd.f32 0.0, %v3898
        %3900 = vmatmul.f32.gmra.mxu0 %v3789
        %v3901 = vpop.f32.mrf.mxu0
        %v3902 = vadd.f32 0.0, %v3901
        %3903 = vmatmul.f32.gmra.mxu0 %v3792
        %v3904 = vpop.f32.mrf.mxu0
        %v3905 = vadd.f32 0.0, %v3904
        %3906 = vmatmul.f32.gmra.mxu0 %v3795
        %v3907 = vpop.f32.mrf.mxu0
        %v3908 = vadd.f32 0.0, %v3907
        %3909 = vmatmul.f32.gmra.mxu0 %v3798
        %v3910 = vpop.f32.mrf.mxu0
        %v3911 = vadd.f32 0.0, %v3910
        %3912 = vmatmul.f32.gmra.mxu0 %v3801
        %v3913 = vpop.f32.mrf.mxu0
        %v3914 = vadd.f32 0.0, %v3913
        %3915 = vmatmul.f32.gmra.mxu0 %v3804
        %v3916 = vpop.f32.mrf.mxu0
        %v3917 = vadd.f32 0.0, %v3916
        %3918 = vmatmul.f32.gmra.mxu0 %v3807
        %v3919 = vpop.f32.mrf.mxu0
        %v3920 = vadd.f32 0.0, %v3919
        %3921 = vmatmul.f32.gmra.mxu0 %v3810
        %v3922 = vpop.f32.mrf.mxu0
        %v3923 = vadd.f32 0.0, %v3922
        %3924 = vmatmul.f32.gmra.mxu0 %v3813
        %v3925 = vpop.f32.mrf.mxu0
        %v3926 = vadd.f32 0.0, %v3925
        %3927 = vmatmul.f32.gmra.mxu0 %v3816
        %v3928 = vpop.f32.mrf.mxu0
        %v3929 = vadd.f32 0.0, %v3928
        %3930 = vmatmul.f32.gmra.mxu0 %v3819
        %v3931 = vpop.f32.mrf.mxu0
        %v3932 = vadd.f32 0.0, %v3931
        %3933 = vmatmul.f32.gmra.mxu0 %v3822
        %v3934 = vpop.f32.mrf.mxu0
        %v3935 = vadd.f32 0.0, %v3934
        %3936 = vmatmul.f32.gmra.mxu0 %v3825
        %v3937 = vpop.f32.mrf.mxu0
        %v3938 = vadd.f32 0.0, %v3937
        %3939 = vmatmul.f32.gmra.mxu0 %v3828
        %v3940 = vpop.f32.mrf.mxu0
        %v3941 = vadd.f32 0.0, %v3940
        %3942 = vmatmul.f32.gmra.mxu0 %v3831
        %v3943 = vpop.f32.mrf.mxu0
        %v3944 = vadd.f32 0.0, %v3943
        %3945 = vmatmul.f32.gmra.mxu0 %v3834
        %v3946 = vpop.f32.mrf.mxu0
        %v3947 = vadd.f32 0.0, %v3946
        %3948 = vmatmul.f32.gmra.mxu0 %v3837
        %v3949 = vpop.f32.mrf.mxu0
        %v3950 = vadd.f32 0.0, %v3949
        %3951 = vmatmul.f32.gmra.mxu0 %v3840
        %v3952 = vpop.f32.mrf.mxu0
        %v3953 = vadd.f32 0.0, %v3952
        %3954 = vmatmul.f32.gmra.mxu0 %v3843
        %v3955 = vpop.f32.mrf.mxu0
        %v3956 = vadd.f32 0.0, %v3955
        %3957 = vmatmul.f32.gmra.mxu0 %v3846
        %v3958 = vpop.f32.mrf.mxu0
        %v3959 = vadd.f32 0.0, %v3958
        %3960 = vmatmul.f32.gmra.mxu0 %v3849
        %v3961 = vpop.f32.mrf.mxu0
        %v3962 = vadd.f32 0.0, %v3961
        %3963 = vmatmul.f32.gmra.mxu0 %v3852
        %v3964 = vpop.f32.mrf.mxu0
        %v3965 = vadd.f32 0.0, %v3964
        %3966 = vmatmul.f32.gmra.mxu0 %v3855
        %v3967 = vpop.f32.mrf.mxu0
        %v3968 = vadd.f32 0.0, %v3967
        %3969 = vmatmul.f32.gmra.mxu0 %v3858
        %v3970 = vpop.f32.mrf.mxu0
        %v3971 = vadd.f32 0.0, %v3970
        %3972 = vmatmul.f32.gmra.mxu0 %v3861
        %v3973 = vpop.f32.mrf.mxu0
        %v3974 = vadd.f32 0.0, %v3973
        %3975 = vmatmul.f32.gmra.mxu0 %v3864
        %v3976 = vpop.f32.mrf.mxu0
        %v3977 = vadd.f32 0.0, %v3976
        %3978 = vmatmul.f32.gmra.mxu0 %v3867
        %v3979 = vpop.f32.mrf.mxu0
        %v3980 = vadd.f32 0.0, %v3979
        %3981 = vmatmul.f32.gmra.mxu0 %v3870
        %v3982 = vpop.f32.mrf.mxu0
        %v3983 = vadd.f32 0.0, %v3982
        %3984 = vmatmul.f32.gmra.mxu0 %v3873
        %v3985 = vpop.f32.mrf.mxu0
        %v3986 = vadd.f32 0.0, %v3985
        %3987 = vdwg.mxu0
        %3988 = vmatpush.msra.mxu0 0.0
        %3989 = vmatpush.msra.mxu0 0.0
        %3990 = vmatpush.msra.mxu0 0.0
        %3991 = vmatpush.msra.mxu0 0.0
        %3992 = vmatpush.msra.mxu0 0.0
        %3993 = vmatpush.msra.mxu0 0.0
        %3994 = vmatpush.msra.mxu0 0.0
        %3995 = vmatpush.msra.mxu0 0.0
        %3996 = vmatpush.msra.mxu0 0.0
        %3997 = vmatpush.msra.mxu0 0.0
        %3998 = vmatpush.msra.mxu0 0.0
        %3999 = vmatpush.msra.mxu0 0.0
        %4000 = vmatpush.msra.mxu0 %v3705
        %4001 = vmatpush.msra.mxu0 %v3703
        %4002 = vmatpush.msra.mxu0 %v3701
        %4003 = vmatpush.msra.mxu0 %v3699
        %4004 = vmatmul.f32.gmra.mxu0 %v3780
        %v4005 = vpop.f32.mrf.mxu0
        %v4006 = vadd.f32 0.0, %v4005
        %4007 = vmatmul.f32.gmra.mxu0 %v3783
        %v4008 = vpop.f32.mrf.mxu0
        %v4009 = vadd.f32 0.0, %v4008
        %4010 = vmatmul.f32.gmra.mxu0 %v3786
        %v4011 = vpop.f32.mrf.mxu0
        %v4012 = vadd.f32 0.0, %v4011
        %4013 = vmatmul.f32.gmra.mxu0 %v3789
        %v4014 = vpop.f32.mrf.mxu0
        %v4015 = vadd.f32 0.0, %v4014
        %4016 = vmatmul.f32.gmra.mxu0 %v3792
        %v4017 = vpop.f32.mrf.mxu0
        %v4018 = vadd.f32 0.0, %v4017
        %4019 = vmatmul.f32.gmra.mxu0 %v3795
        %v4020 = vpop.f32.mrf.mxu0
        %v4021 = vadd.f32 0.0, %v4020
        %4022 = vmatmul.f32.gmra.mxu0 %v3798
        %v4023 = vpop.f32.mrf.mxu0
        %v4024 = vadd.f32 0.0, %v4023
        %4025 = vmatmul.f32.gmra.mxu0 %v3801
        %v4026 = vpop.f32.mrf.mxu0
        %v4027 = vadd.f32 0.0, %v4026
        %4028 = vmatmul.f32.gmra.mxu0 %v3804
        %v4029 = vpop.f32.mrf.mxu0
        %v4030 = vadd.f32 0.0, %v4029
        %4031 = vmatmul.f32.gmra.mxu0 %v3807
        %v4032 = vpop.f32.mrf.mxu0
        %v4033 = vadd.f32 0.0, %v4032
        %4034 = vmatmul.f32.gmra.mxu0 %v3810
        %v4035 = vpop.f32.mrf.mxu0
        %v4036 = vadd.f32 0.0, %v4035
        %4037 = vmatmul.f32.gmra.mxu0 %v3813
        %v4038 = vpop.f32.mrf.mxu0
        %v4039 = vadd.f32 0.0, %v4038
        %4040 = vmatmul.f32.gmra.mxu0 %v3816
        %v4041 = vpop.f32.mrf.mxu0
        %v4042 = vadd.f32 0.0, %v4041
        %4043 = vmatmul.f32.gmra.mxu0 %v3819
        %v4044 = vpop.f32.mrf.mxu0
        %v4045 = vadd.f32 0.0, %v4044
        %4046 = vmatmul.f32.gmra.mxu0 %v3822
        %v4047 = vpop.f32.mrf.mxu0
        %v4048 = vadd.f32 0.0, %v4047
        %4049 = vmatmul.f32.gmra.mxu0 %v3825
        %v4050 = vpop.f32.mrf.mxu0
        %v4051 = vadd.f32 0.0, %v4050
        %4052 = vmatmul.f32.gmra.mxu0 %v3828
        %v4053 = vpop.f32.mrf.mxu0
        %v4054 = vadd.f32 0.0, %v4053
        %4055 = vmatmul.f32.gmra.mxu0 %v3831
        %v4056 = vpop.f32.mrf.mxu0
        %v4057 = vadd.f32 0.0, %v4056
        %4058 = vmatmul.f32.gmra.mxu0 %v3834
        %v4059 = vpop.f32.mrf.mxu0
        %v4060 = vadd.f32 0.0, %v4059
        %4061 = vmatmul.f32.gmra.mxu0 %v3837
        %v4062 = vpop.f32.mrf.mxu0
        %v4063 = vadd.f32 0.0, %v4062
        %4064 = vmatmul.f32.gmra.mxu0 %v3840
        %v4065 = vpop.f32.mrf.mxu0
        %v4066 = vadd.f32 0.0, %v4065
        %4067 = vmatmul.f32.gmra.mxu0 %v3843
        %v4068 = vpop.f32.mrf.mxu0
        %v4069 = vadd.f32 0.0, %v4068
        %4070 = vmatmul.f32.gmra.mxu0 %v3846
        %v4071 = vpop.f32.mrf.mxu0
        %v4072 = vadd.f32 0.0, %v4071
        %4073 = vmatmul.f32.gmra.mxu0 %v3849
        %v4074 = vpop.f32.mrf.mxu0
        %v4075 = vadd.f32 0.0, %v4074
        %4076 = vmatmul.f32.gmra.mxu0 %v3852
        %v4077 = vpop.f32.mrf.mxu0
        %v4078 = vadd.f32 0.0, %v4077
        %4079 = vmatmul.f32.gmra.mxu0 %v3855
        %v4080 = vpop.f32.mrf.mxu0
        %v4081 = vadd.f32 0.0, %v4080
        %4082 = vmatmul.f32.gmra.mxu0 %v3858
        %v4083 = vpop.f32.mrf.mxu0
        %v4084 = vadd.f32 0.0, %v4083
        %4085 = vmatmul.f32.gmra.mxu0 %v3861
        %v4086 = vpop.f32.mrf.mxu0
        %v4087 = vadd.f32 0.0, %v4086
        %4088 = vmatmul.f32.gmra.mxu0 %v3864
        %v4089 = vpop.f32.mrf.mxu0
        %v4090 = vadd.f32 0.0, %v4089
        %4091 = vmatmul.f32.gmra.mxu0 %v3867
        %v4092 = vpop.f32.mrf.mxu0
        %v4093 = vadd.f32 0.0, %v4092
        %4094 = vmatmul.f32.gmra.mxu0 %v3870
        %v4095 = vpop.f32.mrf.mxu0
        %v4096 = vadd.f32 0.0, %v4095
        %4097 = vmatmul.f32.gmra.mxu0 %v3873
        %v4098 = vpop.f32.mrf.mxu0
        %v4099 = vadd.f32 0.0, %v4098
        %4100 = vdwg.mxu0
        %v4101 = vmax.f32 %v3893, %v4006
        %4102 = vmax.xlane.f32.xlu0 %v4101
        %v4103 = vpop.xlane.xlu0 %4102
        %v4104 = vmax.f32 %v3896, %v4009
        %4105 = vmax.xlane.f32.xlu0 %v4104
        %v4106 = vpop.xlane.xlu0 %4105
        %v4107 = vmax.f32 %v3899, %v4012
        %4108 = vmax.xlane.f32.xlu0 %v4107
        %v4109 = vpop.xlane.xlu0 %4108
        %v4110 = vmax.f32 %v3902, %v4015
        %4111 = vmax.xlane.f32.xlu0 %v4110
        %v4112 = vpop.xlane.xlu0 %4111
        %v4113 = vmax.f32 %v3905, %v4018
        %4114 = vmax.xlane.f32.xlu0 %v4113
        %v4115 = vpop.xlane.xlu0 %4114
        %v4116 = vmax.f32 %v3908, %v4021
        %4117 = vmax.xlane.f32.xlu0 %v4116
        %v4118 = vpop.xlane.xlu0 %4117
        %v4119 = vmax.f32 %v3911, %v4024
        %4120 = vmax.xlane.f32.xlu0 %v4119
        %v4121 = vpop.xlane.xlu0 %4120
        %v4122 = vmax.f32 %v3914, %v4027
        %4123 = vmax.xlane.f32.xlu0 %v4122
        %v4124 = vpop.xlane.xlu0 %4123
        %v4125 = vmax.f32 %v3917, %v4030
        %4126 = vmax.xlane.f32.xlu0 %v4125
        %v4127 = vpop.xlane.xlu0 %4126
        %v4128 = vmax.f32 %v3920, %v4033
        %4129 = vmax.xlane.f32.xlu0 %v4128
        %v4130 = vpop.xlane.xlu0 %4129
        %v4131 = vmax.f32 %v3923, %v4036
        %4132 = vmax.xlane.f32.xlu0 %v4131
        %v4133 = vpop.xlane.xlu0 %4132
        %v4134 = vmax.f32 %v3926, %v4039
        %4135 = vmax.xlane.f32.xlu0 %v4134
        %v4136 = vpop.xlane.xlu0 %4135
        %v4137 = vmax.f32 %v3929, %v4042
        %4138 = vmax.xlane.f32.xlu0 %v4137
        %v4139 = vpop.xlane.xlu0 %4138
        %v4140 = vmax.f32 %v3932, %v4045
        %4141 = vmax.xlane.f32.xlu0 %v4140
        %v4142 = vpop.xlane.xlu0 %4141
        %v4143 = vmax.f32 %v3935, %v4048
        %4144 = vmax.xlane.f32.xlu0 %v4143
        %v4145 = vpop.xlane.xlu0 %4144
        %v4146 = vmax.f32 %v3938, %v4051
        %4147 = vmax.xlane.f32.xlu0 %v4146
        %v4148 = vpop.xlane.xlu0 %4147
        %v4149 = vmax.f32 %v3941, %v4054
        %4150 = vmax.xlane.f32.xlu0 %v4149
        %v4151 = vpop.xlane.xlu0 %4150
        %v4152 = vmax.f32 %v3944, %v4057
        %4153 = vmax.xlane.f32.xlu0 %v4152
        %v4154 = vpop.xlane.xlu0 %4153
        %v4155 = vmax.f32 %v3947, %v4060
        %4156 = vmax.xlane.f32.xlu0 %v4155
        %v4157 = vpop.xlane.xlu0 %4156
        %v4158 = vmax.f32 %v3950, %v4063
        %4159 = vmax.xlane.f32.xlu0 %v4158
        %v4160 = vpop.xlane.xlu0 %4159
        %v4161 = vmax.f32 %v3953, %v4066
        %4162 = vmax.xlane.f32.xlu0 %v4161
        %v4163 = vpop.xlane.xlu0 %4162
        %v4164 = vmax.f32 %v3956, %v4069
        %4165 = vmax.xlane.f32.xlu0 %v4164
        %v4166 = vpop.xlane.xlu0 %4165
        %v4167 = vmax.f32 %v3959, %v4072
        %4168 = vmax.xlane.f32.xlu0 %v4167
        %v4169 = vpop.xlane.xlu0 %4168
        %v4170 = vmax.f32 %v3962, %v4075
        %4171 = vmax.xlane.f32.xlu0 %v4170
        %v4172 = vpop.xlane.xlu0 %4171
        %v4173 = vmax.f32 %v3965, %v4078
        %4174 = vmax.xlane.f32.xlu0 %v4173
        %v4175 = vpop.xlane.xlu0 %4174
        %v4176 = vmax.f32 %v3968, %v4081
        %4177 = vmax.xlane.f32.xlu0 %v4176
        %v4178 = vpop.xlane.xlu0 %4177
        %v4179 = vmax.f32 %v3971, %v4084
        %4180 = vmax.xlane.f32.xlu0 %v4179
        %v4181 = vpop.xlane.xlu0 %4180
        %v4182 = vmax.f32 %v3974, %v4087
        %4183 = vmax.xlane.f32.xlu0 %v4182
        %v4184 = vpop.xlane.xlu0 %4183
        %v4185 = vmax.f32 %v3977, %v4090
        %4186 = vmax.xlane.f32.xlu0 %v4185
        %v4187 = vpop.xlane.xlu0 %4186
        %v4188 = vmax.f32 %v3980, %v4093
        %4189 = vmax.xlane.f32.xlu0 %v4188
        %v4190 = vpop.xlane.xlu0 %4189
        %v4191 = vmax.f32 %v3983, %v4096
        %4192 = vmax.xlane.f32.xlu0 %v4191
        %v4193 = vpop.xlane.xlu0 %4192
        %v4194 = vmax.f32 %v3986, %v4099
        %4195 = vmax.xlane.f32.xlu0 %v4194
        %v4196 = vpop.xlane.xlu0 %4195
        %v4197 = vsub.f32 %v3893, %v4103
        %v4198 = vsub.f32 %v4006, %v4103
        %v4199 = vsub.f32 %v3896, %v4106
        %v4200 = vsub.f32 %v4009, %v4106
        %v4201 = vsub.f32 %v3899, %v4109
        %v4202 = vsub.f32 %v4012, %v4109
        %v4203 = vsub.f32 %v3902, %v4112
        %v4204 = vsub.f32 %v4015, %v4112
        %v4205 = vsub.f32 %v3905, %v4115
        %v4206 = vsub.f32 %v4018, %v4115
        %v4207 = vsub.f32 %v3908, %v4118
        %v4208 = vsub.f32 %v4021, %v4118
        %v4209 = vsub.f32 %v3911, %v4121
        %v4210 = vsub.f32 %v4024, %v4121
        %v4211 = vsub.f32 %v3914, %v4124
        %v4212 = vsub.f32 %v4027, %v4124
        %v4213 = vsub.f32 %v3917, %v4127
        %v4214 = vsub.f32 %v4030, %v4127
        %v4215 = vsub.f32 %v3920, %v4130
        %v4216 = vsub.f32 %v4033, %v4130
        %v4217 = vsub.f32 %v3923, %v4133
        %v4218 = vsub.f32 %v4036, %v4133
        %v4219 = vsub.f32 %v3926, %v4136
        %v4220 = vsub.f32 %v4039, %v4136
        %v4221 = vsub.f32 %v3929, %v4139
        %v4222 = vsub.f32 %v4042, %v4139
        %v4223 = vsub.f32 %v3932, %v4142
        %v4224 = vsub.f32 %v4045, %v4142
        %v4225 = vsub.f32 %v3935, %v4145
        %v4226 = vsub.f32 %v4048, %v4145
        %v4227 = vsub.f32 %v3938, %v4148
        %v4228 = vsub.f32 %v4051, %v4148
        %v4229 = vsub.f32 %v3941, %v4151
        %v4230 = vsub.f32 %v4054, %v4151
        %v4231 = vsub.f32 %v3944, %v4154
        %v4232 = vsub.f32 %v4057, %v4154
        %v4233 = vsub.f32 %v3947, %v4157
        %v4234 = vsub.f32 %v4060, %v4157
        %v4235 = vsub.f32 %v3950, %v4160
        %v4236 = vsub.f32 %v4063, %v4160
        %v4237 = vsub.f32 %v3953, %v4163
        %v4238 = vsub.f32 %v4066, %v4163
        %v4239 = vsub.f32 %v3956, %v4166
        %v4240 = vsub.f32 %v4069, %v4166
        %v4241 = vsub.f32 %v3959, %v4169
        %v4242 = vsub.f32 %v4072, %v4169
        %v4243 = vsub.f32 %v3962, %v4172
        %v4244 = vsub.f32 %v4075, %v4172
        %v4245 = vsub.f32 %v3965, %v4175
        %v4246 = vsub.f32 %v4078, %v4175
        %v4247 = vsub.f32 %v3968, %v4178
        %v4248 = vsub.f32 %v4081, %v4178
        %v4249 = vsub.f32 %v3971, %v4181
        %v4250 = vsub.f32 %v4084, %v4181
        %v4251 = vsub.f32 %v3974, %v4184
        %v4252 = vsub.f32 %v4087, %v4184
        %v4253 = vsub.f32 %v3977, %v4187
        %v4254 = vsub.f32 %v4090, %v4187
        %v4255 = vsub.f32 %v3980, %v4190
        %v4256 = vsub.f32 %v4093, %v4190
        %v4257 = vsub.f32 %v3983, %v4193
        %v4258 = vsub.f32 %v4096, %v4193
        %v4259 = vsub.f32 %v3986, %v4196
        %v4260 = vsub.f32 %v4099, %v4196
        %v4261 = vmul.f32 %v4197, 1.442695
        %v4262 = vpow.pop %v4261
        %v4263 = vmul.f32 %v4198, 1.442695
        %v4264 = vpow.pop %v4263
        %v4265 = vmul.f32 %v4199, 1.442695
        %v4266 = vpow.pop %v4265
        %v4267 = vmul.f32 %v4200, 1.442695
        %v4268 = vpow.pop %v4267
        %v4269 = vmul.f32 %v4201, 1.442695
        %v4270 = vpow.pop %v4269
        %v4271 = vmul.f32 %v4202, 1.442695
        %v4272 = vpow.pop %v4271
        %v4273 = vmul.f32 %v4203, 1.442695
        %v4274 = vpow.pop %v4273
        %v4275 = vmul.f32 %v4204, 1.442695
        %v4276 = vpow.pop %v4275
        %v4277 = vmul.f32 %v4205, 1.442695
        %v4278 = vpow.pop %v4277
        %v4279 = vmul.f32 %v4206, 1.442695
        %v4280 = vpow.pop %v4279
        %v4281 = vmul.f32 %v4207, 1.442695
        %v4282 = vpow.pop %v4281
        %v4283 = vmul.f32 %v4208, 1.442695
        %v4284 = vpow.pop %v4283
        %v4285 = vmul.f32 %v4209, 1.442695
        %v4286 = vpow.pop %v4285
        %v4287 = vmul.f32 %v4210, 1.442695
        %v4288 = vpow.pop %v4287
        %v4289 = vmul.f32 %v4211, 1.442695
        %v4290 = vpow.pop %v4289
        %v4291 = vmul.f32 %v4212, 1.442695
        %v4292 = vpow.pop %v4291
        %v4293 = vmul.f32 %v4213, 1.442695
        %v4294 = vpow.pop %v4293
        %v4295 = vmul.f32 %v4214, 1.442695
        %v4296 = vpow.pop %v4295
        %v4297 = vmul.f32 %v4215, 1.442695
        %v4298 = vpow.pop %v4297
        %v4299 = vmul.f32 %v4216, 1.442695
        %v4300 = vpow.pop %v4299
        %v4301 = vmul.f32 %v4217, 1.442695
        %v4302 = vpow.pop %v4301
        %v4303 = vmul.f32 %v4218, 1.442695
        %v4304 = vpow.pop %v4303
        %v4305 = vmul.f32 %v4219, 1.442695
        %v4306 = vpow.pop %v4305
        %v4307 = vmul.f32 %v4220, 1.442695
        %v4308 = vpow.pop %v4307
        %v4309 = vmul.f32 %v4221, 1.442695
        %v4310 = vpow.pop %v4309
        %v4311 = vmul.f32 %v4222, 1.442695
        %v4312 = vpow.pop %v4311
        %v4313 = vmul.f32 %v4223, 1.442695
        %v4314 = vpow.pop %v4313
        %v4315 = vmul.f32 %v4224, 1.442695
        %v4316 = vpow.pop %v4315
        %v4317 = vmul.f32 %v4225, 1.442695
        %v4318 = vpow.pop %v4317
        %v4319 = vmul.f32 %v4226, 1.442695
        %v4320 = vpow.pop %v4319
        %v4321 = vmul.f32 %v4227, 1.442695
        %v4322 = vpow.pop %v4321
        %v4323 = vmul.f32 %v4228, 1.442695
        %v4324 = vpow.pop %v4323
        %v4325 = vmul.f32 %v4229, 1.442695
        %v4326 = vpow.pop %v4325
        %v4327 = vmul.f32 %v4230, 1.442695
        %v4328 = vpow.pop %v4327
        %v4329 = vmul.f32 %v4231, 1.442695
        %v4330 = vpow.pop %v4329
        %v4331 = vmul.f32 %v4232, 1.442695
        %v4332 = vpow.pop %v4331
        %v4333 = vmul.f32 %v4233, 1.442695
        %v4334 = vpow.pop %v4333
        %v4335 = vmul.f32 %v4234, 1.442695
        %v4336 = vpow.pop %v4335
        %v4337 = vmul.f32 %v4235, 1.442695
        %v4338 = vpow.pop %v4337
        %v4339 = vmul.f32 %v4236, 1.442695
        %v4340 = vpow.pop %v4339
        %v4341 = vmul.f32 %v4237, 1.442695
        %v4342 = vpow.pop %v4341
        %v4343 = vmul.f32 %v4238, 1.442695
        %v4344 = vpow.pop %v4343
        %v4345 = vmul.f32 %v4239, 1.442695
        %v4346 = vpow.pop %v4345
        %v4347 = vmul.f32 %v4240, 1.442695
        %v4348 = vpow.pop %v4347
        %v4349 = vmul.f32 %v4241, 1.442695
        %v4350 = vpow.pop %v4349
        %v4351 = vmul.f32 %v4242, 1.442695
        %v4352 = vpow.pop %v4351
        %v4353 = vmul.f32 %v4243, 1.442695
        %v4354 = vpow.pop %v4353
        %v4355 = vmul.f32 %v4244, 1.442695
        %v4356 = vpow.pop %v4355
        %v4357 = vmul.f32 %v4245, 1.442695
        %v4358 = vpow.pop %v4357
        %v4359 = vmul.f32 %v4246, 1.442695
        %v4360 = vpow.pop %v4359
        %v4361 = vmul.f32 %v4247, 1.442695
        %v4362 = vpow.pop %v4361
        %v4363 = vmul.f32 %v4248, 1.442695
        %v4364 = vpow.pop %v4363
        %v4365 = vmul.f32 %v4249, 1.442695
        %v4366 = vpow.pop %v4365
        %v4367 = vmul.f32 %v4250, 1.442695
        %v4368 = vpow.pop %v4367
        %v4369 = vmul.f32 %v4251, 1.442695
        %v4370 = vpow.pop %v4369
        %v4371 = vmul.f32 %v4252, 1.442695
        %v4372 = vpow.pop %v4371
        %v4373 = vmul.f32 %v4253, 1.442695
        %v4374 = vpow.pop %v4373
        %v4375 = vmul.f32 %v4254, 1.442695
        %v4376 = vpow.pop %v4375
        %v4377 = vmul.f32 %v4255, 1.442695
        %v4378 = vpow.pop %v4377
        %v4379 = vmul.f32 %v4256, 1.442695
        %v4380 = vpow.pop %v4379
        %v4381 = vmul.f32 %v4257, 1.442695
        %v4382 = vpow.pop %v4381
        %v4383 = vmul.f32 %v4258, 1.442695
        %v4384 = vpow.pop %v4383
        %v4385 = vmul.f32 %v4259, 1.442695
        %v4386 = vpow.pop %v4385
        %v4387 = vmul.f32 %v4260, 1.442695
        %v4388 = vpow.pop %v4387
        %v4389 = vadd.f32 %v4262, %v4264
        %4390 = vadd.xlane.f32.xlu0 %v4389
        %v4391 = vpop.xlane.xlu0 %4390
        %v4392 = vadd.f32 %v4266, %v4268
        %4393 = vadd.xlane.f32.xlu0 %v4392
        %v4394 = vpop.xlane.xlu0 %4393
        %v4395 = vadd.f32 %v4270, %v4272
        %4396 = vadd.xlane.f32.xlu0 %v4395
        %v4397 = vpop.xlane.xlu0 %4396
        %v4398 = vadd.f32 %v4274, %v4276
        %4399 = vadd.xlane.f32.xlu0 %v4398
        %v4400 = vpop.xlane.xlu0 %4399
        %v4401 = vadd.f32 %v4278, %v4280
        %4402 = vadd.xlane.f32.xlu0 %v4401
        %v4403 = vpop.xlane.xlu0 %4402
        %v4404 = vadd.f32 %v4282, %v4284
        %4405 = vadd.xlane.f32.xlu0 %v4404
        %v4406 = vpop.xlane.xlu0 %4405
        %v4407 = vadd.f32 %v4286, %v4288
        %4408 = vadd.xlane.f32.xlu0 %v4407
        %v4409 = vpop.xlane.xlu0 %4408
        %v4410 = vadd.f32 %v4290, %v4292
        %4411 = vadd.xlane.f32.xlu0 %v4410
        %v4412 = vpop.xlane.xlu0 %4411
        %v4413 = vadd.f32 %v4294, %v4296
        %4414 = vadd.xlane.f32.xlu0 %v4413
        %v4415 = vpop.xlane.xlu0 %4414
        %v4416 = vadd.f32 %v4298, %v4300
        %4417 = vadd.xlane.f32.xlu0 %v4416
        %v4418 = vpop.xlane.xlu0 %4417
        %v4419 = vadd.f32 %v4302, %v4304
        %4420 = vadd.xlane.f32.xlu0 %v4419
        %v4421 = vpop.xlane.xlu0 %4420
        %v4422 = vadd.f32 %v4306, %v4308
        %4423 = vadd.xlane.f32.xlu0 %v4422
        %v4424 = vpop.xlane.xlu0 %4423
        %v4425 = vadd.f32 %v4310, %v4312
        %4426 = vadd.xlane.f32.xlu0 %v4425
        %v4427 = vpop.xlane.xlu0 %4426
        %v4428 = vadd.f32 %v4314, %v4316
        %4429 = vadd.xlane.f32.xlu0 %v4428
        %v4430 = vpop.xlane.xlu0 %4429
        %v4431 = vadd.f32 %v4318, %v4320
        %4432 = vadd.xlane.f32.xlu0 %v4431
        %v4433 = vpop.xlane.xlu0 %4432
        %v4434 = vadd.f32 %v4322, %v4324
        %4435 = vadd.xlane.f32.xlu0 %v4434
        %v4436 = vpop.xlane.xlu0 %4435
        %v4437 = vadd.f32 %v4326, %v4328
        %4438 = vadd.xlane.f32.xlu0 %v4437
        %v4439 = vpop.xlane.xlu0 %4438
        %v4440 = vadd.f32 %v4330, %v4332
        %4441 = vadd.xlane.f32.xlu0 %v4440
        %v4442 = vpop.xlane.xlu0 %4441
        %v4443 = vadd.f32 %v4334, %v4336
        %4444 = vadd.xlane.f32.xlu0 %v4443
        %v4445 = vpop.xlane.xlu0 %4444
        %v4446 = vadd.f32 %v4338, %v4340
        %4447 = vadd.xlane.f32.xlu0 %v4446
        %v4448 = vpop.xlane.xlu0 %4447
        %v4449 = vadd.f32 %v4342, %v4344
        %4450 = vadd.xlane.f32.xlu0 %v4449
        %v4451 = vpop.xlane.xlu0 %4450
        %v4452 = vadd.f32 %v4346, %v4348
        %4453 = vadd.xlane.f32.xlu0 %v4452
        %v4454 = vpop.xlane.xlu0 %4453
        %v4455 = vadd.f32 %v4350, %v4352
        %4456 = vadd.xlane.f32.xlu0 %v4455
        %v4457 = vpop.xlane.xlu0 %4456
        %v4458 = vadd.f32 %v4354, %v4356
        %4459 = vadd.xlane.f32.xlu0 %v4458
        %v4460 = vpop.xlane.xlu0 %4459
        %v4461 = vadd.f32 %v4358, %v4360
        %4462 = vadd.xlane.f32.xlu0 %v4461
        %v4463 = vpop.xlane.xlu0 %4462
        %v4464 = vadd.f32 %v4362, %v4364
        %4465 = vadd.xlane.f32.xlu0 %v4464
        %v4466 = vpop.xlane.xlu0 %4465
        %v4467 = vadd.f32 %v4366, %v4368
        %4468 = vadd.xlane.f32.xlu0 %v4467
        %v4469 = vpop.xlane.xlu0 %4468
        %v4470 = vadd.f32 %v4370, %v4372
        %4471 = vadd.xlane.f32.xlu0 %v4470
        %v4472 = vpop.xlane.xlu0 %4471
        %v4473 = vadd.f32 %v4374, %v4376
        %4474 = vadd.xlane.f32.xlu0 %v4473
        %v4475 = vpop.xlane.xlu0 %4474
        %v4476 = vadd.f32 %v4378, %v4380
        %4477 = vadd.xlane.f32.xlu0 %v4476
        %v4478 = vpop.xlane.xlu0 %4477
        %v4479 = vadd.f32 %v4382, %v4384
        %4480 = vadd.xlane.f32.xlu0 %v4479
        %v4481 = vpop.xlane.xlu0 %4480
        %v4482 = vadd.f32 %v4386, %v4388
        %4483 = vadd.xlane.f32.xlu0 %v4482
        %v4484 = vpop.xlane.xlu0 %4483
        %v4485 = vrcp.pop %v4391
        %v4486 = vmul.f32 %v4391, %v4485
        %v4487 = vsub.f32 1.0, %v4486
        %v4488 = vmul.f32 %v4485, %v4487
        %v4489 = vadd.f32 %v4485, %v4488
        %vm4490 = vweird.f32 %v4391
        %vm4491 = vweird.f32 %v4485
        %vm4492 = vmor %vm4490, %vm4491
        %v4493 = vsel %vm4492, %v4485, %v4489
        %v4494 = vand.u32 2147483647, %v4391
        %vm4495 = vcmp.eq.f32.partialorder %v4494, 8.507059e+37
        %v4496 = vand.u32 %v4391, 2147483648
        %v4497 = vor.u32 1.1754944e-38, %v4496
        %v4498 = vsel %vm4495, %v4497, %v4493
        %v4499 = vrcp.pop %v4394
        %v4500 = vmul.f32 %v4394, %v4499
        %v4501 = vsub.f32 1.0, %v4500
        %v4502 = vmul.f32 %v4499, %v4501
        %v4503 = vadd.f32 %v4499, %v4502
        %vm4504 = vweird.f32 %v4394
        %vm4505 = vweird.f32 %v4499
        %vm4506 = vmor %vm4504, %vm4505
        %v4507 = vsel %vm4506, %v4499, %v4503
        %v4508 = vand.u32 2147483647, %v4394
        %vm4509 = vcmp.eq.f32.partialorder %v4508, 8.507059e+37
        %v4510 = vand.u32 %v4394, 2147483648
        %v4511 = vor.u32 1.1754944e-38, %v4510
        %v4512 = vsel %vm4509, %v4511, %v4507
        %v4513 = vrcp.pop %v4397
        %v4514 = vmul.f32 %v4397, %v4513
        %v4515 = vsub.f32 1.0, %v4514
        %v4516 = vmul.f32 %v4513, %v4515
        %v4517 = vadd.f32 %v4513, %v4516
        %vm4518 = vweird.f32 %v4397
        %vm4519 = vweird.f32 %v4513
        %vm4520 = vmor %vm4518, %vm4519
        %v4521 = vsel %vm4520, %v4513, %v4517
        %v4522 = vand.u32 2147483647, %v4397
        %vm4523 = vcmp.eq.f32.partialorder %v4522, 8.507059e+37
        %v4524 = vand.u32 %v4397, 2147483648
        %v4525 = vor.u32 1.1754944e-38, %v4524
        %v4526 = vsel %vm4523, %v4525, %v4521
        %v4527 = vrcp.pop %v4400
        %v4528 = vmul.f32 %v4400, %v4527
        %v4529 = vsub.f32 1.0, %v4528
        %v4530 = vmul.f32 %v4527, %v4529
        %v4531 = vadd.f32 %v4527, %v4530
        %vm4532 = vweird.f32 %v4400
        %vm4533 = vweird.f32 %v4527
        %vm4534 = vmor %vm4532, %vm4533
        %v4535 = vsel %vm4534, %v4527, %v4531
        %v4536 = vand.u32 2147483647, %v4400
        %vm4537 = vcmp.eq.f32.partialorder %v4536, 8.507059e+37
        %v4538 = vand.u32 %v4400, 2147483648
        %v4539 = vor.u32 1.1754944e-38, %v4538
        %v4540 = vsel %vm4537, %v4539, %v4535
        %v4541 = vrcp.pop %v4403
        %v4542 = vmul.f32 %v4403, %v4541
        %v4543 = vsub.f32 1.0, %v4542
        %v4544 = vmul.f32 %v4541, %v4543
        %v4545 = vadd.f32 %v4541, %v4544
        %vm4546 = vweird.f32 %v4403
        %vm4547 = vweird.f32 %v4541
        %vm4548 = vmor %vm4546, %vm4547
        %v4549 = vsel %vm4548, %v4541, %v4545
        %v4550 = vand.u32 2147483647, %v4403
        %vm4551 = vcmp.eq.f32.partialorder %v4550, 8.507059e+37
        %v4552 = vand.u32 %v4403, 2147483648
        %v4553 = vor.u32 1.1754944e-38, %v4552
        %v4554 = vsel %vm4551, %v4553, %v4549
        %v4555 = vrcp.pop %v4406
        %v4556 = vmul.f32 %v4406, %v4555
        %v4557 = vsub.f32 1.0, %v4556
        %v4558 = vmul.f32 %v4555, %v4557
        %v4559 = vadd.f32 %v4555, %v4558
        %vm4560 = vweird.f32 %v4406
        %vm4561 = vweird.f32 %v4555
        %vm4562 = vmor %vm4560, %vm4561
        %v4563 = vsel %vm4562, %v4555, %v4559
        %v4564 = vand.u32 2147483647, %v4406
        %vm4565 = vcmp.eq.f32.partialorder %v4564, 8.507059e+37
        %v4566 = vand.u32 %v4406, 2147483648
        %v4567 = vor.u32 1.1754944e-38, %v4566
        %v4568 = vsel %vm4565, %v4567, %v4563
        %v4569 = vrcp.pop %v4409
        %v4570 = vmul.f32 %v4409, %v4569
        %v4571 = vsub.f32 1.0, %v4570
        %v4572 = vmul.f32 %v4569, %v4571
        %v4573 = vadd.f32 %v4569, %v4572
        %vm4574 = vweird.f32 %v4409
        %vm4575 = vweird.f32 %v4569
        %vm4576 = vmor %vm4574, %vm4575
        %v4577 = vsel %vm4576, %v4569, %v4573
        %v4578 = vand.u32 2147483647, %v4409
        %vm4579 = vcmp.eq.f32.partialorder %v4578, 8.507059e+37
        %v4580 = vand.u32 %v4409, 2147483648
        %v4581 = vor.u32 1.1754944e-38, %v4580
        %v4582 = vsel %vm4579, %v4581, %v4577
        %v4583 = vrcp.pop %v4412
        %v4584 = vmul.f32 %v4412, %v4583
        %v4585 = vsub.f32 1.0, %v4584
        %v4586 = vmul.f32 %v4583, %v4585
        %v4587 = vadd.f32 %v4583, %v4586
        %vm4588 = vweird.f32 %v4412
        %vm4589 = vweird.f32 %v4583
        %vm4590 = vmor %vm4588, %vm4589
        %v4591 = vsel %vm4590, %v4583, %v4587
        %v4592 = vand.u32 2147483647, %v4412
        %vm4593 = vcmp.eq.f32.partialorder %v4592, 8.507059e+37
        %v4594 = vand.u32 %v4412, 2147483648
        %v4595 = vor.u32 1.1754944e-38, %v4594
        %v4596 = vsel %vm4593, %v4595, %v4591
        %v4597 = vrcp.pop %v4415
        %v4598 = vmul.f32 %v4415, %v4597
        %v4599 = vsub.f32 1.0, %v4598
        %v4600 = vmul.f32 %v4597, %v4599
        %v4601 = vadd.f32 %v4597, %v4600
        %vm4602 = vweird.f32 %v4415
        %vm4603 = vweird.f32 %v4597
        %vm4604 = vmor %vm4602, %vm4603
        %v4605 = vsel %vm4604, %v4597, %v4601
        %v4606 = vand.u32 2147483647, %v4415
        %vm4607 = vcmp.eq.f32.partialorder %v4606, 8.507059e+37
        %v4608 = vand.u32 %v4415, 2147483648
        %v4609 = vor.u32 1.1754944e-38, %v4608
        %v4610 = vsel %vm4607, %v4609, %v4605
        %v4611 = vrcp.pop %v4418
        %v4612 = vmul.f32 %v4418, %v4611
        %v4613 = vsub.f32 1.0, %v4612
        %v4614 = vmul.f32 %v4611, %v4613
        %v4615 = vadd.f32 %v4611, %v4614
        %vm4616 = vweird.f32 %v4418
        %vm4617 = vweird.f32 %v4611
        %vm4618 = vmor %vm4616, %vm4617
        %v4619 = vsel %vm4618, %v4611, %v4615
        %v4620 = vand.u32 2147483647, %v4418
        %vm4621 = vcmp.eq.f32.partialorder %v4620, 8.507059e+37
        %v4622 = vand.u32 %v4418, 2147483648
        %v4623 = vor.u32 1.1754944e-38, %v4622
        %v4624 = vsel %vm4621, %v4623, %v4619
        %v4625 = vrcp.pop %v4421
        %v4626 = vmul.f32 %v4421, %v4625
        %v4627 = vsub.f32 1.0, %v4626
        %v4628 = vmul.f32 %v4625, %v4627
        %v4629 = vadd.f32 %v4625, %v4628
        %vm4630 = vweird.f32 %v4421
        %vm4631 = vweird.f32 %v4625
        %vm4632 = vmor %vm4630, %vm4631
        %v4633 = vsel %vm4632, %v4625, %v4629
        %v4634 = vand.u32 2147483647, %v4421
        %vm4635 = vcmp.eq.f32.partialorder %v4634, 8.507059e+37
        %v4636 = vand.u32 %v4421, 2147483648
        %v4637 = vor.u32 1.1754944e-38, %v4636
        %v4638 = vsel %vm4635, %v4637, %v4633
        %v4639 = vrcp.pop %v4424
        %v4640 = vmul.f32 %v4424, %v4639
        %v4641 = vsub.f32 1.0, %v4640
        %v4642 = vmul.f32 %v4639, %v4641
        %v4643 = vadd.f32 %v4639, %v4642
        %vm4644 = vweird.f32 %v4424
        %vm4645 = vweird.f32 %v4639
        %vm4646 = vmor %vm4644, %vm4645
        %v4647 = vsel %vm4646, %v4639, %v4643
        %v4648 = vand.u32 2147483647, %v4424
        %vm4649 = vcmp.eq.f32.partialorder %v4648, 8.507059e+37
        %v4650 = vand.u32 %v4424, 2147483648
        %v4651 = vor.u32 1.1754944e-38, %v4650
        %v4652 = vsel %vm4649, %v4651, %v4647
        %v4653 = vrcp.pop %v4427
        %v4654 = vmul.f32 %v4427, %v4653
        %v4655 = vsub.f32 1.0, %v4654
        %v4656 = vmul.f32 %v4653, %v4655
        %v4657 = vadd.f32 %v4653, %v4656
        %vm4658 = vweird.f32 %v4427
        %vm4659 = vweird.f32 %v4653
        %vm4660 = vmor %vm4658, %vm4659
        %v4661 = vsel %vm4660, %v4653, %v4657
        %v4662 = vand.u32 2147483647, %v4427
        %vm4663 = vcmp.eq.f32.partialorder %v4662, 8.507059e+37
        %v4664 = vand.u32 %v4427, 2147483648
        %v4665 = vor.u32 1.1754944e-38, %v4664
        %v4666 = vsel %vm4663, %v4665, %v4661
        %v4667 = vrcp.pop %v4430
        %v4668 = vmul.f32 %v4430, %v4667
        %v4669 = vsub.f32 1.0, %v4668
        %v4670 = vmul.f32 %v4667, %v4669
        %v4671 = vadd.f32 %v4667, %v4670
        %vm4672 = vweird.f32 %v4430
        %vm4673 = vweird.f32 %v4667
        %vm4674 = vmor %vm4672, %vm4673
        %v4675 = vsel %vm4674, %v4667, %v4671
        %v4676 = vand.u32 2147483647, %v4430
        %vm4677 = vcmp.eq.f32.partialorder %v4676, 8.507059e+37
        %v4678 = vand.u32 %v4430, 2147483648
        %v4679 = vor.u32 1.1754944e-38, %v4678
        %v4680 = vsel %vm4677, %v4679, %v4675
        %v4681 = vrcp.pop %v4433
        %v4682 = vmul.f32 %v4433, %v4681
        %v4683 = vsub.f32 1.0, %v4682
        %v4684 = vmul.f32 %v4681, %v4683
        %v4685 = vadd.f32 %v4681, %v4684
        %vm4686 = vweird.f32 %v4433
        %vm4687 = vweird.f32 %v4681
        %vm4688 = vmor %vm4686, %vm4687
        %v4689 = vsel %vm4688, %v4681, %v4685
        %v4690 = vand.u32 2147483647, %v4433
        %vm4691 = vcmp.eq.f32.partialorder %v4690, 8.507059e+37
        %v4692 = vand.u32 %v4433, 2147483648
        %v4693 = vor.u32 1.1754944e-38, %v4692
        %v4694 = vsel %vm4691, %v4693, %v4689
        %v4695 = vrcp.pop %v4436
        %v4696 = vmul.f32 %v4436, %v4695
        %v4697 = vsub.f32 1.0, %v4696
        %v4698 = vmul.f32 %v4695, %v4697
        %v4699 = vadd.f32 %v4695, %v4698
        %vm4700 = vweird.f32 %v4436
        %vm4701 = vweird.f32 %v4695
        %vm4702 = vmor %vm4700, %vm4701
        %v4703 = vsel %vm4702, %v4695, %v4699
        %v4704 = vand.u32 2147483647, %v4436
        %vm4705 = vcmp.eq.f32.partialorder %v4704, 8.507059e+37
        %v4706 = vand.u32 %v4436, 2147483648
        %v4707 = vor.u32 1.1754944e-38, %v4706
        %v4708 = vsel %vm4705, %v4707, %v4703
        %v4709 = vrcp.pop %v4439
        %v4710 = vmul.f32 %v4439, %v4709
        %v4711 = vsub.f32 1.0, %v4710
        %v4712 = vmul.f32 %v4709, %v4711
        %v4713 = vadd.f32 %v4709, %v4712
        %vm4714 = vweird.f32 %v4439
        %vm4715 = vweird.f32 %v4709
        %vm4716 = vmor %vm4714, %vm4715
        %v4717 = vsel %vm4716, %v4709, %v4713
        %v4718 = vand.u32 2147483647, %v4439
        %vm4719 = vcmp.eq.f32.partialorder %v4718, 8.507059e+37
        %v4720 = vand.u32 %v4439, 2147483648
        %v4721 = vor.u32 1.1754944e-38, %v4720
        %v4722 = vsel %vm4719, %v4721, %v4717
        %v4723 = vrcp.pop %v4442
        %v4724 = vmul.f32 %v4442, %v4723
        %v4725 = vsub.f32 1.0, %v4724
        %v4726 = vmul.f32 %v4723, %v4725
        %v4727 = vadd.f32 %v4723, %v4726
        %vm4728 = vweird.f32 %v4442
        %vm4729 = vweird.f32 %v4723
        %vm4730 = vmor %vm4728, %vm4729
        %v4731 = vsel %vm4730, %v4723, %v4727
        %v4732 = vand.u32 2147483647, %v4442
        %vm4733 = vcmp.eq.f32.partialorder %v4732, 8.507059e+37
        %v4734 = vand.u32 %v4442, 2147483648
        %v4735 = vor.u32 1.1754944e-38, %v4734
        %v4736 = vsel %vm4733, %v4735, %v4731
        %v4737 = vrcp.pop %v4445
        %v4738 = vmul.f32 %v4445, %v4737
        %v4739 = vsub.f32 1.0, %v4738
        %v4740 = vmul.f32 %v4737, %v4739
        %v4741 = vadd.f32 %v4737, %v4740
        %vm4742 = vweird.f32 %v4445
        %vm4743 = vweird.f32 %v4737
        %vm4744 = vmor %vm4742, %vm4743
        %v4745 = vsel %vm4744, %v4737, %v4741
        %v4746 = vand.u32 2147483647, %v4445
        %vm4747 = vcmp.eq.f32.partialorder %v4746, 8.507059e+37
        %v4748 = vand.u32 %v4445, 2147483648
        %v4749 = vor.u32 1.1754944e-38, %v4748
        %v4750 = vsel %vm4747, %v4749, %v4745
        %v4751 = vrcp.pop %v4448
        %v4752 = vmul.f32 %v4448, %v4751
        %v4753 = vsub.f32 1.0, %v4752
        %v4754 = vmul.f32 %v4751, %v4753
        %v4755 = vadd.f32 %v4751, %v4754
        %vm4756 = vweird.f32 %v4448
        %vm4757 = vweird.f32 %v4751
        %vm4758 = vmor %vm4756, %vm4757
        %v4759 = vsel %vm4758, %v4751, %v4755
        %v4760 = vand.u32 2147483647, %v4448
        %vm4761 = vcmp.eq.f32.partialorder %v4760, 8.507059e+37
        %v4762 = vand.u32 %v4448, 2147483648
        %v4763 = vor.u32 1.1754944e-38, %v4762
        %v4764 = vsel %vm4761, %v4763, %v4759
        %v4765 = vrcp.pop %v4451
        %v4766 = vmul.f32 %v4451, %v4765
        %v4767 = vsub.f32 1.0, %v4766
        %v4768 = vmul.f32 %v4765, %v4767
        %v4769 = vadd.f32 %v4765, %v4768
        %vm4770 = vweird.f32 %v4451
        %vm4771 = vweird.f32 %v4765
        %vm4772 = vmor %vm4770, %vm4771
        %v4773 = vsel %vm4772, %v4765, %v4769
        %v4774 = vand.u32 2147483647, %v4451
        %vm4775 = vcmp.eq.f32.partialorder %v4774, 8.507059e+37
        %v4776 = vand.u32 %v4451, 2147483648
        %v4777 = vor.u32 1.1754944e-38, %v4776
        %v4778 = vsel %vm4775, %v4777, %v4773
        %v4779 = vrcp.pop %v4454
        %v4780 = vmul.f32 %v4454, %v4779
        %v4781 = vsub.f32 1.0, %v4780
        %v4782 = vmul.f32 %v4779, %v4781
        %v4783 = vadd.f32 %v4779, %v4782
        %vm4784 = vweird.f32 %v4454
        %vm4785 = vweird.f32 %v4779
        %vm4786 = vmor %vm4784, %vm4785
        %v4787 = vsel %vm4786, %v4779, %v4783
        %v4788 = vand.u32 2147483647, %v4454
        %vm4789 = vcmp.eq.f32.partialorder %v4788, 8.507059e+37
        %v4790 = vand.u32 %v4454, 2147483648
        %v4791 = vor.u32 1.1754944e-38, %v4790
        %v4792 = vsel %vm4789, %v4791, %v4787
        %v4793 = vrcp.pop %v4457
        %v4794 = vmul.f32 %v4457, %v4793
        %v4795 = vsub.f32 1.0, %v4794
        %v4796 = vmul.f32 %v4793, %v4795
        %v4797 = vadd.f32 %v4793, %v4796
        %vm4798 = vweird.f32 %v4457
        %vm4799 = vweird.f32 %v4793
        %vm4800 = vmor %vm4798, %vm4799
        %v4801 = vsel %vm4800, %v4793, %v4797
        %v4802 = vand.u32 2147483647, %v4457
        %vm4803 = vcmp.eq.f32.partialorder %v4802, 8.507059e+37
        %v4804 = vand.u32 %v4457, 2147483648
        %v4805 = vor.u32 1.1754944e-38, %v4804
        %v4806 = vsel %vm4803, %v4805, %v4801
        %v4807 = vrcp.pop %v4460
        %v4808 = vmul.f32 %v4460, %v4807
        %v4809 = vsub.f32 1.0, %v4808
        %v4810 = vmul.f32 %v4807, %v4809
        %v4811 = vadd.f32 %v4807, %v4810
        %vm4812 = vweird.f32 %v4460
        %vm4813 = vweird.f32 %v4807
        %vm4814 = vmor %vm4812, %vm4813
        %v4815 = vsel %vm4814, %v4807, %v4811
        %v4816 = vand.u32 2147483647, %v4460
        %vm4817 = vcmp.eq.f32.partialorder %v4816, 8.507059e+37
        %v4818 = vand.u32 %v4460, 2147483648
        %v4819 = vor.u32 1.1754944e-38, %v4818
        %v4820 = vsel %vm4817, %v4819, %v4815
        %v4821 = vrcp.pop %v4463
        %v4822 = vmul.f32 %v4463, %v4821
        %v4823 = vsub.f32 1.0, %v4822
        %v4824 = vmul.f32 %v4821, %v4823
        %v4825 = vadd.f32 %v4821, %v4824
        %vm4826 = vweird.f32 %v4463
        %vm4827 = vweird.f32 %v4821
        %vm4828 = vmor %vm4826, %vm4827
        %v4829 = vsel %vm4828, %v4821, %v4825
        %v4830 = vand.u32 2147483647, %v4463
        %vm4831 = vcmp.eq.f32.partialorder %v4830, 8.507059e+37
        %v4832 = vand.u32 %v4463, 2147483648
        %v4833 = vor.u32 1.1754944e-38, %v4832
        %v4834 = vsel %vm4831, %v4833, %v4829
        %v4835 = vrcp.pop %v4466
        %v4836 = vmul.f32 %v4466, %v4835
        %v4837 = vsub.f32 1.0, %v4836
        %v4838 = vmul.f32 %v4835, %v4837
        %v4839 = vadd.f32 %v4835, %v4838
        %vm4840 = vweird.f32 %v4466
        %vm4841 = vweird.f32 %v4835
        %vm4842 = vmor %vm4840, %vm4841
        %v4843 = vsel %vm4842, %v4835, %v4839
        %v4844 = vand.u32 2147483647, %v4466
        %vm4845 = vcmp.eq.f32.partialorder %v4844, 8.507059e+37
        %v4846 = vand.u32 %v4466, 2147483648
        %v4847 = vor.u32 1.1754944e-38, %v4846
        %v4848 = vsel %vm4845, %v4847, %v4843
        %v4849 = vrcp.pop %v4469
        %v4850 = vmul.f32 %v4469, %v4849
        %v4851 = vsub.f32 1.0, %v4850
        %v4852 = vmul.f32 %v4849, %v4851
        %v4853 = vadd.f32 %v4849, %v4852
        %vm4854 = vweird.f32 %v4469
        %vm4855 = vweird.f32 %v4849
        %vm4856 = vmor %vm4854, %vm4855
        %v4857 = vsel %vm4856, %v4849, %v4853
        %v4858 = vand.u32 2147483647, %v4469
        %vm4859 = vcmp.eq.f32.partialorder %v4858, 8.507059e+37
        %v4860 = vand.u32 %v4469, 2147483648
        %v4861 = vor.u32 1.1754944e-38, %v4860
        %v4862 = vsel %vm4859, %v4861, %v4857
        %v4863 = vrcp.pop %v4472
        %v4864 = vmul.f32 %v4472, %v4863
        %v4865 = vsub.f32 1.0, %v4864
        %v4866 = vmul.f32 %v4863, %v4865
        %v4867 = vadd.f32 %v4863, %v4866
        %vm4868 = vweird.f32 %v4472
        %vm4869 = vweird.f32 %v4863
        %vm4870 = vmor %vm4868, %vm4869
        %v4871 = vsel %vm4870, %v4863, %v4867
        %v4872 = vand.u32 2147483647, %v4472
        %vm4873 = vcmp.eq.f32.partialorder %v4872, 8.507059e+37
        %v4874 = vand.u32 %v4472, 2147483648
        %v4875 = vor.u32 1.1754944e-38, %v4874
        %v4876 = vsel %vm4873, %v4875, %v4871
        %v4877 = vrcp.pop %v4475
        %v4878 = vmul.f32 %v4475, %v4877
        %v4879 = vsub.f32 1.0, %v4878
        %v4880 = vmul.f32 %v4877, %v4879
        %v4881 = vadd.f32 %v4877, %v4880
        %vm4882 = vweird.f32 %v4475
        %vm4883 = vweird.f32 %v4877
        %vm4884 = vmor %vm4882, %vm4883
        %v4885 = vsel %vm4884, %v4877, %v4881
        %v4886 = vand.u32 2147483647, %v4475
        %vm4887 = vcmp.eq.f32.partialorder %v4886, 8.507059e+37
        %v4888 = vand.u32 %v4475, 2147483648
        %v4889 = vor.u32 1.1754944e-38, %v4888
        %v4890 = vsel %vm4887, %v4889, %v4885
        %v4891 = vrcp.pop %v4478
        %v4892 = vmul.f32 %v4478, %v4891
        %v4893 = vsub.f32 1.0, %v4892
        %v4894 = vmul.f32 %v4891, %v4893
        %v4895 = vadd.f32 %v4891, %v4894
        %vm4896 = vweird.f32 %v4478
        %vm4897 = vweird.f32 %v4891
        %vm4898 = vmor %vm4896, %vm4897
        %v4899 = vsel %vm4898, %v4891, %v4895
        %v4900 = vand.u32 2147483647, %v4478
        %vm4901 = vcmp.eq.f32.partialorder %v4900, 8.507059e+37
        %v4902 = vand.u32 %v4478, 2147483648
        %v4903 = vor.u32 1.1754944e-38, %v4902
        %v4904 = vsel %vm4901, %v4903, %v4899
        %v4905 = vrcp.pop %v4481
        %v4906 = vmul.f32 %v4481, %v4905
        %v4907 = vsub.f32 1.0, %v4906
        %v4908 = vmul.f32 %v4905, %v4907
        %v4909 = vadd.f32 %v4905, %v4908
        %vm4910 = vweird.f32 %v4481
        %vm4911 = vweird.f32 %v4905
        %vm4912 = vmor %vm4910, %vm4911
        %v4913 = vsel %vm4912, %v4905, %v4909
        %v4914 = vand.u32 2147483647, %v4481
        %vm4915 = vcmp.eq.f32.partialorder %v4914, 8.507059e+37
        %v4916 = vand.u32 %v4481, 2147483648
        %v4917 = vor.u32 1.1754944e-38, %v4916
        %v4918 = vsel %vm4915, %v4917, %v4913
        %v4919 = vrcp.pop %v4484
        %v4920 = vmul.f32 %v4484, %v4919
        %v4921 = vsub.f32 1.0, %v4920
        %v4922 = vmul.f32 %v4919, %v4921
        %v4923 = vadd.f32 %v4919, %v4922
        %vm4924 = vweird.f32 %v4484
        %vm4925 = vweird.f32 %v4919
        %vm4926 = vmor %vm4924, %vm4925
        %v4927 = vsel %vm4926, %v4919, %v4923
        %v4928 = vand.u32 2147483647, %v4484
        %vm4929 = vcmp.eq.f32.partialorder %v4928, 8.507059e+37
        %v4930 = vand.u32 %v4484, 2147483648
        %v4931 = vor.u32 1.1754944e-38, %v4930
        %v4932 = vsel %vm4929, %v4931, %v4927
        %v4933 = vmul.f32 %v4262, %v4498
        %v4934 = vmul.f32 %v4264, %v4498
        %v4935 = vmul.f32 %v4266, %v4512
        %v4936 = vmul.f32 %v4268, %v4512
        %v4937 = vmul.f32 %v4270, %v4526
        %v4938 = vmul.f32 %v4272, %v4526
        %v4939 = vmul.f32 %v4274, %v4540
        %v4940 = vmul.f32 %v4276, %v4540
        %v4941 = vmul.f32 %v4278, %v4554
        %v4942 = vmul.f32 %v4280, %v4554
        %v4943 = vmul.f32 %v4282, %v4568
        %v4944 = vmul.f32 %v4284, %v4568
        %v4945 = vmul.f32 %v4286, %v4582
        %v4946 = vmul.f32 %v4288, %v4582
        %v4947 = vmul.f32 %v4290, %v4596
        %v4948 = vmul.f32 %v4292, %v4596
        %v4949 = vmul.f32 %v4294, %v4610
        %v4950 = vmul.f32 %v4296, %v4610
        %v4951 = vmul.f32 %v4298, %v4624
        %v4952 = vmul.f32 %v4300, %v4624
        %v4953 = vmul.f32 %v4302, %v4638
        %v4954 = vmul.f32 %v4304, %v4638
        %v4955 = vmul.f32 %v4306, %v4652
        %v4956 = vmul.f32 %v4308, %v4652
        %v4957 = vmul.f32 %v4310, %v4666
        %v4958 = vmul.f32 %v4312, %v4666
        %v4959 = vmul.f32 %v4314, %v4680
        %v4960 = vmul.f32 %v4316, %v4680
        %v4961 = vmul.f32 %v4318, %v4694
        %v4962 = vmul.f32 %v4320, %v4694
        %v4963 = vmul.f32 %v4322, %v4708
        %v4964 = vmul.f32 %v4324, %v4708
        %v4965 = vmul.f32 %v4326, %v4722
        %v4966 = vmul.f32 %v4328, %v4722
        %v4967 = vmul.f32 %v4330, %v4736
        %v4968 = vmul.f32 %v4332, %v4736
        %v4969 = vmul.f32 %v4334, %v4750
        %v4970 = vmul.f32 %v4336, %v4750
        %v4971 = vmul.f32 %v4338, %v4764
        %v4972 = vmul.f32 %v4340, %v4764
        %v4973 = vmul.f32 %v4342, %v4778
        %v4974 = vmul.f32 %v4344, %v4778
        %v4975 = vmul.f32 %v4346, %v4792
        %v4976 = vmul.f32 %v4348, %v4792
        %v4977 = vmul.f32 %v4350, %v4806
        %v4978 = vmul.f32 %v4352, %v4806
        %v4979 = vmul.f32 %v4354, %v4820
        %v4980 = vmul.f32 %v4356, %v4820
        %v4981 = vmul.f32 %v4358, %v4834
        %v4982 = vmul.f32 %v4360, %v4834
        %v4983 = vmul.f32 %v4362, %v4848
        %v4984 = vmul.f32 %v4364, %v4848
        %v4985 = vmul.f32 %v4366, %v4862
        %v4986 = vmul.f32 %v4368, %v4862
        %v4987 = vmul.f32 %v4370, %v4876
        %v4988 = vmul.f32 %v4372, %v4876
        %v4989 = vmul.f32 %v4374, %v4890
        %v4990 = vmul.f32 %v4376, %v4890
        %v4991 = vmul.f32 %v4378, %v4904
        %v4992 = vmul.f32 %v4380, %v4904
        %v4993 = vmul.f32 %v4382, %v4918
        %v4994 = vmul.f32 %v4384, %v4918
        %v4995 = vmul.f32 %v4386, %v4932
        %v4996 = vmul.f32 %v4388, %v4932
        %4997 = vmatpush.xpose.msra.mxu0 %v4963
        %4998 = vmatpush.xpose.msra.mxu0 %v4961
        %4999 = vmatpush.xpose.msra.mxu0 %v4959
        %5000 = vmatpush.xpose.msra.mxu0 %v4957
        %5001 = vmatpush.xpose.msra.mxu0 %v4955
        %5002 = vmatpush.xpose.msra.mxu0 %v4953
        %5003 = vmatpush.xpose.msra.mxu0 %v4951
        %5004 = vmatpush.xpose.msra.mxu0 %v4949
        %5005 = vmatpush.xpose.msra.mxu0 %v4947
        %5006 = vmatpush.xpose.msra.mxu0 %v4945
        %5007 = vmatpush.xpose.msra.mxu0 %v4943
        %5008 = vmatpush.xpose.msra.mxu0 %v4941
        %5009 = vmatpush.xpose.msra.mxu0 %v4939
        %5010 = vmatpush.xpose.msra.mxu0 %v4937
        %5011 = vmatpush.xpose.msra.mxu0 %v4935
        %5012 = vmatpush.xpose.msra.mxu0 %v4933
        %5013 = vmatmul.f32.gmra.mxu0 %v3707
        %v5014 = vpop.f32.mrf.mxu0
        %v5015 = vadd.f32 0.0, %v5014
        %5016 = vmatmul.f32.gmra.mxu0 %v3709
        %v5017 = vpop.f32.mrf.mxu0
        %v5018 = vadd.f32 0.0, %v5017
        %5019 = vmatmul.f32.gmra.mxu0 %v3711
        %v5020 = vpop.f32.mrf.mxu0
        %v5021 = vadd.f32 0.0, %v5020
        %5022 = vmatmul.f32.gmra.mxu0 %v3713
        %v5023 = vpop.f32.mrf.mxu0
        %v5024 = vadd.f32 0.0, %v5023
        %5025 = vdwg.mxu0
        %5026 = vmatpush.xpose.msra.mxu0 %v4964
        %5027 = vmatpush.xpose.msra.mxu0 %v4962
        %5028 = vmatpush.xpose.msra.mxu0 %v4960
        %5029 = vmatpush.xpose.msra.mxu0 %v4958
        %5030 = vmatpush.xpose.msra.mxu0 %v4956
        %5031 = vmatpush.xpose.msra.mxu0 %v4954
        %5032 = vmatpush.xpose.msra.mxu0 %v4952
        %5033 = vmatpush.xpose.msra.mxu0 %v4950
        %5034 = vmatpush.xpose.msra.mxu0 %v4948
        %5035 = vmatpush.xpose.msra.mxu0 %v4946
        %5036 = vmatpush.xpose.msra.mxu0 %v4944
        %5037 = vmatpush.xpose.msra.mxu0 %v4942
        %5038 = vmatpush.xpose.msra.mxu0 %v4940
        %5039 = vmatpush.xpose.msra.mxu0 %v4938
        %5040 = vmatpush.xpose.msra.mxu0 %v4936
        %5041 = vmatpush.xpose.msra.mxu0 %v4934
        %5042 = vmatmul.f32.gmra.mxu0 %v3708
        %v5043 = vpop.f32.mrf.mxu0
        %v5044 = vadd.f32 %v5015, %v5043
        %5045 = vmatmul.f32.gmra.mxu0 %v3710
        %v5046 = vpop.f32.mrf.mxu0
        %v5047 = vadd.f32 %v5018, %v5046
        %5048 = vmatmul.f32.gmra.mxu0 %v3712
        %v5049 = vpop.f32.mrf.mxu0
        %v5050 = vadd.f32 %v5021, %v5049
        %5051 = vmatmul.f32.gmra.mxu0 %v3714
        %v5052 = vpop.f32.mrf.mxu0
        %v5053 = vadd.f32 %v5024, %v5052
        %5054 = vdwg.mxu0
        %5055 = vmatpush.xpose.msra.mxu0 %v4995
        %5056 = vmatpush.xpose.msra.mxu0 %v4993
        %5057 = vmatpush.xpose.msra.mxu0 %v4991
        %5058 = vmatpush.xpose.msra.mxu0 %v4989
        %5059 = vmatpush.xpose.msra.mxu0 %v4987
        %5060 = vmatpush.xpose.msra.mxu0 %v4985
        %5061 = vmatpush.xpose.msra.mxu0 %v4983
        %5062 = vmatpush.xpose.msra.mxu0 %v4981
        %5063 = vmatpush.xpose.msra.mxu0 %v4979
        %5064 = vmatpush.xpose.msra.mxu0 %v4977
        %5065 = vmatpush.xpose.msra.mxu0 %v4975
        %5066 = vmatpush.xpose.msra.mxu0 %v4973
        %5067 = vmatpush.xpose.msra.mxu0 %v4971
        %5068 = vmatpush.xpose.msra.mxu0 %v4969
        %5069 = vmatpush.xpose.msra.mxu0 %v4967
        %5070 = vmatpush.xpose.msra.mxu0 %v4965
        %5071 = vmatmul.f32.gmra.mxu0 %v3707
        %v5072 = vpop.f32.mrf.mxu0
        %v5073 = vadd.f32 0.0, %v5072
        %5074 = vmatmul.f32.gmra.mxu0 %v3709
        %v5075 = vpop.f32.mrf.mxu0
        %v5076 = vadd.f32 0.0, %v5075
        %5077 = vmatmul.f32.gmra.mxu0 %v3711
        %v5078 = vpop.f32.mrf.mxu0
        %v5079 = vadd.f32 0.0, %v5078
        %5080 = vmatmul.f32.gmra.mxu0 %v3713
        %v5081 = vpop.f32.mrf.mxu0
        %v5082 = vadd.f32 0.0, %v5081
        %5083 = vdwg.mxu0
        %5084 = vmatpush.xpose.msra.mxu0 %v4996
        %5085 = vmatpush.xpose.msra.mxu0 %v4994
        %5086 = vmatpush.xpose.msra.mxu0 %v4992
        %5087 = vmatpush.xpose.msra.mxu0 %v4990
        %5088 = vmatpush.xpose.msra.mxu0 %v4988
        %5089 = vmatpush.xpose.msra.mxu0 %v4986
        %5090 = vmatpush.xpose.msra.mxu0 %v4984
        %5091 = vmatpush.xpose.msra.mxu0 %v4982
        %5092 = vmatpush.xpose.msra.mxu0 %v4980
        %5093 = vmatpush.xpose.msra.mxu0 %v4978
        %5094 = vmatpush.xpose.msra.mxu0 %v4976
        %5095 = vmatpush.xpose.msra.mxu0 %v4974
        %5096 = vmatpush.xpose.msra.mxu0 %v4972
        %5097 = vmatpush.xpose.msra.mxu0 %v4970
        %5098 = vmatpush.xpose.msra.mxu0 %v4968
        %5099 = vmatpush.xpose.msra.mxu0 %v4966
        %5100 = vmatmul.f32.gmra.mxu0 %v3708
        %v5101 = vpop.f32.mrf.mxu0
        %v5102 = vadd.f32 %v5073, %v5101
        %5103 = vmatmul.f32.gmra.mxu0 %v3710
        %v5104 = vpop.f32.mrf.mxu0
        %v5105 = vadd.f32 %v5076, %v5104
        %5106 = vmatmul.f32.gmra.mxu0 %v3712
        %v5107 = vpop.f32.mrf.mxu0
        %v5108 = vadd.f32 %v5079, %v5107
        %5109 = vmatmul.f32.gmra.mxu0 %v3714
        %v5110 = vpop.f32.mrf.mxu0
        %v5111 = vadd.f32 %v5082, %v5110
        %5112 = vdwg.mxu0
        %s5113 = scalar_lea.vmem [#allocation2], 192
        %v5114 = vld [vmem:[%s5113] sm:$0xff]
        %v5115 = vld [vmem:[%s5113 + $0x8] sm:$0xff]
        %v5116 = vld [vmem:[%s5113 + $0x10] sm:$0xff]
        %v5117 = vld [vmem:[%s5113 + $0x18] sm:$0xff]
        %v5118 = vld [vmem:[%s5113 + $0x20] sm:$0xff]
        %v5119 = vld [vmem:[%s5113 + $0x28] sm:$0xff]
        %v5120 = vld [vmem:[%s5113 + $0x30] sm:$0xff]
        %v5121 = vld [vmem:[%s5113 + $0x38] sm:$0xff]
        %s5122 = scalar_lea.vmem [#allocation2], 448
        %v5123 = vld [vmem:[%s5122] sm:$0xff]
        %v5124 = vld [vmem:[%s5122 + $0x8] sm:$0xff]
        %v5125 = vld [vmem:[%s5122 + $0x10] sm:$0xff]
        %v5126 = vld [vmem:[%s5122 + $0x18] sm:$0xff]
        %v5127 = vld [vmem:[%s5122 + $0x20] sm:$0xff]
        %v5128 = vld [vmem:[%s5122 + $0x28] sm:$0xff]
        %v5129 = vld [vmem:[%s5122 + $0x30] sm:$0xff]
        %v5130 = vld [vmem:[%s5122 + $0x38] sm:$0xff]
        %5131 = vxpose.xlu0.b32.start [1/16] %v789, 128
        %5132 = vxpose.xlu0.b32.cont [2/16] %v792, 128
        %5133 = vxpose.xlu0.b32.cont [3/16] %v795, 128
        %5134 = vxpose.xlu0.b32.cont [4/16] %v798, 128
        %5135 = vxpose.xlu0.b32.cont [5/16] 0.0, 128
        %5136 = vxpose.xlu0.b32.cont [6/16] 0.0, 128
        %5137 = vxpose.xlu0.b32.cont [7/16] 0.0, 128
        %5138 = vxpose.xlu0.b32.cont [8/16] 0.0, 128
        %5139 = vxpose.xlu0.b32.cont [9/16] 0.0, 128
        %5140 = vxpose.xlu0.b32.cont [10/16] 0.0, 128
        %5141 = vxpose.xlu0.b32.cont [11/16] 0.0, 128
        %5142 = vxpose.xlu0.b32.cont [12/16] 0.0, 128
        %5143 = vxpose.xlu0.b32.cont [13/16] 0.0, 128
        %5144 = vxpose.xlu0.b32.cont [14/16] 0.0, 128
        %5145 = vxpose.xlu0.b32.cont [15/16] 0.0, 128
        %5146 = vxpose.xlu0.b32.end [16/16] 0.0, 128
        %v5147 = vpop.trf.xlu0
        %v5148 = vpop.trf.xlu0
        %v5149 = vpop.trf.xlu0
        %v5150 = vpop.trf.xlu0
        %v5151 = vpop.trf.xlu0
        %v5152 = vpop.trf.xlu0
        %v5153 = vpop.trf.xlu0
        %v5154 = vpop.trf.xlu0
        %v5155 = vpop.trf.xlu0
        %v5156 = vpop.trf.xlu0
        %v5157 = vpop.trf.xlu0
        %v5158 = vpop.trf.xlu0
        %v5159 = vpop.trf.xlu0
        %v5160 = vpop.trf.xlu0
        %v5161 = vpop.trf.xlu0
        %v5162 = vpop.trf.xlu0
        %5163 = vxpose.xlu0.b32.start [1/16] %v854, 128
        %5164 = vxpose.xlu0.b32.cont [2/16] %v857, 128
        %5165 = vxpose.xlu0.b32.cont [3/16] %v860, 128
        %5166 = vxpose.xlu0.b32.cont [4/16] %v863, 128
        %5167 = vxpose.xlu0.b32.cont [5/16] 0.0, 128
        %5168 = vxpose.xlu0.b32.cont [6/16] 0.0, 128
        %5169 = vxpose.xlu0.b32.cont [7/16] 0.0, 128
        %5170 = vxpose.xlu0.b32.cont [8/16] 0.0, 128
        %5171 = vxpose.xlu0.b32.cont [9/16] 0.0, 128
        %5172 = vxpose.xlu0.b32.cont [10/16] 0.0, 128
        %5173 = vxpose.xlu0.b32.cont [11/16] 0.0, 128
        %5174 = vxpose.xlu0.b32.cont [12/16] 0.0, 128
        %5175 = vxpose.xlu0.b32.cont [13/16] 0.0, 128
        %5176 = vxpose.xlu0.b32.cont [14/16] 0.0, 128
        %5177 = vxpose.xlu0.b32.cont [15/16] 0.0, 128
        %5178 = vxpose.xlu0.b32.end [16/16] 0.0, 128
        %v5179 = vpop.trf.xlu0
        %v5180 = vpop.trf.xlu0
        %v5181 = vpop.trf.xlu0
        %v5182 = vpop.trf.xlu0
        %v5183 = vpop.trf.xlu0
        %v5184 = vpop.trf.xlu0
        %v5185 = vpop.trf.xlu0
        %v5186 = vpop.trf.xlu0
        %v5187 = vpop.trf.xlu0
        %v5188 = vpop.trf.xlu0
        %v5189 = vpop.trf.xlu0
        %v5190 = vpop.trf.xlu0
        %v5191 = vpop.trf.xlu0
        %v5192 = vpop.trf.xlu0
        %v5193 = vpop.trf.xlu0
        %v5194 = vpop.trf.xlu0
        %v5196 = vsel %vm946, %v5147, 0
        %v5199 = vsel %vm946, %v5148, 0
        %v5202 = vsel %vm946, %v5149, 0
        %v5205 = vsel %vm946, %v5150, 0
        %v5208 = vsel %vm946, %v5151, 0
        %v5211 = vsel %vm946, %v5152, 0
        %v5214 = vsel %vm946, %v5153, 0
        %v5217 = vsel %vm946, %v5154, 0
        %v5220 = vsel %vm946, %v5155, 0
        %v5223 = vsel %vm946, %v5156, 0
        %v5226 = vsel %vm946, %v5157, 0
        %v5229 = vsel %vm946, %v5158, 0
        %v5232 = vsel %vm946, %v5159, 0
        %v5235 = vsel %vm946, %v5160, 0
        %v5238 = vsel %vm946, %v5161, 0
        %v5241 = vsel %vm946, %v5162, 0
        %v5244 = vsel %vm946, %v5179, 0
        %v5247 = vsel %vm946, %v5180, 0
        %v5250 = vsel %vm946, %v5181, 0
        %v5253 = vsel %vm946, %v5182, 0
        %v5256 = vsel %vm946, %v5183, 0
        %v5259 = vsel %vm946, %v5184, 0
        %v5262 = vsel %vm946, %v5185, 0
        %v5265 = vsel %vm946, %v5186, 0
        %v5268 = vsel %vm946, %v5187, 0
        %v5271 = vsel %vm946, %v5188, 0
        %v5274 = vsel %vm946, %v5189, 0
        %v5277 = vsel %vm946, %v5190, 0
        %v5280 = vsel %vm946, %v5191, 0
        %v5283 = vsel %vm946, %v5192, 0
        %v5286 = vsel %vm946, %v5193, 0
        %v5289 = vsel %vm946, %v5194, 0
        %5291 = vmatpush.msra.mxu0 0.0
        %5292 = vmatpush.msra.mxu0 0.0
        %5293 = vmatpush.msra.mxu0 0.0
        %5294 = vmatpush.msra.mxu0 0.0
        %5295 = vmatpush.msra.mxu0 0.0
        %5296 = vmatpush.msra.mxu0 0.0
        %5297 = vmatpush.msra.mxu0 0.0
        %5298 = vmatpush.msra.mxu0 0.0
        %5299 = vmatpush.msra.mxu0 0.0
        %5300 = vmatpush.msra.mxu0 0.0
        %5301 = vmatpush.msra.mxu0 0.0
        %5302 = vmatpush.msra.mxu0 0.0
        %5303 = vmatpush.msra.mxu0 %v5120
        %5304 = vmatpush.msra.mxu0 %v5118
        %5305 = vmatpush.msra.mxu0 %v5116
        %5306 = vmatpush.msra.mxu0 %v5114
        %5307 = vmatmul.f32.gmra.mxu0 %v5196
        %v5308 = vpop.f32.mrf.mxu0
        %v5309 = vadd.f32 0.0, %v5308
        %5310 = vmatmul.f32.gmra.mxu0 %v5199
        %v5311 = vpop.f32.mrf.mxu0
        %v5312 = vadd.f32 0.0, %v5311
        %5313 = vmatmul.f32.gmra.mxu0 %v5202
        %v5314 = vpop.f32.mrf.mxu0
        %v5315 = vadd.f32 0.0, %v5314
        %5316 = vmatmul.f32.gmra.mxu0 %v5205
        %v5317 = vpop.f32.mrf.mxu0
        %v5318 = vadd.f32 0.0, %v5317
        %5319 = vmatmul.f32.gmra.mxu0 %v5208
        %v5320 = vpop.f32.mrf.mxu0
        %v5321 = vadd.f32 0.0, %v5320
        %5322 = vmatmul.f32.gmra.mxu0 %v5211
        %v5323 = vpop.f32.mrf.mxu0
        %v5324 = vadd.f32 0.0, %v5323
        %5325 = vmatmul.f32.gmra.mxu0 %v5214
        %v5326 = vpop.f32.mrf.mxu0
        %v5327 = vadd.f32 0.0, %v5326
        %5328 = vmatmul.f32.gmra.mxu0 %v5217
        %v5329 = vpop.f32.mrf.mxu0
        %v5330 = vadd.f32 0.0, %v5329
        %5331 = vmatmul.f32.gmra.mxu0 %v5220
        %v5332 = vpop.f32.mrf.mxu0
        %v5333 = vadd.f32 0.0, %v5332
        %5334 = vmatmul.f32.gmra.mxu0 %v5223
        %v5335 = vpop.f32.mrf.mxu0
        %v5336 = vadd.f32 0.0, %v5335
        %5337 = vmatmul.f32.gmra.mxu0 %v5226
        %v5338 = vpop.f32.mrf.mxu0
        %v5339 = vadd.f32 0.0, %v5338
        %5340 = vmatmul.f32.gmra.mxu0 %v5229
        %v5341 = vpop.f32.mrf.mxu0
        %v5342 = vadd.f32 0.0, %v5341
        %5343 = vmatmul.f32.gmra.mxu0 %v5232
        %v5344 = vpop.f32.mrf.mxu0
        %v5345 = vadd.f32 0.0, %v5344
        %5346 = vmatmul.f32.gmra.mxu0 %v5235
        %v5347 = vpop.f32.mrf.mxu0
        %v5348 = vadd.f32 0.0, %v5347
        %5349 = vmatmul.f32.gmra.mxu0 %v5238
        %v5350 = vpop.f32.mrf.mxu0
        %v5351 = vadd.f32 0.0, %v5350
        %5352 = vmatmul.f32.gmra.mxu0 %v5241
        %v5353 = vpop.f32.mrf.mxu0
        %v5354 = vadd.f32 0.0, %v5353
        %5355 = vmatmul.f32.gmra.mxu0 %v5244
        %v5356 = vpop.f32.mrf.mxu0
        %v5357 = vadd.f32 0.0, %v5356
        %5358 = vmatmul.f32.gmra.mxu0 %v5247
        %v5359 = vpop.f32.mrf.mxu0
        %v5360 = vadd.f32 0.0, %v5359
        %5361 = vmatmul.f32.gmra.mxu0 %v5250
        %v5362 = vpop.f32.mrf.mxu0
        %v5363 = vadd.f32 0.0, %v5362
        %5364 = vmatmul.f32.gmra.mxu0 %v5253
        %v5365 = vpop.f32.mrf.mxu0
        %v5366 = vadd.f32 0.0, %v5365
        %5367 = vmatmul.f32.gmra.mxu0 %v5256
        %v5368 = vpop.f32.mrf.mxu0
        %v5369 = vadd.f32 0.0, %v5368
        %5370 = vmatmul.f32.gmra.mxu0 %v5259
        %v5371 = vpop.f32.mrf.mxu0
        %v5372 = vadd.f32 0.0, %v5371
        %5373 = vmatmul.f32.gmra.mxu0 %v5262
        %v5374 = vpop.f32.mrf.mxu0
        %v5375 = vadd.f32 0.0, %v5374
        %5376 = vmatmul.f32.gmra.mxu0 %v5265
        %v5377 = vpop.f32.mrf.mxu0
        %v5378 = vadd.f32 0.0, %v5377
        %5379 = vmatmul.f32.gmra.mxu0 %v5268
        %v5380 = vpop.f32.mrf.mxu0
        %v5381 = vadd.f32 0.0, %v5380
        %5382 = vmatmul.f32.gmra.mxu0 %v5271
        %v5383 = vpop.f32.mrf.mxu0
        %v5384 = vadd.f32 0.0, %v5383
        %5385 = vmatmul.f32.gmra.mxu0 %v5274
        %v5386 = vpop.f32.mrf.mxu0
        %v5387 = vadd.f32 0.0, %v5386
        %5388 = vmatmul.f32.gmra.mxu0 %v5277
        %v5389 = vpop.f32.mrf.mxu0
        %v5390 = vadd.f32 0.0, %v5389
        %5391 = vmatmul.f32.gmra.mxu0 %v5280
        %v5392 = vpop.f32.mrf.mxu0
        %v5393 = vadd.f32 0.0, %v5392
        %5394 = vmatmul.f32.gmra.mxu0 %v5283
        %v5395 = vpop.f32.mrf.mxu0
        %v5396 = vadd.f32 0.0, %v5395
        %5397 = vmatmul.f32.gmra.mxu0 %v5286
        %v5398 = vpop.f32.mrf.mxu0
        %v5399 = vadd.f32 0.0, %v5398
        %5400 = vmatmul.f32.gmra.mxu0 %v5289
        %v5401 = vpop.f32.mrf.mxu0
        %v5402 = vadd.f32 0.0, %v5401
        %5403 = vdwg.mxu0
        %5404 = vmatpush.msra.mxu0 0.0
        %5405 = vmatpush.msra.mxu0 0.0
        %5406 = vmatpush.msra.mxu0 0.0
        %5407 = vmatpush.msra.mxu0 0.0
        %5408 = vmatpush.msra.mxu0 0.0
        %5409 = vmatpush.msra.mxu0 0.0
        %5410 = vmatpush.msra.mxu0 0.0
        %5411 = vmatpush.msra.mxu0 0.0
        %5412 = vmatpush.msra.mxu0 0.0
        %5413 = vmatpush.msra.mxu0 0.0
        %5414 = vmatpush.msra.mxu0 0.0
        %5415 = vmatpush.msra.mxu0 0.0
        %5416 = vmatpush.msra.mxu0 %v5121
        %5417 = vmatpush.msra.mxu0 %v5119
        %5418 = vmatpush.msra.mxu0 %v5117
        %5419 = vmatpush.msra.mxu0 %v5115
        %5420 = vmatmul.f32.gmra.mxu0 %v5196
        %v5421 = vpop.f32.mrf.mxu0
        %v5422 = vadd.f32 0.0, %v5421
        %5423 = vmatmul.f32.gmra.mxu0 %v5199
        %v5424 = vpop.f32.mrf.mxu0
        %v5425 = vadd.f32 0.0, %v5424
        %5426 = vmatmul.f32.gmra.mxu0 %v5202
        %v5427 = vpop.f32.mrf.mxu0
        %v5428 = vadd.f32 0.0, %v5427
        %5429 = vmatmul.f32.gmra.mxu0 %v5205
        %v5430 = vpop.f32.mrf.mxu0
        %v5431 = vadd.f32 0.0, %v5430
        %5432 = vmatmul.f32.gmra.mxu0 %v5208
        %v5433 = vpop.f32.mrf.mxu0
        %v5434 = vadd.f32 0.0, %v5433
        %5435 = vmatmul.f32.gmra.mxu0 %v5211
        %v5436 = vpop.f32.mrf.mxu0
        %v5437 = vadd.f32 0.0, %v5436
        %5438 = vmatmul.f32.gmra.mxu0 %v5214
        %v5439 = vpop.f32.mrf.mxu0
        %v5440 = vadd.f32 0.0, %v5439
        %5441 = vmatmul.f32.gmra.mxu0 %v5217
        %v5442 = vpop.f32.mrf.mxu0
        %v5443 = vadd.f32 0.0, %v5442
        %5444 = vmatmul.f32.gmra.mxu0 %v5220
        %v5445 = vpop.f32.mrf.mxu0
        %v5446 = vadd.f32 0.0, %v5445
        %5447 = vmatmul.f32.gmra.mxu0 %v5223
        %v5448 = vpop.f32.mrf.mxu0
        %v5449 = vadd.f32 0.0, %v5448
        %5450 = vmatmul.f32.gmra.mxu0 %v5226
        %v5451 = vpop.f32.mrf.mxu0
        %v5452 = vadd.f32 0.0, %v5451
        %5453 = vmatmul.f32.gmra.mxu0 %v5229
        %v5454 = vpop.f32.mrf.mxu0
        %v5455 = vadd.f32 0.0, %v5454
        %5456 = vmatmul.f32.gmra.mxu0 %v5232
        %v5457 = vpop.f32.mrf.mxu0
        %v5458 = vadd.f32 0.0, %v5457
        %5459 = vmatmul.f32.gmra.mxu0 %v5235
        %v5460 = vpop.f32.mrf.mxu0
        %v5461 = vadd.f32 0.0, %v5460
        %5462 = vmatmul.f32.gmra.mxu0 %v5238
        %v5463 = vpop.f32.mrf.mxu0
        %v5464 = vadd.f32 0.0, %v5463
        %5465 = vmatmul.f32.gmra.mxu0 %v5241
        %v5466 = vpop.f32.mrf.mxu0
        %v5467 = vadd.f32 0.0, %v5466
        %5468 = vmatmul.f32.gmra.mxu0 %v5244
        %v5469 = vpop.f32.mrf.mxu0
        %v5470 = vadd.f32 0.0, %v5469
        %5471 = vmatmul.f32.gmra.mxu0 %v5247
        %v5472 = vpop.f32.mrf.mxu0
        %v5473 = vadd.f32 0.0, %v5472
        %5474 = vmatmul.f32.gmra.mxu0 %v5250
        %v5475 = vpop.f32.mrf.mxu0
        %v5476 = vadd.f32 0.0, %v5475
        %5477 = vmatmul.f32.gmra.mxu0 %v5253
        %v5478 = vpop.f32.mrf.mxu0
        %v5479 = vadd.f32 0.0, %v5478
        %5480 = vmatmul.f32.gmra.mxu0 %v5256
        %v5481 = vpop.f32.mrf.mxu0
        %v5482 = vadd.f32 0.0, %v5481
        %5483 = vmatmul.f32.gmra.mxu0 %v5259
        %v5484 = vpop.f32.mrf.mxu0
        %v5485 = vadd.f32 0.0, %v5484
        %5486 = vmatmul.f32.gmra.mxu0 %v5262
        %v5487 = vpop.f32.mrf.mxu0
        %v5488 = vadd.f32 0.0, %v5487
        %5489 = vmatmul.f32.gmra.mxu0 %v5265
        %v5490 = vpop.f32.mrf.mxu0
        %v5491 = vadd.f32 0.0, %v5490
        %5492 = vmatmul.f32.gmra.mxu0 %v5268
        %v5493 = vpop.f32.mrf.mxu0
        %v5494 = vadd.f32 0.0, %v5493
        %5495 = vmatmul.f32.gmra.mxu0 %v5271
        %v5496 = vpop.f32.mrf.mxu0
        %v5497 = vadd.f32 0.0, %v5496
        %5498 = vmatmul.f32.gmra.mxu0 %v5274
        %v5499 = vpop.f32.mrf.mxu0
        %v5500 = vadd.f32 0.0, %v5499
        %5501 = vmatmul.f32.gmra.mxu0 %v5277
        %v5502 = vpop.f32.mrf.mxu0
        %v5503 = vadd.f32 0.0, %v5502
        %5504 = vmatmul.f32.gmra.mxu0 %v5280
        %v5505 = vpop.f32.mrf.mxu0
        %v5506 = vadd.f32 0.0, %v5505
        %5507 = vmatmul.f32.gmra.mxu0 %v5283
        %v5508 = vpop.f32.mrf.mxu0
        %v5509 = vadd.f32 0.0, %v5508
        %5510 = vmatmul.f32.gmra.mxu0 %v5286
        %v5511 = vpop.f32.mrf.mxu0
        %v5512 = vadd.f32 0.0, %v5511
        %5513 = vmatmul.f32.gmra.mxu0 %v5289
        %v5514 = vpop.f32.mrf.mxu0
        %v5515 = vadd.f32 0.0, %v5514
        %5516 = vdwg.mxu0
        %v5517 = vmax.f32 %v5309, %v5422
        %5518 = vmax.xlane.f32.xlu0 %v5517
        %v5519 = vpop.xlane.xlu0 %5518
        %v5520 = vmax.f32 %v5312, %v5425
        %5521 = vmax.xlane.f32.xlu0 %v5520
        %v5522 = vpop.xlane.xlu0 %5521
        %v5523 = vmax.f32 %v5315, %v5428
        %5524 = vmax.xlane.f32.xlu0 %v5523
        %v5525 = vpop.xlane.xlu0 %5524
        %v5526 = vmax.f32 %v5318, %v5431
        %5527 = vmax.xlane.f32.xlu0 %v5526
        %v5528 = vpop.xlane.xlu0 %5527
        %v5529 = vmax.f32 %v5321, %v5434
        %5530 = vmax.xlane.f32.xlu0 %v5529
        %v5531 = vpop.xlane.xlu0 %5530
        %v5532 = vmax.f32 %v5324, %v5437
        %5533 = vmax.xlane.f32.xlu0 %v5532
        %v5534 = vpop.xlane.xlu0 %5533
        %v5535 = vmax.f32 %v5327, %v5440
        %5536 = vmax.xlane.f32.xlu0 %v5535
        %v5537 = vpop.xlane.xlu0 %5536
        %v5538 = vmax.f32 %v5330, %v5443
        %5539 = vmax.xlane.f32.xlu0 %v5538
        %v5540 = vpop.xlane.xlu0 %5539
        %v5541 = vmax.f32 %v5333, %v5446
        %5542 = vmax.xlane.f32.xlu0 %v5541
        %v5543 = vpop.xlane.xlu0 %5542
        %v5544 = vmax.f32 %v5336, %v5449
        %5545 = vmax.xlane.f32.xlu0 %v5544
        %v5546 = vpop.xlane.xlu0 %5545
        %v5547 = vmax.f32 %v5339, %v5452
        %5548 = vmax.xlane.f32.xlu0 %v5547
        %v5549 = vpop.xlane.xlu0 %5548
        %v5550 = vmax.f32 %v5342, %v5455
        %5551 = vmax.xlane.f32.xlu0 %v5550
        %v5552 = vpop.xlane.xlu0 %5551
        %v5553 = vmax.f32 %v5345, %v5458
        %5554 = vmax.xlane.f32.xlu0 %v5553
        %v5555 = vpop.xlane.xlu0 %5554
        %v5556 = vmax.f32 %v5348, %v5461
        %5557 = vmax.xlane.f32.xlu0 %v5556
        %v5558 = vpop.xlane.xlu0 %5557
        %v5559 = vmax.f32 %v5351, %v5464
        %5560 = vmax.xlane.f32.xlu0 %v5559
        %v5561 = vpop.xlane.xlu0 %5560
        %v5562 = vmax.f32 %v5354, %v5467
        %5563 = vmax.xlane.f32.xlu0 %v5562
        %v5564 = vpop.xlane.xlu0 %5563
        %v5565 = vmax.f32 %v5357, %v5470
        %5566 = vmax.xlane.f32.xlu0 %v5565
        %v5567 = vpop.xlane.xlu0 %5566
        %v5568 = vmax.f32 %v5360, %v5473
        %5569 = vmax.xlane.f32.xlu0 %v5568
        %v5570 = vpop.xlane.xlu0 %5569
        %v5571 = vmax.f32 %v5363, %v5476
        %5572 = vmax.xlane.f32.xlu0 %v5571
        %v5573 = vpop.xlane.xlu0 %5572
        %v5574 = vmax.f32 %v5366, %v5479
        %5575 = vmax.xlane.f32.xlu0 %v5574
        %v5576 = vpop.xlane.xlu0 %5575
        %v5577 = vmax.f32 %v5369, %v5482
        %5578 = vmax.xlane.f32.xlu0 %v5577
        %v5579 = vpop.xlane.xlu0 %5578
        %v5580 = vmax.f32 %v5372, %v5485
        %5581 = vmax.xlane.f32.xlu0 %v5580
        %v5582 = vpop.xlane.xlu0 %5581
        %v5583 = vmax.f32 %v5375, %v5488
        %5584 = vmax.xlane.f32.xlu0 %v5583
        %v5585 = vpop.xlane.xlu0 %5584
        %v5586 = vmax.f32 %v5378, %v5491
        %5587 = vmax.xlane.f32.xlu0 %v5586
        %v5588 = vpop.xlane.xlu0 %5587
        %v5589 = vmax.f32 %v5381, %v5494
        %5590 = vmax.xlane.f32.xlu0 %v5589
        %v5591 = vpop.xlane.xlu0 %5590
        %v5592 = vmax.f32 %v5384, %v5497
        %5593 = vmax.xlane.f32.xlu0 %v5592
        %v5594 = vpop.xlane.xlu0 %5593
        %v5595 = vmax.f32 %v5387, %v5500
        %5596 = vmax.xlane.f32.xlu0 %v5595
        %v5597 = vpop.xlane.xlu0 %5596
        %v5598 = vmax.f32 %v5390, %v5503
        %5599 = vmax.xlane.f32.xlu0 %v5598
        %v5600 = vpop.xlane.xlu0 %5599
        %v5601 = vmax.f32 %v5393, %v5506
        %5602 = vmax.xlane.f32.xlu0 %v5601
        %v5603 = vpop.xlane.xlu0 %5602
        %v5604 = vmax.f32 %v5396, %v5509
        %5605 = vmax.xlane.f32.xlu0 %v5604
        %v5606 = vpop.xlane.xlu0 %5605
        %v5607 = vmax.f32 %v5399, %v5512
        %5608 = vmax.xlane.f32.xlu0 %v5607
        %v5609 = vpop.xlane.xlu0 %5608
        %v5610 = vmax.f32 %v5402, %v5515
        %5611 = vmax.xlane.f32.xlu0 %v5610
        %v5612 = vpop.xlane.xlu0 %5611
        %v5613 = vsub.f32 %v5309, %v5519
        %v5614 = vsub.f32 %v5422, %v5519
        %v5615 = vsub.f32 %v5312, %v5522
        %v5616 = vsub.f32 %v5425, %v5522
        %v5617 = vsub.f32 %v5315, %v5525
        %v5618 = vsub.f32 %v5428, %v5525
        %v5619 = vsub.f32 %v5318, %v5528
        %v5620 = vsub.f32 %v5431, %v5528
        %v5621 = vsub.f32 %v5321, %v5531
        %v5622 = vsub.f32 %v5434, %v5531
        %v5623 = vsub.f32 %v5324, %v5534
        %v5624 = vsub.f32 %v5437, %v5534
        %v5625 = vsub.f32 %v5327, %v5537
        %v5626 = vsub.f32 %v5440, %v5537
        %v5627 = vsub.f32 %v5330, %v5540
        %v5628 = vsub.f32 %v5443, %v5540
        %v5629 = vsub.f32 %v5333, %v5543
        %v5630 = vsub.f32 %v5446, %v5543
        %v5631 = vsub.f32 %v5336, %v5546
        %v5632 = vsub.f32 %v5449, %v5546
        %v5633 = vsub.f32 %v5339, %v5549
        %v5634 = vsub.f32 %v5452, %v5549
        %v5635 = vsub.f32 %v5342, %v5552
        %v5636 = vsub.f32 %v5455, %v5552
        %v5637 = vsub.f32 %v5345, %v5555
        %v5638 = vsub.f32 %v5458, %v5555
        %v5639 = vsub.f32 %v5348, %v5558
        %v5640 = vsub.f32 %v5461, %v5558
        %v5641 = vsub.f32 %v5351, %v5561
        %v5642 = vsub.f32 %v5464, %v5561
        %v5643 = vsub.f32 %v5354, %v5564
        %v5644 = vsub.f32 %v5467, %v5564
        %v5645 = vsub.f32 %v5357, %v5567
        %v5646 = vsub.f32 %v5470, %v5567
        %v5647 = vsub.f32 %v5360, %v5570
        %v5648 = vsub.f32 %v5473, %v5570
        %v5649 = vsub.f32 %v5363, %v5573
        %v5650 = vsub.f32 %v5476, %v5573
        %v5651 = vsub.f32 %v5366, %v5576
        %v5652 = vsub.f32 %v5479, %v5576
        %v5653 = vsub.f32 %v5369, %v5579
        %v5654 = vsub.f32 %v5482, %v5579
        %v5655 = vsub.f32 %v5372, %v5582
        %v5656 = vsub.f32 %v5485, %v5582
        %v5657 = vsub.f32 %v5375, %v5585
        %v5658 = vsub.f32 %v5488, %v5585
        %v5659 = vsub.f32 %v5378, %v5588
        %v5660 = vsub.f32 %v5491, %v5588
        %v5661 = vsub.f32 %v5381, %v5591
        %v5662 = vsub.f32 %v5494, %v5591
        %v5663 = vsub.f32 %v5384, %v5594
        %v5664 = vsub.f32 %v5497, %v5594
        %v5665 = vsub.f32 %v5387, %v5597
        %v5666 = vsub.f32 %v5500, %v5597
        %v5667 = vsub.f32 %v5390, %v5600
        %v5668 = vsub.f32 %v5503, %v5600
        %v5669 = vsub.f32 %v5393, %v5603
        %v5670 = vsub.f32 %v5506, %v5603
        %v5671 = vsub.f32 %v5396, %v5606
        %v5672 = vsub.f32 %v5509, %v5606
        %v5673 = vsub.f32 %v5399, %v5609
        %v5674 = vsub.f32 %v5512, %v5609
        %v5675 = vsub.f32 %v5402, %v5612
        %v5676 = vsub.f32 %v5515, %v5612
        %v5677 = vmul.f32 %v5613, 1.442695
        %v5678 = vpow.pop %v5677
        %v5679 = vmul.f32 %v5614, 1.442695
        %v5680 = vpow.pop %v5679
        %v5681 = vmul.f32 %v5615, 1.442695
        %v5682 = vpow.pop %v5681
        %v5683 = vmul.f32 %v5616, 1.442695
        %v5684 = vpow.pop %v5683
        %v5685 = vmul.f32 %v5617, 1.442695
        %v5686 = vpow.pop %v5685
        %v5687 = vmul.f32 %v5618, 1.442695
        %v5688 = vpow.pop %v5687
        %v5689 = vmul.f32 %v5619, 1.442695
        %v5690 = vpow.pop %v5689
        %v5691 = vmul.f32 %v5620, 1.442695
        %v5692 = vpow.pop %v5691
        %v5693 = vmul.f32 %v5621, 1.442695
        %v5694 = vpow.pop %v5693
        %v5695 = vmul.f32 %v5622, 1.442695
        %v5696 = vpow.pop %v5695
        %v5697 = vmul.f32 %v5623, 1.442695
        %v5698 = vpow.pop %v5697
        %v5699 = vmul.f32 %v5624, 1.442695
        %v5700 = vpow.pop %v5699
        %v5701 = vmul.f32 %v5625, 1.442695
        %v5702 = vpow.pop %v5701
        %v5703 = vmul.f32 %v5626, 1.442695
        %v5704 = vpow.pop %v5703
        %v5705 = vmul.f32 %v5627, 1.442695
        %v5706 = vpow.pop %v5705
        %v5707 = vmul.f32 %v5628, 1.442695
        %v5708 = vpow.pop %v5707
        %v5709 = vmul.f32 %v5629, 1.442695
        %v5710 = vpow.pop %v5709
        %v5711 = vmul.f32 %v5630, 1.442695
        %v5712 = vpow.pop %v5711
        %v5713 = vmul.f32 %v5631, 1.442695
        %v5714 = vpow.pop %v5713
        %v5715 = vmul.f32 %v5632, 1.442695
        %v5716 = vpow.pop %v5715
        %v5717 = vmul.f32 %v5633, 1.442695
        %v5718 = vpow.pop %v5717
        %v5719 = vmul.f32 %v5634, 1.442695
        %v5720 = vpow.pop %v5719
        %v5721 = vmul.f32 %v5635, 1.442695
        %v5722 = vpow.pop %v5721
        %v5723 = vmul.f32 %v5636, 1.442695
        %v5724 = vpow.pop %v5723
        %v5725 = vmul.f32 %v5637, 1.442695
        %v5726 = vpow.pop %v5725
        %v5727 = vmul.f32 %v5638, 1.442695
        %v5728 = vpow.pop %v5727
        %v5729 = vmul.f32 %v5639, 1.442695
        %v5730 = vpow.pop %v5729
        %v5731 = vmul.f32 %v5640, 1.442695
        %v5732 = vpow.pop %v5731
        %v5733 = vmul.f32 %v5641, 1.442695
        %v5734 = vpow.pop %v5733
        %v5735 = vmul.f32 %v5642, 1.442695
        %v5736 = vpow.pop %v5735
        %v5737 = vmul.f32 %v5643, 1.442695
        %v5738 = vpow.pop %v5737
        %v5739 = vmul.f32 %v5644, 1.442695
        %v5740 = vpow.pop %v5739
        %v5741 = vmul.f32 %v5645, 1.442695
        %v5742 = vpow.pop %v5741
        %v5743 = vmul.f32 %v5646, 1.442695
        %v5744 = vpow.pop %v5743
        %v5745 = vmul.f32 %v5647, 1.442695
        %v5746 = vpow.pop %v5745
        %v5747 = vmul.f32 %v5648, 1.442695
        %v5748 = vpow.pop %v5747
        %v5749 = vmul.f32 %v5649, 1.442695
        %v5750 = vpow.pop %v5749
        %v5751 = vmul.f32 %v5650, 1.442695
        %v5752 = vpow.pop %v5751
        %v5753 = vmul.f32 %v5651, 1.442695
        %v5754 = vpow.pop %v5753
        %v5755 = vmul.f32 %v5652, 1.442695
        %v5756 = vpow.pop %v5755
        %v5757 = vmul.f32 %v5653, 1.442695
        %v5758 = vpow.pop %v5757
        %v5759 = vmul.f32 %v5654, 1.442695
        %v5760 = vpow.pop %v5759
        %v5761 = vmul.f32 %v5655, 1.442695
        %v5762 = vpow.pop %v5761
        %v5763 = vmul.f32 %v5656, 1.442695
        %v5764 = vpow.pop %v5763
        %v5765 = vmul.f32 %v5657, 1.442695
        %v5766 = vpow.pop %v5765
        %v5767 = vmul.f32 %v5658, 1.442695
        %v5768 = vpow.pop %v5767
        %v5769 = vmul.f32 %v5659, 1.442695
        %v5770 = vpow.pop %v5769
        %v5771 = vmul.f32 %v5660, 1.442695
        %v5772 = vpow.pop %v5771
        %v5773 = vmul.f32 %v5661, 1.442695
        %v5774 = vpow.pop %v5773
        %v5775 = vmul.f32 %v5662, 1.442695
        %v5776 = vpow.pop %v5775
        %v5777 = vmul.f32 %v5663, 1.442695
        %v5778 = vpow.pop %v5777
        %v5779 = vmul.f32 %v5664, 1.442695
        %v5780 = vpow.pop %v5779
        %v5781 = vmul.f32 %v5665, 1.442695
        %v5782 = vpow.pop %v5781
        %v5783 = vmul.f32 %v5666, 1.442695
        %v5784 = vpow.pop %v5783
        %v5785 = vmul.f32 %v5667, 1.442695
        %v5786 = vpow.pop %v5785
        %v5787 = vmul.f32 %v5668, 1.442695
        %v5788 = vpow.pop %v5787
        %v5789 = vmul.f32 %v5669, 1.442695
        %v5790 = vpow.pop %v5789
        %v5791 = vmul.f32 %v5670, 1.442695
        %v5792 = vpow.pop %v5791
        %v5793 = vmul.f32 %v5671, 1.442695
        %v5794 = vpow.pop %v5793
        %v5795 = vmul.f32 %v5672, 1.442695
        %v5796 = vpow.pop %v5795
        %v5797 = vmul.f32 %v5673, 1.442695
        %v5798 = vpow.pop %v5797
        %v5799 = vmul.f32 %v5674, 1.442695
        %v5800 = vpow.pop %v5799
        %v5801 = vmul.f32 %v5675, 1.442695
        %v5802 = vpow.pop %v5801
        %v5803 = vmul.f32 %v5676, 1.442695
        %v5804 = vpow.pop %v5803
        %v5805 = vadd.f32 %v5678, %v5680
        %5806 = vadd.xlane.f32.xlu0 %v5805
        %v5807 = vpop.xlane.xlu0 %5806
        %v5808 = vadd.f32 %v5682, %v5684
        %5809 = vadd.xlane.f32.xlu0 %v5808
        %v5810 = vpop.xlane.xlu0 %5809
        %v5811 = vadd.f32 %v5686, %v5688
        %5812 = vadd.xlane.f32.xlu0 %v5811
        %v5813 = vpop.xlane.xlu0 %5812
        %v5814 = vadd.f32 %v5690, %v5692
        %5815 = vadd.xlane.f32.xlu0 %v5814
        %v5816 = vpop.xlane.xlu0 %5815
        %v5817 = vadd.f32 %v5694, %v5696
        %5818 = vadd.xlane.f32.xlu0 %v5817
        %v5819 = vpop.xlane.xlu0 %5818
        %v5820 = vadd.f32 %v5698, %v5700
        %5821 = vadd.xlane.f32.xlu0 %v5820
        %v5822 = vpop.xlane.xlu0 %5821
        %v5823 = vadd.f32 %v5702, %v5704
        %5824 = vadd.xlane.f32.xlu0 %v5823
        %v5825 = vpop.xlane.xlu0 %5824
        %v5826 = vadd.f32 %v5706, %v5708
        %5827 = vadd.xlane.f32.xlu0 %v5826
        %v5828 = vpop.xlane.xlu0 %5827
        %v5829 = vadd.f32 %v5710, %v5712
        %5830 = vadd.xlane.f32.xlu0 %v5829
        %v5831 = vpop.xlane.xlu0 %5830
        %v5832 = vadd.f32 %v5714, %v5716
        %5833 = vadd.xlane.f32.xlu0 %v5832
        %v5834 = vpop.xlane.xlu0 %5833
        %v5835 = vadd.f32 %v5718, %v5720
        %5836 = vadd.xlane.f32.xlu0 %v5835
        %v5837 = vpop.xlane.xlu0 %5836
        %v5838 = vadd.f32 %v5722, %v5724
        %5839 = vadd.xlane.f32.xlu0 %v5838
        %v5840 = vpop.xlane.xlu0 %5839
        %v5841 = vadd.f32 %v5726, %v5728
        %5842 = vadd.xlane.f32.xlu0 %v5841
        %v5843 = vpop.xlane.xlu0 %5842
        %v5844 = vadd.f32 %v5730, %v5732
        %5845 = vadd.xlane.f32.xlu0 %v5844
        %v5846 = vpop.xlane.xlu0 %5845
        %v5847 = vadd.f32 %v5734, %v5736
        %5848 = vadd.xlane.f32.xlu0 %v5847
        %v5849 = vpop.xlane.xlu0 %5848
        %v5850 = vadd.f32 %v5738, %v5740
        %5851 = vadd.xlane.f32.xlu0 %v5850
        %v5852 = vpop.xlane.xlu0 %5851
        %v5853 = vadd.f32 %v5742, %v5744
        %5854 = vadd.xlane.f32.xlu0 %v5853
        %v5855 = vpop.xlane.xlu0 %5854
        %v5856 = vadd.f32 %v5746, %v5748
        %5857 = vadd.xlane.f32.xlu0 %v5856
        %v5858 = vpop.xlane.xlu0 %5857
        %v5859 = vadd.f32 %v5750, %v5752
        %5860 = vadd.xlane.f32.xlu0 %v5859
        %v5861 = vpop.xlane.xlu0 %5860
        %v5862 = vadd.f32 %v5754, %v5756
        %5863 = vadd.xlane.f32.xlu0 %v5862
        %v5864 = vpop.xlane.xlu0 %5863
        %v5865 = vadd.f32 %v5758, %v5760
        %5866 = vadd.xlane.f32.xlu0 %v5865
        %v5867 = vpop.xlane.xlu0 %5866
        %v5868 = vadd.f32 %v5762, %v5764
        %5869 = vadd.xlane.f32.xlu0 %v5868
        %v5870 = vpop.xlane.xlu0 %5869
        %v5871 = vadd.f32 %v5766, %v5768
        %5872 = vadd.xlane.f32.xlu0 %v5871
        %v5873 = vpop.xlane.xlu0 %5872
        %v5874 = vadd.f32 %v5770, %v5772
        %5875 = vadd.xlane.f32.xlu0 %v5874
        %v5876 = vpop.xlane.xlu0 %5875
        %v5877 = vadd.f32 %v5774, %v5776
        %5878 = vadd.xlane.f32.xlu0 %v5877
        %v5879 = vpop.xlane.xlu0 %5878
        %v5880 = vadd.f32 %v5778, %v5780
        %5881 = vadd.xlane.f32.xlu0 %v5880
        %v5882 = vpop.xlane.xlu0 %5881
        %v5883 = vadd.f32 %v5782, %v5784
        %5884 = vadd.xlane.f32.xlu0 %v5883
        %v5885 = vpop.xlane.xlu0 %5884
        %v5886 = vadd.f32 %v5786, %v5788
        %5887 = vadd.xlane.f32.xlu0 %v5886
        %v5888 = vpop.xlane.xlu0 %5887
        %v5889 = vadd.f32 %v5790, %v5792
        %5890 = vadd.xlane.f32.xlu0 %v5889
        %v5891 = vpop.xlane.xlu0 %5890
        %v5892 = vadd.f32 %v5794, %v5796
        %5893 = vadd.xlane.f32.xlu0 %v5892
        %v5894 = vpop.xlane.xlu0 %5893
        %v5895 = vadd.f32 %v5798, %v5800
        %5896 = vadd.xlane.f32.xlu0 %v5895
        %v5897 = vpop.xlane.xlu0 %5896
        %v5898 = vadd.f32 %v5802, %v5804
        %5899 = vadd.xlane.f32.xlu0 %v5898
        %v5900 = vpop.xlane.xlu0 %5899
        %v5901 = vrcp.pop %v5807
        %v5902 = vmul.f32 %v5807, %v5901
        %v5903 = vsub.f32 1.0, %v5902
        %v5904 = vmul.f32 %v5901, %v5903
        %v5905 = vadd.f32 %v5901, %v5904
        %vm5906 = vweird.f32 %v5807
        %vm5907 = vweird.f32 %v5901
        %vm5908 = vmor %vm5906, %vm5907
        %v5909 = vsel %vm5908, %v5901, %v5905
        %v5910 = vand.u32 2147483647, %v5807
        %vm5911 = vcmp.eq.f32.partialorder %v5910, 8.507059e+37
        %v5912 = vand.u32 %v5807, 2147483648
        %v5913 = vor.u32 1.1754944e-38, %v5912
        %v5914 = vsel %vm5911, %v5913, %v5909
        %v5915 = vrcp.pop %v5810
        %v5916 = vmul.f32 %v5810, %v5915
        %v5917 = vsub.f32 1.0, %v5916
        %v5918 = vmul.f32 %v5915, %v5917
        %v5919 = vadd.f32 %v5915, %v5918
        %vm5920 = vweird.f32 %v5810
        %vm5921 = vweird.f32 %v5915
        %vm5922 = vmor %vm5920, %vm5921
        %v5923 = vsel %vm5922, %v5915, %v5919
        %v5924 = vand.u32 2147483647, %v5810
        %vm5925 = vcmp.eq.f32.partialorder %v5924, 8.507059e+37
        %v5926 = vand.u32 %v5810, 2147483648
        %v5927 = vor.u32 1.1754944e-38, %v5926
        %v5928 = vsel %vm5925, %v5927, %v5923
        %v5929 = vrcp.pop %v5813
        %v5930 = vmul.f32 %v5813, %v5929
        %v5931 = vsub.f32 1.0, %v5930
        %v5932 = vmul.f32 %v5929, %v5931
        %v5933 = vadd.f32 %v5929, %v5932
        %vm5934 = vweird.f32 %v5813
        %vm5935 = vweird.f32 %v5929
        %vm5936 = vmor %vm5934, %vm5935
        %v5937 = vsel %vm5936, %v5929, %v5933
        %v5938 = vand.u32 2147483647, %v5813
        %vm5939 = vcmp.eq.f32.partialorder %v5938, 8.507059e+37
        %v5940 = vand.u32 %v5813, 2147483648
        %v5941 = vor.u32 1.1754944e-38, %v5940
        %v5942 = vsel %vm5939, %v5941, %v5937
        %v5943 = vrcp.pop %v5816
        %v5944 = vmul.f32 %v5816, %v5943
        %v5945 = vsub.f32 1.0, %v5944
        %v5946 = vmul.f32 %v5943, %v5945
        %v5947 = vadd.f32 %v5943, %v5946
        %vm5948 = vweird.f32 %v5816
        %vm5949 = vweird.f32 %v5943
        %vm5950 = vmor %vm5948, %vm5949
        %v5951 = vsel %vm5950, %v5943, %v5947
        %v5952 = vand.u32 2147483647, %v5816
        %vm5953 = vcmp.eq.f32.partialorder %v5952, 8.507059e+37
        %v5954 = vand.u32 %v5816, 2147483648
        %v5955 = vor.u32 1.1754944e-38, %v5954
        %v5956 = vsel %vm5953, %v5955, %v5951
        %v5957 = vrcp.pop %v5819
        %v5958 = vmul.f32 %v5819, %v5957
        %v5959 = vsub.f32 1.0, %v5958
        %v5960 = vmul.f32 %v5957, %v5959
        %v5961 = vadd.f32 %v5957, %v5960
        %vm5962 = vweird.f32 %v5819
        %vm5963 = vweird.f32 %v5957
        %vm5964 = vmor %vm5962, %vm5963
        %v5965 = vsel %vm5964, %v5957, %v5961
        %v5966 = vand.u32 2147483647, %v5819
        %vm5967 = vcmp.eq.f32.partialorder %v5966, 8.507059e+37
        %v5968 = vand.u32 %v5819, 2147483648
        %v5969 = vor.u32 1.1754944e-38, %v5968
        %v5970 = vsel %vm5967, %v5969, %v5965
        %v5971 = vrcp.pop %v5822
        %v5972 = vmul.f32 %v5822, %v5971
        %v5973 = vsub.f32 1.0, %v5972
        %v5974 = vmul.f32 %v5971, %v5973
        %v5975 = vadd.f32 %v5971, %v5974
        %vm5976 = vweird.f32 %v5822
        %vm5977 = vweird.f32 %v5971
        %vm5978 = vmor %vm5976, %vm5977
        %v5979 = vsel %vm5978, %v5971, %v5975
        %v5980 = vand.u32 2147483647, %v5822
        %vm5981 = vcmp.eq.f32.partialorder %v5980, 8.507059e+37
        %v5982 = vand.u32 %v5822, 2147483648
        %v5983 = vor.u32 1.1754944e-38, %v5982
        %v5984 = vsel %vm5981, %v5983, %v5979
        %v5985 = vrcp.pop %v5825
        %v5986 = vmul.f32 %v5825, %v5985
        %v5987 = vsub.f32 1.0, %v5986
        %v5988 = vmul.f32 %v5985, %v5987
        %v5989 = vadd.f32 %v5985, %v5988
        %vm5990 = vweird.f32 %v5825
        %vm5991 = vweird.f32 %v5985
        %vm5992 = vmor %vm5990, %vm5991
        %v5993 = vsel %vm5992, %v5985, %v5989
        %v5994 = vand.u32 2147483647, %v5825
        %vm5995 = vcmp.eq.f32.partialorder %v5994, 8.507059e+37
        %v5996 = vand.u32 %v5825, 2147483648
        %v5997 = vor.u32 1.1754944e-38, %v5996
        %v5998 = vsel %vm5995, %v5997, %v5993
        %v5999 = vrcp.pop %v5828
        %v6000 = vmul.f32 %v5828, %v5999
        %v6001 = vsub.f32 1.0, %v6000
        %v6002 = vmul.f32 %v5999, %v6001
        %v6003 = vadd.f32 %v5999, %v6002
        %vm6004 = vweird.f32 %v5828
        %vm6005 = vweird.f32 %v5999
        %vm6006 = vmor %vm6004, %vm6005
        %v6007 = vsel %vm6006, %v5999, %v6003
        %v6008 = vand.u32 2147483647, %v5828
        %vm6009 = vcmp.eq.f32.partialorder %v6008, 8.507059e+37
        %v6010 = vand.u32 %v5828, 2147483648
        %v6011 = vor.u32 1.1754944e-38, %v6010
        %v6012 = vsel %vm6009, %v6011, %v6007
        %v6013 = vrcp.pop %v5831
        %v6014 = vmul.f32 %v5831, %v6013
        %v6015 = vsub.f32 1.0, %v6014
        %v6016 = vmul.f32 %v6013, %v6015
        %v6017 = vadd.f32 %v6013, %v6016
        %vm6018 = vweird.f32 %v5831
        %vm6019 = vweird.f32 %v6013
        %vm6020 = vmor %vm6018, %vm6019
        %v6021 = vsel %vm6020, %v6013, %v6017
        %v6022 = vand.u32 2147483647, %v5831
        %vm6023 = vcmp.eq.f32.partialorder %v6022, 8.507059e+37
        %v6024 = vand.u32 %v5831, 2147483648
        %v6025 = vor.u32 1.1754944e-38, %v6024
        %v6026 = vsel %vm6023, %v6025, %v6021
        %v6027 = vrcp.pop %v5834
        %v6028 = vmul.f32 %v5834, %v6027
        %v6029 = vsub.f32 1.0, %v6028
        %v6030 = vmul.f32 %v6027, %v6029
        %v6031 = vadd.f32 %v6027, %v6030
        %vm6032 = vweird.f32 %v5834
        %vm6033 = vweird.f32 %v6027
        %vm6034 = vmor %vm6032, %vm6033
        %v6035 = vsel %vm6034, %v6027, %v6031
        %v6036 = vand.u32 2147483647, %v5834
        %vm6037 = vcmp.eq.f32.partialorder %v6036, 8.507059e+37
        %v6038 = vand.u32 %v5834, 2147483648
        %v6039 = vor.u32 1.1754944e-38, %v6038
        %v6040 = vsel %vm6037, %v6039, %v6035
        %v6041 = vrcp.pop %v5837
        %v6042 = vmul.f32 %v5837, %v6041
        %v6043 = vsub.f32 1.0, %v6042
        %v6044 = vmul.f32 %v6041, %v6043
        %v6045 = vadd.f32 %v6041, %v6044
        %vm6046 = vweird.f32 %v5837
        %vm6047 = vweird.f32 %v6041
        %vm6048 = vmor %vm6046, %vm6047
        %v6049 = vsel %vm6048, %v6041, %v6045
        %v6050 = vand.u32 2147483647, %v5837
        %vm6051 = vcmp.eq.f32.partialorder %v6050, 8.507059e+37
        %v6052 = vand.u32 %v5837, 2147483648
        %v6053 = vor.u32 1.1754944e-38, %v6052
        %v6054 = vsel %vm6051, %v6053, %v6049
        %v6055 = vrcp.pop %v5840
        %v6056 = vmul.f32 %v5840, %v6055
        %v6057 = vsub.f32 1.0, %v6056
        %v6058 = vmul.f32 %v6055, %v6057
        %v6059 = vadd.f32 %v6055, %v6058
        %vm6060 = vweird.f32 %v5840
        %vm6061 = vweird.f32 %v6055
        %vm6062 = vmor %vm6060, %vm6061
        %v6063 = vsel %vm6062, %v6055, %v6059
        %v6064 = vand.u32 2147483647, %v5840
        %vm6065 = vcmp.eq.f32.partialorder %v6064, 8.507059e+37
        %v6066 = vand.u32 %v5840, 2147483648
        %v6067 = vor.u32 1.1754944e-38, %v6066
        %v6068 = vsel %vm6065, %v6067, %v6063
        %v6069 = vrcp.pop %v5843
        %v6070 = vmul.f32 %v5843, %v6069
        %v6071 = vsub.f32 1.0, %v6070
        %v6072 = vmul.f32 %v6069, %v6071
        %v6073 = vadd.f32 %v6069, %v6072
        %vm6074 = vweird.f32 %v5843
        %vm6075 = vweird.f32 %v6069
        %vm6076 = vmor %vm6074, %vm6075
        %v6077 = vsel %vm6076, %v6069, %v6073
        %v6078 = vand.u32 2147483647, %v5843
        %vm6079 = vcmp.eq.f32.partialorder %v6078, 8.507059e+37
        %v6080 = vand.u32 %v5843, 2147483648
        %v6081 = vor.u32 1.1754944e-38, %v6080
        %v6082 = vsel %vm6079, %v6081, %v6077
        %v6083 = vrcp.pop %v5846
        %v6084 = vmul.f32 %v5846, %v6083
        %v6085 = vsub.f32 1.0, %v6084
        %v6086 = vmul.f32 %v6083, %v6085
        %v6087 = vadd.f32 %v6083, %v6086
        %vm6088 = vweird.f32 %v5846
        %vm6089 = vweird.f32 %v6083
        %vm6090 = vmor %vm6088, %vm6089
        %v6091 = vsel %vm6090, %v6083, %v6087
        %v6092 = vand.u32 2147483647, %v5846
        %vm6093 = vcmp.eq.f32.partialorder %v6092, 8.507059e+37
        %v6094 = vand.u32 %v5846, 2147483648
        %v6095 = vor.u32 1.1754944e-38, %v6094
        %v6096 = vsel %vm6093, %v6095, %v6091
        %v6097 = vrcp.pop %v5849
        %v6098 = vmul.f32 %v5849, %v6097
        %v6099 = vsub.f32 1.0, %v6098
        %v6100 = vmul.f32 %v6097, %v6099
        %v6101 = vadd.f32 %v6097, %v6100
        %vm6102 = vweird.f32 %v5849
        %vm6103 = vweird.f32 %v6097
        %vm6104 = vmor %vm6102, %vm6103
        %v6105 = vsel %vm6104, %v6097, %v6101
        %v6106 = vand.u32 2147483647, %v5849
        %vm6107 = vcmp.eq.f32.partialorder %v6106, 8.507059e+37
        %v6108 = vand.u32 %v5849, 2147483648
        %v6109 = vor.u32 1.1754944e-38, %v6108
        %v6110 = vsel %vm6107, %v6109, %v6105
        %v6111 = vrcp.pop %v5852
        %v6112 = vmul.f32 %v5852, %v6111
        %v6113 = vsub.f32 1.0, %v6112
        %v6114 = vmul.f32 %v6111, %v6113
        %v6115 = vadd.f32 %v6111, %v6114
        %vm6116 = vweird.f32 %v5852
        %vm6117 = vweird.f32 %v6111
        %vm6118 = vmor %vm6116, %vm6117
        %v6119 = vsel %vm6118, %v6111, %v6115
        %v6120 = vand.u32 2147483647, %v5852
        %vm6121 = vcmp.eq.f32.partialorder %v6120, 8.507059e+37
        %v6122 = vand.u32 %v5852, 2147483648
        %v6123 = vor.u32 1.1754944e-38, %v6122
        %v6124 = vsel %vm6121, %v6123, %v6119
        %v6125 = vrcp.pop %v5855
        %v6126 = vmul.f32 %v5855, %v6125
        %v6127 = vsub.f32 1.0, %v6126
        %v6128 = vmul.f32 %v6125, %v6127
        %v6129 = vadd.f32 %v6125, %v6128
        %vm6130 = vweird.f32 %v5855
        %vm6131 = vweird.f32 %v6125
        %vm6132 = vmor %vm6130, %vm6131
        %v6133 = vsel %vm6132, %v6125, %v6129
        %v6134 = vand.u32 2147483647, %v5855
        %vm6135 = vcmp.eq.f32.partialorder %v6134, 8.507059e+37
        %v6136 = vand.u32 %v5855, 2147483648
        %v6137 = vor.u32 1.1754944e-38, %v6136
        %v6138 = vsel %vm6135, %v6137, %v6133
        %v6139 = vrcp.pop %v5858
        %v6140 = vmul.f32 %v5858, %v6139
        %v6141 = vsub.f32 1.0, %v6140
        %v6142 = vmul.f32 %v6139, %v6141
        %v6143 = vadd.f32 %v6139, %v6142
        %vm6144 = vweird.f32 %v5858
        %vm6145 = vweird.f32 %v6139
        %vm6146 = vmor %vm6144, %vm6145
        %v6147 = vsel %vm6146, %v6139, %v6143
        %v6148 = vand.u32 2147483647, %v5858
        %vm6149 = vcmp.eq.f32.partialorder %v6148, 8.507059e+37
        %v6150 = vand.u32 %v5858, 2147483648
        %v6151 = vor.u32 1.1754944e-38, %v6150
        %v6152 = vsel %vm6149, %v6151, %v6147
        %v6153 = vrcp.pop %v5861
        %v6154 = vmul.f32 %v5861, %v6153
        %v6155 = vsub.f32 1.0, %v6154
        %v6156 = vmul.f32 %v6153, %v6155
        %v6157 = vadd.f32 %v6153, %v6156
        %vm6158 = vweird.f32 %v5861
        %vm6159 = vweird.f32 %v6153
        %vm6160 = vmor %vm6158, %vm6159
        %v6161 = vsel %vm6160, %v6153, %v6157
        %v6162 = vand.u32 2147483647, %v5861
        %vm6163 = vcmp.eq.f32.partialorder %v6162, 8.507059e+37
        %v6164 = vand.u32 %v5861, 2147483648
        %v6165 = vor.u32 1.1754944e-38, %v6164
        %v6166 = vsel %vm6163, %v6165, %v6161
        %v6167 = vrcp.pop %v5864
        %v6168 = vmul.f32 %v5864, %v6167
        %v6169 = vsub.f32 1.0, %v6168
        %v6170 = vmul.f32 %v6167, %v6169
        %v6171 = vadd.f32 %v6167, %v6170
        %vm6172 = vweird.f32 %v5864
        %vm6173 = vweird.f32 %v6167
        %vm6174 = vmor %vm6172, %vm6173
        %v6175 = vsel %vm6174, %v6167, %v6171
        %v6176 = vand.u32 2147483647, %v5864
        %vm6177 = vcmp.eq.f32.partialorder %v6176, 8.507059e+37
        %v6178 = vand.u32 %v5864, 2147483648
        %v6179 = vor.u32 1.1754944e-38, %v6178
        %v6180 = vsel %vm6177, %v6179, %v6175
        %v6181 = vrcp.pop %v5867
        %v6182 = vmul.f32 %v5867, %v6181
        %v6183 = vsub.f32 1.0, %v6182
        %v6184 = vmul.f32 %v6181, %v6183
        %v6185 = vadd.f32 %v6181, %v6184
        %vm6186 = vweird.f32 %v5867
        %vm6187 = vweird.f32 %v6181
        %vm6188 = vmor %vm6186, %vm6187
        %v6189 = vsel %vm6188, %v6181, %v6185
        %v6190 = vand.u32 2147483647, %v5867
        %vm6191 = vcmp.eq.f32.partialorder %v6190, 8.507059e+37
        %v6192 = vand.u32 %v5867, 2147483648
        %v6193 = vor.u32 1.1754944e-38, %v6192
        %v6194 = vsel %vm6191, %v6193, %v6189
        %v6195 = vrcp.pop %v5870
        %v6196 = vmul.f32 %v5870, %v6195
        %v6197 = vsub.f32 1.0, %v6196
        %v6198 = vmul.f32 %v6195, %v6197
        %v6199 = vadd.f32 %v6195, %v6198
        %vm6200 = vweird.f32 %v5870
        %vm6201 = vweird.f32 %v6195
        %vm6202 = vmor %vm6200, %vm6201
        %v6203 = vsel %vm6202, %v6195, %v6199
        %v6204 = vand.u32 2147483647, %v5870
        %vm6205 = vcmp.eq.f32.partialorder %v6204, 8.507059e+37
        %v6206 = vand.u32 %v5870, 2147483648
        %v6207 = vor.u32 1.1754944e-38, %v6206
        %v6208 = vsel %vm6205, %v6207, %v6203
        %v6209 = vrcp.pop %v5873
        %v6210 = vmul.f32 %v5873, %v6209
        %v6211 = vsub.f32 1.0, %v6210
        %v6212 = vmul.f32 %v6209, %v6211
        %v6213 = vadd.f32 %v6209, %v6212
        %vm6214 = vweird.f32 %v5873
        %vm6215 = vweird.f32 %v6209
        %vm6216 = vmor %vm6214, %vm6215
        %v6217 = vsel %vm6216, %v6209, %v6213
        %v6218 = vand.u32 2147483647, %v5873
        %vm6219 = vcmp.eq.f32.partialorder %v6218, 8.507059e+37
        %v6220 = vand.u32 %v5873, 2147483648
        %v6221 = vor.u32 1.1754944e-38, %v6220
        %v6222 = vsel %vm6219, %v6221, %v6217
        %v6223 = vrcp.pop %v5876
        %v6224 = vmul.f32 %v5876, %v6223
        %v6225 = vsub.f32 1.0, %v6224
        %v6226 = vmul.f32 %v6223, %v6225
        %v6227 = vadd.f32 %v6223, %v6226
        %vm6228 = vweird.f32 %v5876
        %vm6229 = vweird.f32 %v6223
        %vm6230 = vmor %vm6228, %vm6229
        %v6231 = vsel %vm6230, %v6223, %v6227
        %v6232 = vand.u32 2147483647, %v5876
        %vm6233 = vcmp.eq.f32.partialorder %v6232, 8.507059e+37
        %v6234 = vand.u32 %v5876, 2147483648
        %v6235 = vor.u32 1.1754944e-38, %v6234
        %v6236 = vsel %vm6233, %v6235, %v6231
        %v6237 = vrcp.pop %v5879
        %v6238 = vmul.f32 %v5879, %v6237
        %v6239 = vsub.f32 1.0, %v6238
        %v6240 = vmul.f32 %v6237, %v6239
        %v6241 = vadd.f32 %v6237, %v6240
        %vm6242 = vweird.f32 %v5879
        %vm6243 = vweird.f32 %v6237
        %vm6244 = vmor %vm6242, %vm6243
        %v6245 = vsel %vm6244, %v6237, %v6241
        %v6246 = vand.u32 2147483647, %v5879
        %vm6247 = vcmp.eq.f32.partialorder %v6246, 8.507059e+37
        %v6248 = vand.u32 %v5879, 2147483648
        %v6249 = vor.u32 1.1754944e-38, %v6248
        %v6250 = vsel %vm6247, %v6249, %v6245
        %v6251 = vrcp.pop %v5882
        %v6252 = vmul.f32 %v5882, %v6251
        %v6253 = vsub.f32 1.0, %v6252
        %v6254 = vmul.f32 %v6251, %v6253
        %v6255 = vadd.f32 %v6251, %v6254
        %vm6256 = vweird.f32 %v5882
        %vm6257 = vweird.f32 %v6251
        %vm6258 = vmor %vm6256, %vm6257
        %v6259 = vsel %vm6258, %v6251, %v6255
        %v6260 = vand.u32 2147483647, %v5882
        %vm6261 = vcmp.eq.f32.partialorder %v6260, 8.507059e+37
        %v6262 = vand.u32 %v5882, 2147483648
        %v6263 = vor.u32 1.1754944e-38, %v6262
        %v6264 = vsel %vm6261, %v6263, %v6259
        %v6265 = vrcp.pop %v5885
        %v6266 = vmul.f32 %v5885, %v6265
        %v6267 = vsub.f32 1.0, %v6266
        %v6268 = vmul.f32 %v6265, %v6267
        %v6269 = vadd.f32 %v6265, %v6268
        %vm6270 = vweird.f32 %v5885
        %vm6271 = vweird.f32 %v6265
        %vm6272 = vmor %vm6270, %vm6271
        %v6273 = vsel %vm6272, %v6265, %v6269
        %v6274 = vand.u32 2147483647, %v5885
        %vm6275 = vcmp.eq.f32.partialorder %v6274, 8.507059e+37
        %v6276 = vand.u32 %v5885, 2147483648
        %v6277 = vor.u32 1.1754944e-38, %v6276
        %v6278 = vsel %vm6275, %v6277, %v6273
        %v6279 = vrcp.pop %v5888
        %v6280 = vmul.f32 %v5888, %v6279
        %v6281 = vsub.f32 1.0, %v6280
        %v6282 = vmul.f32 %v6279, %v6281
        %v6283 = vadd.f32 %v6279, %v6282
        %vm6284 = vweird.f32 %v5888
        %vm6285 = vweird.f32 %v6279
        %vm6286 = vmor %vm6284, %vm6285
        %v6287 = vsel %vm6286, %v6279, %v6283
        %v6288 = vand.u32 2147483647, %v5888
        %vm6289 = vcmp.eq.f32.partialorder %v6288, 8.507059e+37
        %v6290 = vand.u32 %v5888, 2147483648
        %v6291 = vor.u32 1.1754944e-38, %v6290
        %v6292 = vsel %vm6289, %v6291, %v6287
        %v6293 = vrcp.pop %v5891
        %v6294 = vmul.f32 %v5891, %v6293
        %v6295 = vsub.f32 1.0, %v6294
        %v6296 = vmul.f32 %v6293, %v6295
        %v6297 = vadd.f32 %v6293, %v6296
        %vm6298 = vweird.f32 %v5891
        %vm6299 = vweird.f32 %v6293
        %vm6300 = vmor %vm6298, %vm6299
        %v6301 = vsel %vm6300, %v6293, %v6297
        %v6302 = vand.u32 2147483647, %v5891
        %vm6303 = vcmp.eq.f32.partialorder %v6302, 8.507059e+37
        %v6304 = vand.u32 %v5891, 2147483648
        %v6305 = vor.u32 1.1754944e-38, %v6304
        %v6306 = vsel %vm6303, %v6305, %v6301
        %v6307 = vrcp.pop %v5894
        %v6308 = vmul.f32 %v5894, %v6307
        %v6309 = vsub.f32 1.0, %v6308
        %v6310 = vmul.f32 %v6307, %v6309
        %v6311 = vadd.f32 %v6307, %v6310
        %vm6312 = vweird.f32 %v5894
        %vm6313 = vweird.f32 %v6307
        %vm6314 = vmor %vm6312, %vm6313
        %v6315 = vsel %vm6314, %v6307, %v6311
        %v6316 = vand.u32 2147483647, %v5894
        %vm6317 = vcmp.eq.f32.partialorder %v6316, 8.507059e+37
        %v6318 = vand.u32 %v5894, 2147483648
        %v6319 = vor.u32 1.1754944e-38, %v6318
        %v6320 = vsel %vm6317, %v6319, %v6315
        %v6321 = vrcp.pop %v5897
        %v6322 = vmul.f32 %v5897, %v6321
        %v6323 = vsub.f32 1.0, %v6322
        %v6324 = vmul.f32 %v6321, %v6323
        %v6325 = vadd.f32 %v6321, %v6324
        %vm6326 = vweird.f32 %v5897
        %vm6327 = vweird.f32 %v6321
        %vm6328 = vmor %vm6326, %vm6327
        %v6329 = vsel %vm6328, %v6321, %v6325
        %v6330 = vand.u32 2147483647, %v5897
        %vm6331 = vcmp.eq.f32.partialorder %v6330, 8.507059e+37
        %v6332 = vand.u32 %v5897, 2147483648
        %v6333 = vor.u32 1.1754944e-38, %v6332
        %v6334 = vsel %vm6331, %v6333, %v6329
        %v6335 = vrcp.pop %v5900
        %v6336 = vmul.f32 %v5900, %v6335
        %v6337 = vsub.f32 1.0, %v6336
        %v6338 = vmul.f32 %v6335, %v6337
        %v6339 = vadd.f32 %v6335, %v6338
        %vm6340 = vweird.f32 %v5900
        %vm6341 = vweird.f32 %v6335
        %vm6342 = vmor %vm6340, %vm6341
        %v6343 = vsel %vm6342, %v6335, %v6339
        %v6344 = vand.u32 2147483647, %v5900
        %vm6345 = vcmp.eq.f32.partialorder %v6344, 8.507059e+37
        %v6346 = vand.u32 %v5900, 2147483648
        %v6347 = vor.u32 1.1754944e-38, %v6346
        %v6348 = vsel %vm6345, %v6347, %v6343
        %v6349 = vmul.f32 %v5678, %v5914
        %v6350 = vmul.f32 %v5680, %v5914
        %v6351 = vmul.f32 %v5682, %v5928
        %v6352 = vmul.f32 %v5684, %v5928
        %v6353 = vmul.f32 %v5686, %v5942
        %v6354 = vmul.f32 %v5688, %v5942
        %v6355 = vmul.f32 %v5690, %v5956
        %v6356 = vmul.f32 %v5692, %v5956
        %v6357 = vmul.f32 %v5694, %v5970
        %v6358 = vmul.f32 %v5696, %v5970
        %v6359 = vmul.f32 %v5698, %v5984
        %v6360 = vmul.f32 %v5700, %v5984
        %v6361 = vmul.f32 %v5702, %v5998
        %v6362 = vmul.f32 %v5704, %v5998
        %v6363 = vmul.f32 %v5706, %v6012
        %v6364 = vmul.f32 %v5708, %v6012
        %v6365 = vmul.f32 %v5710, %v6026
        %v6366 = vmul.f32 %v5712, %v6026
        %v6367 = vmul.f32 %v5714, %v6040
        %v6368 = vmul.f32 %v5716, %v6040
        %v6369 = vmul.f32 %v5718, %v6054
        %v6370 = vmul.f32 %v5720, %v6054
        %v6371 = vmul.f32 %v5722, %v6068
        %v6372 = vmul.f32 %v5724, %v6068
        %v6373 = vmul.f32 %v5726, %v6082
        %v6374 = vmul.f32 %v5728, %v6082
        %v6375 = vmul.f32 %v5730, %v6096
        %v6376 = vmul.f32 %v5732, %v6096
        %v6377 = vmul.f32 %v5734, %v6110
        %v6378 = vmul.f32 %v5736, %v6110
        %v6379 = vmul.f32 %v5738, %v6124
        %v6380 = vmul.f32 %v5740, %v6124
        %v6381 = vmul.f32 %v5742, %v6138
        %v6382 = vmul.f32 %v5744, %v6138
        %v6383 = vmul.f32 %v5746, %v6152
        %v6384 = vmul.f32 %v5748, %v6152
        %v6385 = vmul.f32 %v5750, %v6166
        %v6386 = vmul.f32 %v5752, %v6166
        %v6387 = vmul.f32 %v5754, %v6180
        %v6388 = vmul.f32 %v5756, %v6180
        %v6389 = vmul.f32 %v5758, %v6194
        %v6390 = vmul.f32 %v5760, %v6194
        %v6391 = vmul.f32 %v5762, %v6208
        %v6392 = vmul.f32 %v5764, %v6208
        %v6393 = vmul.f32 %v5766, %v6222
        %v6394 = vmul.f32 %v5768, %v6222
        %v6395 = vmul.f32 %v5770, %v6236
        %v6396 = vmul.f32 %v5772, %v6236
        %v6397 = vmul.f32 %v5774, %v6250
        %v6398 = vmul.f32 %v5776, %v6250
        %v6399 = vmul.f32 %v5778, %v6264
        %v6400 = vmul.f32 %v5780, %v6264
        %v6401 = vmul.f32 %v5782, %v6278
        %v6402 = vmul.f32 %v5784, %v6278
        %v6403 = vmul.f32 %v5786, %v6292
        %v6404 = vmul.f32 %v5788, %v6292
        %v6405 = vmul.f32 %v5790, %v6306
        %v6406 = vmul.f32 %v5792, %v6306
        %v6407 = vmul.f32 %v5794, %v6320
        %v6408 = vmul.f32 %v5796, %v6320
        %v6409 = vmul.f32 %v5798, %v6334
        %v6410 = vmul.f32 %v5800, %v6334
        %v6411 = vmul.f32 %v5802, %v6348
        %v6412 = vmul.f32 %v5804, %v6348
        %6413 = vmatpush.xpose.msra.mxu0 %v6379
        %6414 = vmatpush.xpose.msra.mxu0 %v6377
        %6415 = vmatpush.xpose.msra.mxu0 %v6375
        %6416 = vmatpush.xpose.msra.mxu0 %v6373
        %6417 = vmatpush.xpose.msra.mxu0 %v6371
        %6418 = vmatpush.xpose.msra.mxu0 %v6369
        %6419 = vmatpush.xpose.msra.mxu0 %v6367
        %6420 = vmatpush.xpose.msra.mxu0 %v6365
        %6421 = vmatpush.xpose.msra.mxu0 %v6363
        %6422 = vmatpush.xpose.msra.mxu0 %v6361
        %6423 = vmatpush.xpose.msra.mxu0 %v6359
        %6424 = vmatpush.xpose.msra.mxu0 %v6357
        %6425 = vmatpush.xpose.msra.mxu0 %v6355
        %6426 = vmatpush.xpose.msra.mxu0 %v6353
        %6427 = vmatpush.xpose.msra.mxu0 %v6351
        %6428 = vmatpush.xpose.msra.mxu0 %v6349
        %6429 = vmatmul.f32.gmra.mxu0 %v5123
        %v6430 = vpop.f32.mrf.mxu0
        %v6431 = vadd.f32 0.0, %v6430
        %6432 = vmatmul.f32.gmra.mxu0 %v5125
        %v6433 = vpop.f32.mrf.mxu0
        %v6434 = vadd.f32 0.0, %v6433
        %6435 = vmatmul.f32.gmra.mxu0 %v5127
        %v6436 = vpop.f32.mrf.mxu0
        %v6437 = vadd.f32 0.0, %v6436
        %6438 = vmatmul.f32.gmra.mxu0 %v5129
        %v6439 = vpop.f32.mrf.mxu0
        %v6440 = vadd.f32 0.0, %v6439
        %6441 = vdwg.mxu0
        %6442 = vmatpush.xpose.msra.mxu0 %v6380
        %6443 = vmatpush.xpose.msra.mxu0 %v6378
        %6444 = vmatpush.xpose.msra.mxu0 %v6376
        %6445 = vmatpush.xpose.msra.mxu0 %v6374
        %6446 = vmatpush.xpose.msra.mxu0 %v6372
        %6447 = vmatpush.xpose.msra.mxu0 %v6370
        %6448 = vmatpush.xpose.msra.mxu0 %v6368
        %6449 = vmatpush.xpose.msra.mxu0 %v6366
        %6450 = vmatpush.xpose.msra.mxu0 %v6364
        %6451 = vmatpush.xpose.msra.mxu0 %v6362
        %6452 = vmatpush.xpose.msra.mxu0 %v6360
        %6453 = vmatpush.xpose.msra.mxu0 %v6358
        %6454 = vmatpush.xpose.msra.mxu0 %v6356
        %6455 = vmatpush.xpose.msra.mxu0 %v6354
        %6456 = vmatpush.xpose.msra.mxu0 %v6352
        %6457 = vmatpush.xpose.msra.mxu0 %v6350
        %6458 = vmatmul.f32.gmra.mxu0 %v5124
        %v6459 = vpop.f32.mrf.mxu0
        %v6460 = vadd.f32 %v6431, %v6459
        %6461 = vmatmul.f32.gmra.mxu0 %v5126
        %v6462 = vpop.f32.mrf.mxu0
        %v6463 = vadd.f32 %v6434, %v6462
        %6464 = vmatmul.f32.gmra.mxu0 %v5128
        %v6465 = vpop.f32.mrf.mxu0
        %v6466 = vadd.f32 %v6437, %v6465
        %6467 = vmatmul.f32.gmra.mxu0 %v5130
        %v6468 = vpop.f32.mrf.mxu0
        %v6469 = vadd.f32 %v6440, %v6468
        %6470 = vdwg.mxu0
        %6471 = vmatpush.xpose.msra.mxu0 %v6411
        %6472 = vmatpush.xpose.msra.mxu0 %v6409
        %6473 = vmatpush.xpose.msra.mxu0 %v6407
        %6474 = vmatpush.xpose.msra.mxu0 %v6405
        %6475 = vmatpush.xpose.msra.mxu0 %v6403
        %6476 = vmatpush.xpose.msra.mxu0 %v6401
        %6477 = vmatpush.xpose.msra.mxu0 %v6399
        %6478 = vmatpush.xpose.msra.mxu0 %v6397
        %6479 = vmatpush.xpose.msra.mxu0 %v6395
        %6480 = vmatpush.xpose.msra.mxu0 %v6393
        %6481 = vmatpush.xpose.msra.mxu0 %v6391
        %6482 = vmatpush.xpose.msra.mxu0 %v6389
        %6483 = vmatpush.xpose.msra.mxu0 %v6387
        %6484 = vmatpush.xpose.msra.mxu0 %v6385
        %6485 = vmatpush.xpose.msra.mxu0 %v6383
        %6486 = vmatpush.xpose.msra.mxu0 %v6381
        %6487 = vmatmul.f32.gmra.mxu0 %v5123
        %v6488 = vpop.f32.mrf.mxu0
        %v6489 = vadd.f32 0.0, %v6488
        %6490 = vmatmul.f32.gmra.mxu0 %v5125
        %v6491 = vpop.f32.mrf.mxu0
        %v6492 = vadd.f32 0.0, %v6491
        %6493 = vmatmul.f32.gmra.mxu0 %v5127
        %v6494 = vpop.f32.mrf.mxu0
        %v6495 = vadd.f32 0.0, %v6494
        %6496 = vmatmul.f32.gmra.mxu0 %v5129
        %v6497 = vpop.f32.mrf.mxu0
        %v6498 = vadd.f32 0.0, %v6497
        %6499 = vdwg.mxu0
        %6500 = vmatpush.xpose.msra.mxu0 %v6412
        %6501 = vmatpush.xpose.msra.mxu0 %v6410
        %6502 = vmatpush.xpose.msra.mxu0 %v6408
        %6503 = vmatpush.xpose.msra.mxu0 %v6406
        %6504 = vmatpush.xpose.msra.mxu0 %v6404
        %6505 = vmatpush.xpose.msra.mxu0 %v6402
        %6506 = vmatpush.xpose.msra.mxu0 %v6400
        %6507 = vmatpush.xpose.msra.mxu0 %v6398
        %6508 = vmatpush.xpose.msra.mxu0 %v6396
        %6509 = vmatpush.xpose.msra.mxu0 %v6394
        %6510 = vmatpush.xpose.msra.mxu0 %v6392
        %6511 = vmatpush.xpose.msra.mxu0 %v6390
        %6512 = vmatpush.xpose.msra.mxu0 %v6388
        %6513 = vmatpush.xpose.msra.mxu0 %v6386
        %6514 = vmatpush.xpose.msra.mxu0 %v6384
        %6515 = vmatpush.xpose.msra.mxu0 %v6382
        %6516 = vmatmul.f32.gmra.mxu0 %v5124
        %v6517 = vpop.f32.mrf.mxu0
        %v6518 = vadd.f32 %v6489, %v6517
        %6519 = vmatmul.f32.gmra.mxu0 %v5126
        %v6520 = vpop.f32.mrf.mxu0
        %v6521 = vadd.f32 %v6492, %v6520
        %6522 = vmatmul.f32.gmra.mxu0 %v5128
        %v6523 = vpop.f32.mrf.mxu0
        %v6524 = vadd.f32 %v6495, %v6523
        %6525 = vmatmul.f32.gmra.mxu0 %v5130
        %v6526 = vpop.f32.mrf.mxu0
        %v6527 = vadd.f32 %v6498, %v6526
        %6528 = vdwg.mxu0
        %v6529 = vld [vmem:[%s3] sm:$0xff]
        %v6530 = vld [vmem:[%s4] sm:$0xff]
        %6532 = vset.pattern.permute.xlu0 0
        %6533 = vperm.xlu0 %6532, %v6530
        %v6534 = vpop.permute.xlu0 %6533
        %6536 = vmatpush.msra.mxu0 %v6469
        %6537 = vmatpush.msra.mxu0 %v6466
        %6538 = vmatpush.msra.mxu0 %v6463
        %6539 = vmatpush.msra.mxu0 %v6460
        %6540 = vmatpush.msra.mxu0 %v5053
        %6541 = vmatpush.msra.mxu0 %v5050
        %6542 = vmatpush.msra.mxu0 %v5047
        %6543 = vmatpush.msra.mxu0 %v5044
        %6544 = vmatpush.msra.mxu0 %v3637
        %6545 = vmatpush.msra.mxu0 %v3634
        %6546 = vmatpush.msra.mxu0 %v3631
        %6547 = vmatpush.msra.mxu0 %v3628
        %6548 = vmatpush.msra.mxu0 %v2221
        %6549 = vmatpush.msra.mxu0 %v2218
        %6550 = vmatpush.msra.mxu0 %v2215
        %6551 = vmatpush.msra.mxu0 %v2212
        %6552 = vmatmul.f32.gmra.mxu0 %v6529
        %v6553 = vpop.f32.mrf.mxu0
        %v6554 = vadd.f32 %v6534, %v6553
        %6555 = vdwg.mxu0
        %6556 = vmatpush.msra.mxu0 %v6527
        %6557 = vmatpush.msra.mxu0 %v6524
        %6558 = vmatpush.msra.mxu0 %v6521
        %6559 = vmatpush.msra.mxu0 %v6518
        %6560 = vmatpush.msra.mxu0 %v5111
        %6561 = vmatpush.msra.mxu0 %v5108
        %6562 = vmatpush.msra.mxu0 %v5105
        %6563 = vmatpush.msra.mxu0 %v5102
        %6564 = vmatpush.msra.mxu0 %v3695
        %6565 = vmatpush.msra.mxu0 %v3692
        %6566 = vmatpush.msra.mxu0 %v3689
        %6567 = vmatpush.msra.mxu0 %v3686
        %6568 = vmatpush.msra.mxu0 %v2279
        %6569 = vmatpush.msra.mxu0 %v2276
        %6570 = vmatpush.msra.mxu0 %v2273
        %6571 = vmatpush.msra.mxu0 %v2270
        %6572 = vmatmul.f32.gmra.mxu0 %v6529
        %v6573 = vpop.f32.mrf.mxu0
        %v6574 = vadd.f32 %v6534, %v6573
        %6575 = vdwg.mxu0
        %6576 = vst [vmem:[%s231] sm:$0xff] %v6554
        %6577 = vst [vmem:[%s231 + $0x8] sm:$0xff] %v6574
        %s6578 = sand.u32 %s151, 1
        %s6579 = scalar_lea.sflag [#allocation4], %s6578
        %s6580 = sand.u32 %s151, 1
        %s6581 = smul.addr %s6580, 16
        %s6582 = scalar_lea.vmem [#allocation3], %s6581
        // Predicated region
        $region45: #{tpu_custom_call.1} parent=39 // pred_check
          %p6583 = pneg %p161
        $region46: #{tpu_custom_call.1} parent=39 // pred_check_branch
          %6585 = sbr.rel (%p6583) target = $region48
        $region47: #{tpu_custom_call.1} parent=39 // pred_region
          %s6586 = smul.u32 2, %s24
          %6588 = vsyncadd %s6579, 0
          %s6589 = smul.addr %s23, 2
          %s6590 = sadd.s32 %s6586, %s6589
          %s6591 = smul.addr %s6590, 8
          %s6592 = scalar_lea.hbm %s5, %s6591
          %s6594 = sshll.u32 %s6582, 4
          %s6595 = int_to_ptr.vmem [resolvable:$true] %s6594
          %s6596 = sshll.u32 %s6592, 4
          %s6597 = int_to_ptr.hbm [resolvable:$true] %s6596
          %6599 = dma.vmem_to_hbm [thread:$0]  %s6595, 256, %s6597, %s6579
        $region48: #{tpu_custom_call.1} parent=39 // pred_fallthru
          _
      $region40: #{tpu_custom_call.1} parent=5 // pred_fallthru
        _
      %p6600 = scmp.le.s32.totalorder 2, %s14
      // Predicated region
      $region49: #{tpu_custom_call.1} parent=5 // pred_check
        %p6601 = pneg %p6600
      $region50: #{tpu_custom_call.1} parent=5 // pred_check_branch
        %6603 = sbr.rel (%p6601) target = $region52
      $region51: #{tpu_custom_call.1} parent=5 // pred_region
        %s6604 = ssub.s32 %s14, 2
        // Predicated region
        $region53: #{tpu_custom_call.1} parent=51 // pred_check
          %p6605 = pneg %p167
        $region54: #{tpu_custom_call.1} parent=51 // pred_check_branch
          %6607 = sbr.rel (%p6605) target = $region56
        $region55: #{tpu_custom_call.1} parent=51 // pred_region
          %s6608 = sand.u32 %s152, 1
          %s6609 = scalar_lea.sflag [#allocation4], %s6608
          %s6610 = sand.u32 %s152, 1
          %s6611 = smul.addr %s6610, 16
          %s6612 = scalar_lea.vmem [#allocation3], %s6611
          %6614 = dma.done %s6609, 256
        $region56: #{tpu_custom_call.1} parent=51 // pred_fallthru
          _
      $region52: #{tpu_custom_call.1} parent=5 // pred_fallthru
        _
    $region6: #{tpu_custom_call.1} parent=1 // loop_footer
      %s18 = sadd.s32 1, %s14
    $region7: #{tpu_custom_call.1} parent=1 // loop_footer_branch
      %13 = sbr.rel target = $region3
    $region8: #{tpu_custom_call.1} parent=1 // loop_exit
      _
    %6615 = vsyncpa [#allocation4], 1
    %s6616 = scalar_lea.sflag [#allocation4], 1
    %6617 = vsyncpa %s6616, 1

</llo_original>
